<compile_context>
chip_gen: v7x
topology: tpu7x:2x2x1
jax: 0.10.0
libtpu: 0.0.40
codegen_flags: <defaults>
</compile_context>

<pallas_src>
import functools

import jax
import jax.numpy as jnp
from jax.experimental import pallas as pl
from jax.experimental.pallas import tpu as pltpu

EPS = 1e-5  # BatchNorm2d default


def _round_up(v, m):
    return (v + m - 1) // m * m


def _tpu_defaults():
    """(preferred Cout tile, vmem_limit_bytes, row-tile VMEM budget) per chip."""
    try:
        kind = jax.devices()[0].device_kind.lower()
    except Exception:
        kind = ""
    if "v5" in kind:            # v5e/v5p: 128-wide MXU, 128 MiB VMEM
        tco_pref, vmem_limit = 128, 96 * 1024 * 1024
    elif "v6" in kind:          # v6e: 256-wide MXU, 128 MiB VMEM
        tco_pref, vmem_limit = 256, 96 * 1024 * 1024
    elif "v7" in kind:          # v7x: 256-wide MXU, 64 MiB VMEM per TensorCore
        tco_pref, vmem_limit = 256, 48 * 1024 * 1024
    else:                       # unknown: conservative (fits every generation)
        tco_pref, vmem_limit = 256, 48 * 1024 * 1024
    budget = min(vmem_limit // 2, 32 * 1024 * 1024)
    return tco_pref, vmem_limit, budget


def _pick_row_tile(h, w, cin, cout_tile, budget):
    """Largest divisor TH of h whose per-step conv working set fits `budget`."""
    best = 1
    for th in range(1, h + 1):
        if h % th:
            continue
        halo_in = (th + 2) * (w + 2) * cin * 2          # bf16 halo input tile
        y_out = th * w * cout_tile * 2                  # bf16 conv output tile
        stats = 2 * cout_tile * 4                       # f32 per-tile stats
        im2col = th * w * 9 * cin * 2                   # bf16 patches scratch
        weights = 9 * cin * cout_tile * 2               # bf16 resident weights
        total = 2 * (halo_in + y_out + stats) + im2col + 2 * weights
        total += th * w * cout_tile * 4                 # f32 dot result
        if total <= budget:
            best = th
    return best


def _pick_flat_tile(m, cap=1024):
    """(row tile, padded row count) for the elementwise finalize pass."""
    if m <= cap:
        return m, m
    r = cap - cap % 8
    while r >= 8:
        if m % r == 0:
            return r, m
        r -= 8
    tr = cap - cap % 8
    return tr, _round_up(m, tr)


# ----------------------------------------------------------------------------
# Pallas kernels
# ----------------------------------------------------------------------------
def _conv3x3_stats_kernel(x_ref, w_ref, y_ref, stats_ref, patches_ref):
    """3x3 conv (fused im2col, single big-K MXU dot) + per-tile BN partials.

    x_ref:       (1, TH+2, W+2, Cin)  bf16 zero-padded halo window
    w_ref:       (9*Cin, TCO)         bf16 weights (grid-resident per Cout tile)
    y_ref:       (1, TH*W, TCO)       bf16 raw conv output (pre-BN, no bias)
    stats_ref:   (1, 2, TCO)          f32 per-tile [sum, centered sum-of-squares]
    patches_ref: (TH*W, 9*Cin)        bf16 VMEM scratch holding the im2col tile
    """
    th = x_ref.shape[1] - 2
    w_out = x_ref.shape[2] - 2
    cin = x_ref.shape[3]
    rows = th * w_out

    xwin = x_ref[0]                                     # (TH+2, W+2, Cin) bf16
    for t in range(9):                                  # build im2col tile in VMEM
        dy, dx = t // 3, t % 3
        patches_ref[:, t * cin:(t + 1) * cin] = (
            xwin[dy:dy + th, dx:dx + w_out, :].reshape(rows, cin))

    # One big-K matmul (K = 9*Cin) straight into an f32 result.
    acc = jnp.dot(patches_ref[...], w_ref[...],
                  preferred_element_type=jnp.float32)   # (rows, TCO) f32
    y_ref[0] = acc.astype(y_ref.dtype)

    # Per-tile centered statistics (combined across tiles outside the kernel).
    s = jnp.sum(acc, axis=0, keepdims=True)             # (1, TCO)
    mu = s * (1.0 / rows)
    d = acc - mu
    q = jnp.sum(d * d, axis=0, keepdims=True)           # centered sum of squares
    stats_ref[0, 0:1, :] = s
    stats_ref[0, 1:2, :] = q


def _scale_shift_relu_kernel(y_ref, scale_ref, shift_ref, o_ref):
    """Elementwise y*scale + shift followed by ReLU (BN finalize / bias path)."""
    y = y_ref[...].astype(jnp.float32)
    o_ref[...] = jnp.maximum(y * scale_ref[...] + shift_ref[...],
                             0.0).astype(o_ref.dtype)


# ----------------------------------------------------------------------------
# Conv + BN + ReLU wrapper (two Pallas passes + tiny JAX stats reduce)
# ----------------------------------------------------------------------------
def conv3x3_bn_relu(x, w, b, gamma, beta, *, batchnorm=True,
                    out_dtype=jnp.float32):
    """3x3 conv (padding=1) + training-mode BatchNorm + ReLU.  NHWC layout.

    x: (N, H, W, Cin); w: (3, 3, Cin, Cout); b/gamma/beta: (Cout,).
    Returns (N, H, W, Cout) in `out_dtype`.
    """
    N, H, W, Cin = x.shape
    Cout = w.shape[-1]
    tco_pref, vmem_limit, budget = _tpu_defaults()
    if Cout % tco_pref == 0:
        tco = tco_pref
    elif Cout % 128 == 0:
        tco = 128
    else:
        tco = Cout                      # full-dim minor axis (no Cout tiling)
    n_co = Cout // tco

    TH = _pick_row_tile(H, W, Cin, tco, budget)
    nh = H // TH
    Mt = N * nh

    xp = jnp.pad(x.astype(jnp.bfloat16), ((0, 0), (1, 1), (1, 1), (0, 0)))
    if nh == 1:
        xw = xp                          # whole padded image per step: no halo copies
    else:
        # TODO(synk): for row-tiled large images the overlapping halo windows are
        # still replicated in HBM; a manual double-buffered DMA from the single
        # padded array would remove this copy.
        xw = jnp.stack([xp[:, i * TH:i * TH + TH + 2] for i in range(nh)],
                       axis=1).reshape(Mt, TH + 2, W + 2, Cin)

    w2d = w.reshape(9 * Cin, Cout).astype(jnp.bfloat16)

    y_raw, stats = pl.pallas_call(
        _conv3x3_stats_kernel,
        out_shape=(
            jax.ShapeDtypeStruct((Mt, TH * W, Cout), jnp.bfloat16),
            jax.ShapeDtypeStruct((Mt, 2, Cout), jnp.float32),
        ),
        grid_spec=pltpu.PrefetchScalarGridSpec(
            num_scalar_prefetch=0,
            # Cout-tile axis SLOW so the weight block index is constant along
            # the fast axis -> weights stay resident, no per-step re-DMA.
            grid=(n_co, Mt),
            in_specs=[
                pl.BlockSpec((1, TH + 2, W + 2, Cin),
                             lambda j, m: (m, 0, 0, 0)),
                pl.BlockSpec((9 * Cin, tco), lambda j, m: (0, j)),
            ],
            out_specs=(
                pl.BlockSpec((1, TH * W, tco), lambda j, m: (m, 0, j)),
                pl.BlockSpec((1, 2, tco), lambda j, m: (m, 0, j)),
            ),
            scratch_shapes=[pltpu.VMEM((TH * W, 9 * Cin), jnp.bfloat16)],
        ),
        compiler_params=pltpu.CompilerParams(
            dimension_semantics=("parallel", "parallel"),
            vmem_limit_bytes=vmem_limit,
        ),
    )(xw, w2d)

    # Cross-tile BN statistics: per-tile centered sums, Chan-style combine.
    if batchnorm:
        count = float(N * H * W)
        n_tile = float(TH * W)
        s = stats[:, 0, :]                                   # (Mt, Cout)
        q = stats[:, 1, :]
        mean = jnp.sum(s, axis=0) / count
        tile_mean = s / n_tile
        var = (jnp.sum(q, axis=0)
               + n_tile * jnp.sum((tile_mean - mean) ** 2, axis=0)) / count
        scale = gamma.astype(jnp.float32) * jax.lax.rsqrt(var + EPS)
        shift = beta.astype(jnp.float32) - mean * scale
        # conv bias omitted: it cancels exactly through batch normalization.
    else:
        scale = jnp.ones((Cout,), jnp.float32)
        shift = b.astype(jnp.float32)                        # bias folded into shift

    # Elementwise BN-finalize + ReLU (bf16 read, row tiled <= 1024).
    M = N * H * W
    TR, Mp = _pick_flat_tile(M)
    y_flat = y_raw.reshape(M, Cout)
    if Mp > M:
        y_flat = jnp.pad(y_flat, ((0, Mp - M), (0, 0)))
    out = pl.pallas_call(
        _scale_shift_relu_kernel,
        out_shape=jax.ShapeDtypeStruct((Mp, Cout), out_dtype),
        grid_spec=pltpu.PrefetchScalarGridSpec(
            num_scalar_prefetch=0,
            grid=(Mp // TR, n_co),
            in_specs=[
                pl.BlockSpec((TR, tco), lambda i, j: (i, j)),
                pl.BlockSpec((1, tco), lambda i, j: (0, j)),
                pl.BlockSpec((1, tco), lambda i, j: (0, j)),
            ],
            out_specs=pl.BlockSpec((TR, tco), lambda i, j: (i, j)),
        ),
        compiler_params=pltpu.CompilerParams(
            dimension_semantics=("parallel", "parallel"),
            vmem_limit_bytes=vmem_limit,
        ),
    )(y_flat, scale.reshape(1, Cout), shift.reshape(1, Cout))
    if Mp > M:
        out = out[:M]
    return out.reshape(N, H, W, Cout)


# ----------------------------------------------------------------------------
# ConvolutionBlock parameters + forward (mirrors the PyTorch module)
# ----------------------------------------------------------------------------
def make_convolution_block_params(key, in_filters, out_filters):
    k1, k2, k3, k4 = jax.random.split(key, 4)
    return {
        "w1": jax.random.normal(k1, (3, 3, in_filters, out_filters),
                                jnp.float32) * (1.0 / jnp.sqrt(9.0 * in_filters)),
        "b1": 0.01 * jax.random.normal(k2, (out_filters,), jnp.float32),
        "g1": jnp.ones((out_filters,), jnp.float32),      # BN weight init = 1
        "beta1": jnp.zeros((out_filters,), jnp.float32),  # BN bias init = 0
        "w2": jax.random.normal(k3, (3, 3, out_filters, out_filters),
                                jnp.float32) * (1.0 / jnp.sqrt(9.0 * out_filters)),
        "b2": 0.01 * jax.random.normal(k4, (out_filters,), jnp.float32),
        "g2": jnp.ones((out_filters,), jnp.float32),
        "beta2": jnp.zeros((out_filters,), jnp.float32),
    }


def convolution_block_forward(params, x_nchw, batchnorm=True):
    """ConvolutionBlock.forward: c1 -> BN -> relu -> c2 -> BN -> relu."""
    # TODO(synk): last_active callables other than the default F.relu are not
    #             implemented (the module default is relu).
    x = jnp.transpose(x_nchw, (0, 2, 3, 1)).astype(jnp.float32)   # NCHW -> NHWC

    # Layer 1: intermediate activation stored bf16 (it feeds layer 2's bf16 MXU
    # matmul); BN/ReLU math stays f32 inside the finalize kernel.
    # TODO(synk): layer-1's scale/shift+ReLU could be fused into layer-2's conv
    #             kernel (with a border re-zero mask) to skip one HBM round trip.
    a1 = conv3x3_bn_relu(x, params["w1"], params["b1"], params["g1"],
                         params["beta1"], batchnorm=batchnorm,
                         out_dtype=jnp.bfloat16)
    a2 = conv3x3_bn_relu(a1, params["w2"], params["b2"], params["g2"],
                         params["beta2"], batchnorm=batchnorm,
                         out_dtype=jnp.float32)
    return jnp.transpose(a2, (0, 3, 1, 2))                        # NHWC -> NCHW


# ----------------------------------------------------------------------------
if __name__ == "__main__":
    key = jax.random.PRNGKey(0)
    kp, kx = jax.random.split(key)

    # Small shapes consistent with the module: NCHW, batch=2, in=4, 16x16 -> 32.
    x = jax.random.normal(kx, (2, 4, 16, 16), jnp.float32)
    params = make_convolution_block_params(kp, in_filters=4, out_filters=32)

    fwd = jax.jit(functools.partial(convolution_block_forward, params))
    out = jax.block_until_ready(fwd(x))

    assert out.shape == (2, 32, 16, 16), out.shape
    assert out.dtype == jnp.float32
    assert bool(jnp.all(jnp.isfinite(out)))
    print("KERNEL_OK")
</pallas_src>

<mosaic_0001>
module attributes {stable_mosaic.version = 11 : i64} {
  func.func @_conv3x3_stats_kernel(%arg0: i32, %arg1: i32, %arg2: memref<1x18x18x4xbf16, #tpu.memory_space<vmem>>, %arg3: memref<36x32xbf16, #tpu.memory_space<vmem>>, %arg4: memref<1x256x32xbf16, #tpu.memory_space<vmem>>, %arg5: memref<1x2x32xf32, #tpu.memory_space<vmem>>, %arg6: memref<256x36xbf16, #tpu.memory_space<vmem>>) attributes {dimension_semantics = [#tpu.dimension_semantics<parallel>, #tpu.dimension_semantics<parallel>], iteration_bounds = array<i64: 1, 2>, scalar_prefetch = 0 : i64, scratch_operands = 1 : i64, tpu.core_type = #tpu.core_type<tc>, window_params = [{transform_indices = @transform_0, window_bounds = array<i64: 1, 18, 18, 4>}, {transform_indices = @transform_1, window_bounds = array<i64: 36, 32>}, {transform_indices = @transform_2, window_bounds = array<i64: 1, 256, 32>}, {transform_indices = @transform_3, window_bounds = array<i64: 1, 2, 32>}]} {
    %c0 = arith.constant 0 : index
    %c0_0 = arith.constant 0 : index
    %c0_1 = arith.constant 0 : index
    %c0_2 = arith.constant 0 : index
    %0 = vector.load %arg2[%c0, %c0_0, %c0_1, %c0_2] : memref<1x18x18x4xbf16, #tpu.memory_space<vmem>>, vector<1x18x18x4xbf16>
    %1 = vector.shape_cast %0 : vector<1x18x18x4xbf16> to vector<18x18x4xbf16>
    %2 = vector.extract_strided_slice %1 {offsets = [0, 0, 0], sizes = [16, 16, 4], strides = [1, 1, 1]} : vector<18x18x4xbf16> to vector<16x16x4xbf16>
    %3 = vector.shape_cast %2 : vector<16x16x4xbf16> to vector<256x4xbf16>
    %c0_3 = arith.constant 0 : index
    %c0_4 = arith.constant 0 : index
    %4 = vector.load %arg6[%c0_3, %c0_4] : memref<256x36xbf16, #tpu.memory_space<vmem>>, vector<256x4xbf16>
    tpu.vector_store %arg6[%c0_3, %c0_4], %3 {strides = array<i32>} : memref<256x36xbf16, #tpu.memory_space<vmem>>, vector<256x4xbf16>,
    %5 = vector.extract_strided_slice %1 {offsets = [0, 1, 0], sizes = [16, 16, 4], strides = [1, 1, 1]} : vector<18x18x4xbf16> to vector<16x16x4xbf16>
    %6 = vector.shape_cast %5 : vector<16x16x4xbf16> to vector<256x4xbf16>
    %c0_5 = arith.constant 0 : index
    %c4 = arith.constant 4 : index
    %7 = vector.load %arg6[%c0_5, %c4] : memref<256x36xbf16, #tpu.memory_space<vmem>>, vector<256x4xbf16>
    tpu.vector_store %arg6[%c0_5, %c4], %6 {strides = array<i32>} : memref<256x36xbf16, #tpu.memory_space<vmem>>, vector<256x4xbf16>,
    %8 = vector.extract_strided_slice %1 {offsets = [0, 2, 0], sizes = [16, 16, 4], strides = [1, 1, 1]} : vector<18x18x4xbf16> to vector<16x16x4xbf16>
    %9 = vector.shape_cast %8 : vector<16x16x4xbf16> to vector<256x4xbf16>
    %c0_6 = arith.constant 0 : index
    %c8 = arith.constant 8 : index
    %10 = vector.load %arg6[%c0_6, %c8] : memref<256x36xbf16, #tpu.memory_space<vmem>>, vector<256x4xbf16>
    tpu.vector_store %arg6[%c0_6, %c8], %9 {strides = array<i32>} : memref<256x36xbf16, #tpu.memory_space<vmem>>, vector<256x4xbf16>,
    %11 = vector.extract_strided_slice %1 {offsets = [1, 0, 0], sizes = [16, 16, 4], strides = [1, 1, 1]} : vector<18x18x4xbf16> to vector<16x16x4xbf16>
    %12 = vector.shape_cast %11 : vector<16x16x4xbf16> to vector<256x4xbf16>
    %c0_7 = arith.constant 0 : index
    %c12 = arith.constant 12 : index
    %13 = vector.load %arg6[%c0_7, %c12] : memref<256x36xbf16, #tpu.memory_space<vmem>>, vector<256x4xbf16>
    tpu.vector_store %arg6[%c0_7, %c12], %12 {strides = array<i32>} : memref<256x36xbf16, #tpu.memory_space<vmem>>, vector<256x4xbf16>,
    %14 = vector.extract_strided_slice %1 {offsets = [1, 1, 0], sizes = [16, 16, 4], strides = [1, 1, 1]} : vector<18x18x4xbf16> to vector<16x16x4xbf16>
    %15 = vector.shape_cast %14 : vector<16x16x4xbf16> to vector<256x4xbf16>
    %c0_8 = arith.constant 0 : index
    %c16 = arith.constant 16 : index
    %16 = vector.load %arg6[%c0_8, %c16] : memref<256x36xbf16, #tpu.memory_space<vmem>>, vector<256x4xbf16>
    tpu.vector_store %arg6[%c0_8, %c16], %15 {strides = array<i32>} : memref<256x36xbf16, #tpu.memory_space<vmem>>, vector<256x4xbf16>,
    %17 = vector.extract_strided_slice %1 {offsets = [1, 2, 0], sizes = [16, 16, 4], strides = [1, 1, 1]} : vector<18x18x4xbf16> to vector<16x16x4xbf16>
    %18 = vector.shape_cast %17 : vector<16x16x4xbf16> to vector<256x4xbf16>
    %c0_9 = arith.constant 0 : index
    %c20 = arith.constant 20 : index
    %19 = vector.load %arg6[%c0_9, %c20] : memref<256x36xbf16, #tpu.memory_space<vmem>>, vector<256x4xbf16>
    tpu.vector_store %arg6[%c0_9, %c20], %18 {strides = array<i32>} : memref<256x36xbf16, #tpu.memory_space<vmem>>, vector<256x4xbf16>,
    %20 = vector.extract_strided_slice %1 {offsets = [2, 0, 0], sizes = [16, 16, 4], strides = [1, 1, 1]} : vector<18x18x4xbf16> to vector<16x16x4xbf16>
    %21 = vector.shape_cast %20 : vector<16x16x4xbf16> to vector<256x4xbf16>
    %c0_10 = arith.constant 0 : index
    %c24 = arith.constant 24 : index
    %22 = vector.load %arg6[%c0_10, %c24] : memref<256x36xbf16, #tpu.memory_space<vmem>>, vector<256x4xbf16>
    tpu.vector_store %arg6[%c0_10, %c24], %21 {strides = array<i32>} : memref<256x36xbf16, #tpu.memory_space<vmem>>, vector<256x4xbf16>,
    %23 = vector.extract_strided_slice %1 {offsets = [2, 1, 0], sizes = [16, 16, 4], strides = [1, 1, 1]} : vector<18x18x4xbf16> to vector<16x16x4xbf16>
    %24 = vector.shape_cast %23 : vector<16x16x4xbf16> to vector<256x4xbf16>
    %c0_11 = arith.constant 0 : index
    %c28 = arith.constant 28 : index
    %25 = vector.load %arg6[%c0_11, %c28] : memref<256x36xbf16, #tpu.memory_space<vmem>>, vector<256x4xbf16>
    tpu.vector_store %arg6[%c0_11, %c28], %24 {strides = array<i32>} : memref<256x36xbf16, #tpu.memory_space<vmem>>, vector<256x4xbf16>,
    %26 = vector.extract_strided_slice %1 {offsets = [2, 2, 0], sizes = [16, 16, 4], strides = [1, 1, 1]} : vector<18x18x4xbf16> to vector<16x16x4xbf16>
    %27 = vector.shape_cast %26 : vector<16x16x4xbf16> to vector<256x4xbf16>
    %c0_12 = arith.constant 0 : index
    %c32 = arith.constant 32 : index
    %28 = vector.load %arg6[%c0_12, %c32] : memref<256x36xbf16, #tpu.memory_space<vmem>>, vector<256x4xbf16>
    tpu.vector_store %arg6[%c0_12, %c32], %27 {strides = array<i32>} : memref<256x36xbf16, #tpu.memory_space<vmem>>, vector<256x4xbf16>,
    %c0_13 = arith.constant 0 : index
    %c0_14 = arith.constant 0 : index
    %29 = vector.load %arg6[%c0_13, %c0_14] : memref<256x36xbf16, #tpu.memory_space<vmem>>, vector<256x36xbf16>
    %c0_15 = arith.constant 0 : index
    %c0_16 = arith.constant 0 : index
    %30 = vector.load %arg3[%c0_15, %c0_16] : memref<36x32xbf16, #tpu.memory_space<vmem>>, vector<36x32xbf16>
    %cst = arith.constant dense<0.000000e+00> : vector<256x32xf32>
    %31 = tpu.matmul %29, %30, %cst {dimension_numbers = #tpu.dot_dimension_numbers<[1], [0], [0], [1], [0, 0, 1, 1], [], []>} : vector<256x36xbf16>, vector<36x32xbf16>, vector<256x32xf32> -> vector<256x32xf32>
    %32 = arith.truncf %31 : vector<256x32xf32> to vector<256x32xbf16>
    %c0_17 = arith.constant 0 : index
    %c0_18 = arith.constant 0 : index
    %c0_19 = arith.constant 0 : index
    %33 = vector.load %arg4[%c0_17, %c0_18, %c0_19] : memref<1x256x32xbf16, #tpu.memory_space<vmem>>, vector<1x256x32xbf16>
    %34 = vector.shape_cast %33 : vector<1x256x32xbf16> to vector<256x32xbf16>
    %35 = vector.shape_cast %32 : vector<256x32xbf16> to vector<1x256x32xbf16>
    tpu.vector_store %arg4[%c0_17, %c0_18, %c0_19], %35 {strides = array<i32>} : memref<1x256x32xbf16, #tpu.memory_space<vmem>>, vector<1x256x32xbf16>,
    %cst_20 = arith.constant dense<0.000000e+00> : vector<32xf32>
    %36 = vector.multi_reduction <add>, %31, %cst_20 [0] : vector<256x32xf32> to vector<32xf32>
    %37 = vector.shape_cast %36 : vector<32xf32> to vector<1x32xf32>
    %cst_21 = arith.constant 3.906250e-03 : f32
    %38 = vector.broadcast %cst_21 : f32 to vector<1x32xf32>
    %39 = arith.mulf %37, %38 : vector<1x32xf32>
    %40 = vector.broadcast %39 : vector<1x32xf32> to vector<256x32xf32>
    %41 = arith.subf %31, %40 : vector<256x32xf32>
    %42 = arith.mulf %41, %41 : vector<256x32xf32>
    %cst_22 = arith.constant dense<0.000000e+00> : vector<32xf32>
    %43 = vector.multi_reduction <add>, %42, %cst_22 [0] : vector<256x32xf32> to vector<32xf32>
    %44 = vector.shape_cast %43 : vector<32xf32> to vector<1x32xf32>
    %c0_23 = arith.constant 0 : index
    %c0_24 = arith.constant 0 : index
    %c0_25 = arith.constant 0 : index
    %45 = vector.load %arg5[%c0_23, %c0_24, %c0_25] : memref<1x2x32xf32, #tpu.memory_space<vmem>>, vector<1x1x32xf32>
    %46 = vector.shape_cast %45 : vector<1x1x32xf32> to vector<1x32xf32>
    %47 = vector.shape_cast %37 : vector<1x32xf32> to vector<1x1x32xf32>
    tpu.vector_store %arg5[%c0_23, %c0_24, %c0_25], %47 {strides = array<i32>} : memref<1x2x32xf32, #tpu.memory_space<vmem>>, vector<1x1x32xf32>,
    %c0_26 = arith.constant 0 : index
    %c1 = arith.constant 1 : index
    %c0_27 = arith.constant 0 : index
    %48 = vector.load %arg5[%c0_26, %c1, %c0_27] : memref<1x2x32xf32, #tpu.memory_space<vmem>>, vector<1x1x32xf32>
    %49 = vector.shape_cast %48 : vector<1x1x32xf32> to vector<1x32xf32>
    %50 = vector.shape_cast %44 : vector<1x32xf32> to vector<1x1x32xf32>
    tpu.vector_store %arg5[%c0_26, %c1, %c0_27], %50 {strides = array<i32>} : memref<1x2x32xf32, #tpu.memory_space<vmem>>, vector<1x1x32xf32>,
    return
  }
  func.func @transform_0(%arg0: i32, %arg1: i32) -> (i32, i32, i32, i32) {
    %c0_i32 = arith.constant 0 : i32
    %c0_i32_0 = arith.constant 0 : i32
    %c0_i32_1 = arith.constant 0 : i32
    %c0_i32_2 = arith.constant 0 : i32
    return %arg1, %c0_i32, %c0_i32_0, %c0_i32_1 : i32, i32, i32, i32
  }
  func.func @transform_1(%arg0: i32, %arg1: i32) -> (i32, i32) {
    %c0_i32 = arith.constant 0 : i32
    %c0_i32_0 = arith.constant 0 : i32
    return %c0_i32, %arg0 : i32, i32
  }
  func.func @transform_2(%arg0: i32, %arg1: i32) -> (i32, i32, i32) {
    %c0_i32 = arith.constant 0 : i32
    %c0_i32_0 = arith.constant 0 : i32
    return %arg1, %c0_i32, %arg0 : i32, i32, i32
  }
  func.func @transform_3(%arg0: i32, %arg1: i32) -> (i32, i32, i32) {
    %c0_i32 = arith.constant 0 : i32
    %c0_i32_0 = arith.constant 0 : i32
    return %arg1, %c0_i32, %arg0 : i32, i32, i32
  }
}

module attributes {stable_mosaic.version = 11 : i64} {
  func.func @_scale_shift_relu_kernel(%arg0: i32, %arg1: i32, %arg2: memref<512x32xbf16, #tpu.memory_space<vmem>>, %arg3: memref<1x32xf32, #tpu.memory_space<vmem>>, %arg4: memref<1x32xf32, #tpu.memory_space<vmem>>, %arg5: memref<512x32xbf16, #tpu.memory_space<vmem>>) attributes {dimension_semantics = [#tpu.dimension_semantics<parallel>, #tpu.dimension_semantics<parallel>], iteration_bounds = array<i64: 1, 1>, scalar_prefetch = 0 : i64, scratch_operands = 0 : i64, tpu.core_type = #tpu.core_type<tc>, window_params = [{transform_indices = @transform_0, window_bounds = array<i64: 512, 32>}, {transform_indices = @transform_1, window_bounds = array<i64: 1, 32>}, {transform_indices = @transform_2, window_bounds = array<i64: 1, 32>}, {transform_indices = @transform_3, window_bounds = array<i64: 512, 32>}]} {
    %c0 = arith.constant 0 : index
    %c0_0 = arith.constant 0 : index
    %0 = vector.load %arg2[%c0, %c0_0] : memref<512x32xbf16, #tpu.memory_space<vmem>>, vector<512x32xbf16>
    %1 = arith.extf %0 : vector<512x32xbf16> to vector<512x32xf32>
    %c0_1 = arith.constant 0 : index
    %c0_2 = arith.constant 0 : index
    %2 = vector.load %arg3[%c0_1, %c0_2] : memref<1x32xf32, #tpu.memory_space<vmem>>, vector<1x32xf32>
    %3 = vector.broadcast %2 : vector<1x32xf32> to vector<512x32xf32>
    %4 = arith.mulf %1, %3 : vector<512x32xf32>
    %c0_3 = arith.constant 0 : index
    %c0_4 = arith.constant 0 : index
    %5 = vector.load %arg4[%c0_3, %c0_4] : memref<1x32xf32, #tpu.memory_space<vmem>>, vector<1x32xf32>
    %6 = vector.broadcast %5 : vector<1x32xf32> to vector<512x32xf32>
    %7 = arith.addf %4, %6 : vector<512x32xf32>
    %cst = arith.constant 0.000000e+00 : f32
    %8 = vector.broadcast %cst : f32 to vector<512x32xf32>
    %9 = arith.maximumf %7, %8 : vector<512x32xf32>
    %10 = arith.truncf %9 : vector<512x32xf32> to vector<512x32xbf16>
    %c0_5 = arith.constant 0 : index
    %c0_6 = arith.constant 0 : index
    %11 = vector.load %arg5[%c0_5, %c0_6] : memref<512x32xbf16, #tpu.memory_space<vmem>>, vector<512x32xbf16>
    tpu.vector_store %arg5[%c0_5, %c0_6], %10 {strides = array<i32>} : memref<512x32xbf16, #tpu.memory_space<vmem>>, vector<512x32xbf16>,
    return
  }
  func.func @transform_0(%arg0: i32, %arg1: i32) -> (i32, i32) {
    %c0_i32 = arith.constant 0 : i32
    return %arg0, %arg1 : i32, i32
  }
  func.func @transform_1(%arg0: i32, %arg1: i32) -> (i32, i32) {
    %c0_i32 = arith.constant 0 : i32
    %c0_i32_0 = arith.constant 0 : i32
    return %c0_i32, %arg1 : i32, i32
  }
  func.func @transform_2(%arg0: i32, %arg1: i32) -> (i32, i32) {
    %c0_i32 = arith.constant 0 : i32
    %c0_i32_0 = arith.constant 0 : i32
    return %c0_i32, %arg1 : i32, i32
  }
  func.func @transform_3(%arg0: i32, %arg1: i32) -> (i32, i32) {
    %c0_i32 = arith.constant 0 : i32
    return %arg0, %arg1 : i32, i32
  }
}

module attributes {stable_mosaic.version = 11 : i64} {
  func.func @_conv3x3_stats_kernel(%arg0: i32, %arg1: i32, %arg2: memref<1x18x18x32xbf16, #tpu.memory_space<vmem>>, %arg3: memref<288x32xbf16, #tpu.memory_space<vmem>>, %arg4: memref<1x256x32xbf16, #tpu.memory_space<vmem>>, %arg5: memref<1x2x32xf32, #tpu.memory_space<vmem>>, %arg6: memref<256x288xbf16, #tpu.memory_space<vmem>>) attributes {dimension_semantics = [#tpu.dimension_semantics<parallel>, #tpu.dimension_semantics<parallel>], iteration_bounds = array<i64: 1, 2>, scalar_prefetch = 0 : i64, scratch_operands = 1 : i64, tpu.core_type = #tpu.core_type<tc>, window_params = [{transform_indices = @transform_0, window_bounds = array<i64: 1, 18, 18, 32>}, {transform_indices = @transform_1, window_bounds = array<i64: 288, 32>}, {transform_indices = @transform_2, window_bounds = array<i64: 1, 256, 32>}, {transform_indices = @transform_3, window_bounds = array<i64: 1, 2, 32>}]} {
    %c0 = arith.constant 0 : index
    %c0_0 = arith.constant 0 : index
    %c0_1 = arith.constant 0 : index
    %c0_2 = arith.constant 0 : index
    %0 = vector.load %arg2[%c0, %c0_0, %c0_1, %c0_2] : memref<1x18x18x32xbf16, #tpu.memory_space<vmem>>, vector<1x18x18x32xbf16>
    %1 = vector.shape_cast %0 : vector<1x18x18x32xbf16> to vector<18x18x32xbf16>
    %2 = vector.extract_strided_slice %1 {offsets = [0, 0, 0], sizes = [16, 16, 32], strides = [1, 1, 1]} : vector<18x18x32xbf16> to vector<16x16x32xbf16>
    %3 = vector.shape_cast %2 : vector<16x16x32xbf16> to vector<256x32xbf16>
    %c0_3 = arith.constant 0 : index
    %c0_4 = arith.constant 0 : index
    %4 = vector.load %arg6[%c0_3, %c0_4] : memref<256x288xbf16, #tpu.memory_space<vmem>>, vector<256x32xbf16>
    tpu.vector_store %arg6[%c0_3, %c0_4], %3 {strides = array<i32>} : memref<256x288xbf16, #tpu.memory_space<vmem>>, vector<256x32xbf16>,
    %5 = vector.extract_strided_slice %1 {offsets = [0, 1, 0], sizes = [16, 16, 32], strides = [1, 1, 1]} : vector<18x18x32xbf16> to vector<16x16x32xbf16>
    %6 = vector.shape_cast %5 : vector<16x16x32xbf16> to vector<256x32xbf16>
    %c0_5 = arith.constant 0 : index
    %c32 = arith.constant 32 : index
    %7 = vector.load %arg6[%c0_5, %c32] : memref<256x288xbf16, #tpu.memory_space<vmem>>, vector<256x32xbf16>
    tpu.vector_store %arg6[%c0_5, %c32], %6 {strides = array<i32>} : memref<256x288xbf16, #tpu.memory_space<vmem>>, vector<256x32xbf16>,
    %8 = vector.extract_strided_slice %1 {offsets = [0, 2, 0], sizes = [16, 16, 32], strides = [1, 1, 1]} : vector<18x18x32xbf16> to vector<16x16x32xbf16>
    %9 = vector.shape_cast %8 : vector<16x16x32xbf16> to vector<256x32xbf16>
    %c0_6 = arith.constant 0 : index
    %c64 = arith.constant 64 : index
    %10 = vector.load %arg6[%c0_6, %c64] : memref<256x288xbf16, #tpu.memory_space<vmem>>, vector<256x32xbf16>
    tpu.vector_store %arg6[%c0_6, %c64], %9 {strides = array<i32>} : memref<256x288xbf16, #tpu.memory_space<vmem>>, vector<256x32xbf16>,
    %11 = vector.extract_strided_slice %1 {offsets = [1, 0, 0], sizes = [16, 16, 32], strides = [1, 1, 1]} : vector<18x18x32xbf16> to vector<16x16x32xbf16>
    %12 = vector.shape_cast %11 : vector<16x16x32xbf16> to vector<256x32xbf16>
    %c0_7 = arith.constant 0 : index
    %c96 = arith.constant 96 : index
    %13 = vector.load %arg6[%c0_7, %c96] : memref<256x288xbf16, #tpu.memory_space<vmem>>, vector<256x32xbf16>
    tpu.vector_store %arg6[%c0_7, %c96], %12 {strides = array<i32>} : memref<256x288xbf16, #tpu.memory_space<vmem>>, vector<256x32xbf16>,
    %14 = vector.extract_strided_slice %1 {offsets = [1, 1, 0], sizes = [16, 16, 32], strides = [1, 1, 1]} : vector<18x18x32xbf16> to vector<16x16x32xbf16>
    %15 = vector.shape_cast %14 : vector<16x16x32xbf16> to vector<256x32xbf16>
    %c0_8 = arith.constant 0 : index
    %c128 = arith.constant 128 : index
    %16 = vector.load %arg6[%c0_8, %c128] : memref<256x288xbf16, #tpu.memory_space<vmem>>, vector<256x32xbf16>
    tpu.vector_store %arg6[%c0_8, %c128], %15 {strides = array<i32>} : memref<256x288xbf16, #tpu.memory_space<vmem>>, vector<256x32xbf16>,
    %17 = vector.extract_strided_slice %1 {offsets = [1, 2, 0], sizes = [16, 16, 32], strides = [1, 1, 1]} : vector<18x18x32xbf16> to vector<16x16x32xbf16>
    %18 = vector.shape_cast %17 : vector<16x16x32xbf16> to vector<256x32xbf16>
    %c0_9 = arith.constant 0 : index
    %c160 = arith.constant 160 : index
    %19 = vector.load %arg6[%c0_9, %c160] : memref<256x288xbf16, #tpu.memory_space<vmem>>, vector<256x32xbf16>
    tpu.vector_store %arg6[%c0_9, %c160], %18 {strides = array<i32>} : memref<256x288xbf16, #tpu.memory_space<vmem>>, vector<256x32xbf16>,
    %20 = vector.extract_strided_slice %1 {offsets = [2, 0, 0], sizes = [16, 16, 32], strides = [1, 1, 1]} : vector<18x18x32xbf16> to vector<16x16x32xbf16>
    %21 = vector.shape_cast %20 : vector<16x16x32xbf16> to vector<256x32xbf16>
    %c0_10 = arith.constant 0 : index
    %c192 = arith.constant 192 : index
    %22 = vector.load %arg6[%c0_10, %c192] : memref<256x288xbf16, #tpu.memory_space<vmem>>, vector<256x32xbf16>
    tpu.vector_store %arg6[%c0_10, %c192], %21 {strides = array<i32>} : memref<256x288xbf16, #tpu.memory_space<vmem>>, vector<256x32xbf16>,
    %23 = vector.extract_strided_slice %1 {offsets = [2, 1, 0], sizes = [16, 16, 32], strides = [1, 1, 1]} : vector<18x18x32xbf16> to vector<16x16x32xbf16>
    %24 = vector.shape_cast %23 : vector<16x16x32xbf16> to vector<256x32xbf16>
    %c0_11 = arith.constant 0 : index
    %c224 = arith.constant 224 : index
    %25 = vector.load %arg6[%c0_11, %c224] : memref<256x288xbf16, #tpu.memory_space<vmem>>, vector<256x32xbf16>
    tpu.vector_store %arg6[%c0_11, %c224], %24 {strides = array<i32>} : memref<256x288xbf16, #tpu.memory_space<vmem>>, vector<256x32xbf16>,
    %26 = vector.extract_strided_slice %1 {offsets = [2, 2, 0], sizes = [16, 16, 32], strides = [1, 1, 1]} : vector<18x18x32xbf16> to vector<16x16x32xbf16>
    %27 = vector.shape_cast %26 : vector<16x16x32xbf16> to vector<256x32xbf16>
    %c0_12 = arith.constant 0 : index
    %c256 = arith.constant 256 : index
    %28 = vector.load %arg6[%c0_12, %c256] : memref<256x288xbf16, #tpu.memory_space<vmem>>, vector<256x32xbf16>
    tpu.vector_store %arg6[%c0_12, %c256], %27 {strides = array<i32>} : memref<256x288xbf16, #tpu.memory_space<vmem>>, vector<256x32xbf16>,
    %c0_13 = arith.constant 0 : index
    %c0_14 = arith.constant 0 : index
    %29 = vector.load %arg6[%c0_13, %c0_14] : memref<256x288xbf16, #tpu.memory_space<vmem>>, vector<256x288xbf16>
    %c0_15 = arith.constant 0 : index
    %c0_16 = arith.constant 0 : index
    %30 = vector.load %arg3[%c0_15, %c0_16] : memref<288x32xbf16, #tpu.memory_space<vmem>>, vector<288x32xbf16>
    %cst = arith.constant dense<0.000000e+00> : vector<256x32xf32>
    %31 = tpu.matmul %29, %30, %cst {dimension_numbers = #tpu.dot_dimension_numbers<[1], [0], [0], [1], [0, 0, 1, 1], [], []>} : vector<256x288xbf16>, vector<288x32xbf16>, vector<256x32xf32> -> vector<256x32xf32>
    %32 = arith.truncf %31 : vector<256x32xf32> to vector<256x32xbf16>
    %c0_17 = arith.constant 0 : index
    %c0_18 = arith.constant 0 : index
    %c0_19 = arith.constant 0 : index
    %33 = vector.load %arg4[%c0_17, %c0_18, %c0_19] : memref<1x256x32xbf16, #tpu.memory_space<vmem>>, vector<1x256x32xbf16>
    %34 = vector.shape_cast %33 : vector<1x256x32xbf16> to vector<256x32xbf16>
    %35 = vector.shape_cast %32 : vector<256x32xbf16> to vector<1x256x32xbf16>
    tpu.vector_store %arg4[%c0_17, %c0_18, %c0_19], %35 {strides = array<i32>} : memref<1x256x32xbf16, #tpu.memory_space<vmem>>, vector<1x256x32xbf16>,
    %cst_20 = arith.constant dense<0.000000e+00> : vector<32xf32>
    %36 = vector.multi_reduction <add>, %31, %cst_20 [0] : vector<256x32xf32> to vector<32xf32>
    %37 = vector.shape_cast %36 : vector<32xf32> to vector<1x32xf32>
    %cst_21 = arith.constant 3.906250e-03 : f32
    %38 = vector.broadcast %cst_21 : f32 to vector<1x32xf32>
    %39 = arith.mulf %37, %38 : vector<1x32xf32>
    %40 = vector.broadcast %39 : vector<1x32xf32> to vector<256x32xf32>
    %41 = arith.subf %31, %40 : vector<256x32xf32>
    %42 = arith.mulf %41, %41 : vector<256x32xf32>
    %cst_22 = arith.constant dense<0.000000e+00> : vector<32xf32>
    %43 = vector.multi_reduction <add>, %42, %cst_22 [0] : vector<256x32xf32> to vector<32xf32>
    %44 = vector.shape_cast %43 : vector<32xf32> to vector<1x32xf32>
    %c0_23 = arith.constant 0 : index
    %c0_24 = arith.constant 0 : index
    %c0_25 = arith.constant 0 : index
    %45 = vector.load %arg5[%c0_23, %c0_24, %c0_25] : memref<1x2x32xf32, #tpu.memory_space<vmem>>, vector<1x1x32xf32>
    %46 = vector.shape_cast %45 : vector<1x1x32xf32> to vector<1x32xf32>
    %47 = vector.shape_cast %37 : vector<1x32xf32> to vector<1x1x32xf32>
    tpu.vector_store %arg5[%c0_23, %c0_24, %c0_25], %47 {strides = array<i32>} : memref<1x2x32xf32, #tpu.memory_space<vmem>>, vector<1x1x32xf32>,
    %c0_26 = arith.constant 0 : index
    %c1 = arith.constant 1 : index
    %c0_27 = arith.constant 0 : index
    %48 = vector.load %arg5[%c0_26, %c1, %c0_27] : memref<1x2x32xf32, #tpu.memory_space<vmem>>, vector<1x1x32xf32>
    %49 = vector.shape_cast %48 : vector<1x1x32xf32> to vector<1x32xf32>
    %50 = vector.shape_cast %44 : vector<1x32xf32> to vector<1x1x32xf32>
    tpu.vector_store %arg5[%c0_26, %c1, %c0_27], %50 {strides = array<i32>} : memref<1x2x32xf32, #tpu.memory_space<vmem>>, vector<1x1x32xf32>,
    return
  }
  func.func @transform_0(%arg0: i32, %arg1: i32) -> (i32, i32, i32, i32) {
    %c0_i32 = arith.constant 0 : i32
    %c0_i32_0 = arith.constant 0 : i32
    %c0_i32_1 = arith.constant 0 : i32
    %c0_i32_2 = arith.constant 0 : i32
    return %arg1, %c0_i32, %c0_i32_0, %c0_i32_1 : i32, i32, i32, i32
  }
  func.func @transform_1(%arg0: i32, %arg1: i32) -> (i32, i32) {
    %c0_i32 = arith.constant 0 : i32
    %c0_i32_0 = arith.constant 0 : i32
    return %c0_i32, %arg0 : i32, i32
  }
  func.func @transform_2(%arg0: i32, %arg1: i32) -> (i32, i32, i32) {
    %c0_i32 = arith.constant 0 : i32
    %c0_i32_0 = arith.constant 0 : i32
    return %arg1, %c0_i32, %arg0 : i32, i32, i32
  }
  func.func @transform_3(%arg0: i32, %arg1: i32) -> (i32, i32, i32) {
    %c0_i32 = arith.constant 0 : i32
    %c0_i32_0 = arith.constant 0 : i32
    return %arg1, %c0_i32, %arg0 : i32, i32, i32
  }
}

module attributes {stable_mosaic.version = 11 : i64} {
  func.func @_scale_shift_relu_kernel(%arg0: i32, %arg1: i32, %arg2: memref<512x32xbf16, #tpu.memory_space<vmem>>, %arg3: memref<1x32xf32, #tpu.memory_space<vmem>>, %arg4: memref<1x32xf32, #tpu.memory_space<vmem>>, %arg5: memref<512x32xf32, #tpu.memory_space<vmem>>) attributes {dimension_semantics = [#tpu.dimension_semantics<parallel>, #tpu.dimension_semantics<parallel>], iteration_bounds = array<i64: 1, 1>, scalar_prefetch = 0 : i64, scratch_operands = 0 : i64, tpu.core_type = #tpu.core_type<tc>, window_params = [{transform_indices = @transform_0, window_bounds = array<i64: 512, 32>}, {transform_indices = @transform_1, window_bounds = array<i64: 1, 32>}, {transform_indices = @transform_2, window_bounds = array<i64: 1, 32>}, {transform_indices = @transform_3, window_bounds = array<i64: 512, 32>}]} {
    %c0 = arith.constant 0 : index
    %c0_0 = arith.constant 0 : index
    %0 = vector.load %arg2[%c0, %c0_0] : memref<512x32xbf16, #tpu.memory_space<vmem>>, vector<512x32xbf16>
    %1 = arith.extf %0 : vector<512x32xbf16> to vector<512x32xf32>
    %c0_1 = arith.constant 0 : index
    %c0_2 = arith.constant 0 : index
    %2 = vector.load %arg3[%c0_1, %c0_2] : memref<1x32xf32, #tpu.memory_space<vmem>>, vector<1x32xf32>
    %3 = vector.broadcast %2 : vector<1x32xf32> to vector<512x32xf32>
    %4 = arith.mulf %1, %3 : vector<512x32xf32>
    %c0_3 = arith.constant 0 : index
    %c0_4 = arith.constant 0 : index
    %5 = vector.load %arg4[%c0_3, %c0_4] : memref<1x32xf32, #tpu.memory_space<vmem>>, vector<1x32xf32>
    %6 = vector.broadcast %5 : vector<1x32xf32> to vector<512x32xf32>
    %7 = arith.addf %4, %6 : vector<512x32xf32>
    %cst = arith.constant 0.000000e+00 : f32
    %8 = vector.broadcast %cst : f32 to vector<512x32xf32>
    %9 = arith.maximumf %7, %8 : vector<512x32xf32>
    %c0_5 = arith.constant 0 : index
    %c0_6 = arith.constant 0 : index
    %10 = vector.load %arg5[%c0_5, %c0_6] : memref<512x32xf32, #tpu.memory_space<vmem>>, vector<512x32xf32>
    tpu.vector_store %arg5[%c0_5, %c0_6], %9 {strides = array<i32>} : memref<512x32xf32, #tpu.memory_space<vmem>>, vector<512x32xf32>,
    return
  }
  func.func @transform_0(%arg0: i32, %arg1: i32) -> (i32, i32) {
    %c0_i32 = arith.constant 0 : i32
    return %arg0, %arg1 : i32, i32
  }
  func.func @transform_1(%arg0: i32, %arg1: i32) -> (i32, i32) {
    %c0_i32 = arith.constant 0 : i32
    %c0_i32_0 = arith.constant 0 : i32
    return %c0_i32, %arg1 : i32, i32
  }
  func.func @transform_2(%arg0: i32, %arg1: i32) -> (i32, i32) {
    %c0_i32 = arith.constant 0 : i32
    %c0_i32_0 = arith.constant 0 : i32
    return %c0_i32, %arg1 : i32, i32
  }
  func.func @transform_3(%arg0: i32, %arg1: i32) -> (i32, i32) {
    %c0_i32 = arith.constant 0 : i32
    return %arg0, %arg1 : i32, i32
  }
}

</mosaic_0001>

<llo_original>
// kernel: convolution_block_forward.5
$region0: #{convolution_block_forward.5}
  #allocation0 [shape = 'u32[]', space=smem, size = 0x4, offset = 0x4, fixed_abs, tag = 'smem constant byte address 0x4 - core index']
  #allocation1 [shape = 'u32[144,128]{1,0:T(1,128)}', space=vmem, size = 0x12000, scoped, tag = 'internal scratch']
  %s0 = inlined_call_operand.vmem [shape: bf16[512,32], index: 0, kind: input, shape index: {}]
  %s1 = inlined_call_operand.vmem [shape: f32[1,32], index: 1, kind: input, shape index: {}]
  %s2 = inlined_call_operand.vmem [shape: f32[1,32], index: 2, kind: input, shape index: {}]
  %s3 = inlined_call_operand.vmem [shape: bf16[512,32], index: 3, kind: output, shape index: {}]
  %s4 = sld [smem:[#allocation0]]
  $region22: #{convolution_block_forward.5} parent=0
    _
  %s6 = ssub.s32 1, %s4
  %s7 = scalar_select 0, %s6, %s4
  // Predicated region
  $region2: #{convolution_block_forward.5} parent=0 // pred_check
    _
  $region3: #{convolution_block_forward.5} parent=0 // pred_check_branch
    %9 = sbr.rel (0) target = $region5
  $region4: #{convolution_block_forward.5} parent=0 // pred_region
    _
  $region5: #{convolution_block_forward.5} parent=0 // pred_fallthru
    _
  // Predicated region
  $region6: #{convolution_block_forward.5} parent=0 // pred_check
    _
  $region7: #{convolution_block_forward.5} parent=0 // pred_check_branch
    %11 = sbr.rel (0) target = $region9
  $region8: #{convolution_block_forward.5} parent=0 // pred_region
    _
  $region9: #{convolution_block_forward.5} parent=0 // pred_fallthru
    _
  // Predicated region
  $region10: #{convolution_block_forward.5} parent=0 // pred_check
    _
  $region11: #{convolution_block_forward.5} parent=0 // pred_check_branch
    %13 = sbr.rel (0) target = $region13
  $region12: #{convolution_block_forward.5} parent=0 // pred_region
    _
  $region13: #{convolution_block_forward.5} parent=0 // pred_fallthru
    _
  %v14 = vld [vmem:[%s0] sm:$0xf]
  %v15 = vld [vmem:[%s0 + $0x4] sm:$0xf]
  %v16 = vld [vmem:[%s0 + $0x8] sm:$0xf]
  %v17 = vld [vmem:[%s0 + $0xc] sm:$0xf]
  %v18 = vld [vmem:[%s0 + $0x10] sm:$0xf]
  %v19 = vld [vmem:[%s0 + $0x14] sm:$0xf]
  %v20 = vld [vmem:[%s0 + $0x18] sm:$0xf]
  %v21 = vld [vmem:[%s0 + $0x1c] sm:$0xf]
  %v22 = vld [vmem:[%s0 + $0x20] sm:$0xf]
  %v23 = vld [vmem:[%s0 + $0x24] sm:$0xf]
  %v24 = vld [vmem:[%s0 + $0x28] sm:$0xf]
  %v25 = vld [vmem:[%s0 + $0x2c] sm:$0xf]
  %v26 = vld [vmem:[%s0 + $0x30] sm:$0xf]
  %v27 = vld [vmem:[%s0 + $0x34] sm:$0xf]
  %v28 = vld [vmem:[%s0 + $0x38] sm:$0xf]
  %v29 = vld [vmem:[%s0 + $0x3c] sm:$0xf]
  %v30 = vld [vmem:[%s0 + $0x40] sm:$0xf]
  %v31 = vld [vmem:[%s0 + $0x44] sm:$0xf]
  %v32 = vld [vmem:[%s0 + $0x48] sm:$0xf]
  %v33 = vld [vmem:[%s0 + $0x4c] sm:$0xf]
  %v34 = vld [vmem:[%s0 + $0x50] sm:$0xf]
  %v35 = vld [vmem:[%s0 + $0x54] sm:$0xf]
  %v36 = vld [vmem:[%s0 + $0x58] sm:$0xf]
  %v37 = vld [vmem:[%s0 + $0x5c] sm:$0xf]
  %v38 = vld [vmem:[%s0 + $0x60] sm:$0xf]
  %v39 = vld [vmem:[%s0 + $0x64] sm:$0xf]
  %v40 = vld [vmem:[%s0 + $0x68] sm:$0xf]
  %v41 = vld [vmem:[%s0 + $0x6c] sm:$0xf]
  %v42 = vld [vmem:[%s0 + $0x70] sm:$0xf]
  %v43 = vld [vmem:[%s0 + $0x74] sm:$0xf]
  %v44 = vld [vmem:[%s0 + $0x78] sm:$0xf]
  %v45 = vld [vmem:[%s0 + $0x7c] sm:$0xf]
  %v46 = vld [vmem:[%s0 + $0x80] sm:$0xf]
  %v47 = vld [vmem:[%s0 + $0x84] sm:$0xf]
  %v48 = vld [vmem:[%s0 + $0x88] sm:$0xf]
  %v49 = vld [vmem:[%s0 + $0x8c] sm:$0xf]
  %v50 = vld [vmem:[%s0 + $0x90] sm:$0xf]
  %v51 = vld [vmem:[%s0 + $0x94] sm:$0xf]
  %v52 = vld [vmem:[%s0 + $0x98] sm:$0xf]
  %v53 = vld [vmem:[%s0 + $0x9c] sm:$0xf]
  %v54 = vld [vmem:[%s0 + $0xa0] sm:$0xf]
  %v55 = vld [vmem:[%s0 + $0xa4] sm:$0xf]
  %v56 = vld [vmem:[%s0 + $0xa8] sm:$0xf]
  %v57 = vld [vmem:[%s0 + $0xac] sm:$0xf]
  %v58 = vld [vmem:[%s0 + $0xb0] sm:$0xf]
  %v59 = vld [vmem:[%s0 + $0xb4] sm:$0xf]
  %v60 = vld [vmem:[%s0 + $0xb8] sm:$0xf]
  %v61 = vld [vmem:[%s0 + $0xbc] sm:$0xf]
  %v62 = vld [vmem:[%s0 + $0xc0] sm:$0xf]
  %v63 = vld [vmem:[%s0 + $0xc4] sm:$0xf]
  %v64 = vld [vmem:[%s0 + $0xc8] sm:$0xf]
  %v65 = vld [vmem:[%s0 + $0xcc] sm:$0xf]
  %v66 = vld [vmem:[%s0 + $0xd0] sm:$0xf]
  %v67 = vld [vmem:[%s0 + $0xd4] sm:$0xf]
  %v68 = vld [vmem:[%s0 + $0xd8] sm:$0xf]
  %v69 = vld [vmem:[%s0 + $0xdc] sm:$0xf]
  %v70 = vld [vmem:[%s0 + $0xe0] sm:$0xf]
  %v71 = vld [vmem:[%s0 + $0xe4] sm:$0xf]
  %v72 = vld [vmem:[%s0 + $0xe8] sm:$0xf]
  %v73 = vld [vmem:[%s0 + $0xec] sm:$0xf]
  %v74 = vld [vmem:[%s0 + $0xf0] sm:$0xf]
  %v75 = vld [vmem:[%s0 + $0xf4] sm:$0xf]
  %v76 = vld [vmem:[%s0 + $0xf8] sm:$0xf]
  %v77 = vld [vmem:[%s0 + $0xfc] sm:$0xf]
  %v78 = vunpack.c.l.bf16 %v14
  %v79 = vunpack.c.l.bf16 %v15
  %v80 = vunpack.c.l.bf16 %v16
  %v81 = vunpack.c.l.bf16 %v17
  %v82 = vunpack.c.l.bf16 %v18
  %v83 = vunpack.c.l.bf16 %v19
  %v84 = vunpack.c.l.bf16 %v20
  %v85 = vunpack.c.l.bf16 %v21
  %v86 = vunpack.c.l.bf16 %v22
  %v87 = vunpack.c.l.bf16 %v23
  %v88 = vunpack.c.l.bf16 %v24
  %v89 = vunpack.c.l.bf16 %v25
  %v90 = vunpack.c.l.bf16 %v26
  %v91 = vunpack.c.l.bf16 %v27
  %v92 = vunpack.c.l.bf16 %v28
  %v93 = vunpack.c.l.bf16 %v29
  %v94 = vunpack.c.l.bf16 %v30
  %v95 = vunpack.c.l.bf16 %v31
  %v96 = vunpack.c.l.bf16 %v32
  %v97 = vunpack.c.l.bf16 %v33
  %v98 = vunpack.c.l.bf16 %v34
  %v99 = vunpack.c.l.bf16 %v35
  %v100 = vunpack.c.l.bf16 %v36
  %v101 = vunpack.c.l.bf16 %v37
  %v102 = vunpack.c.l.bf16 %v38
  %v103 = vunpack.c.l.bf16 %v39
  %v104 = vunpack.c.l.bf16 %v40
  %v105 = vunpack.c.l.bf16 %v41
  %v106 = vunpack.c.l.bf16 %v42
  %v107 = vunpack.c.l.bf16 %v43
  %v108 = vunpack.c.l.bf16 %v44
  %v109 = vunpack.c.l.bf16 %v45
  %v110 = vunpack.c.l.bf16 %v46
  %v111 = vunpack.c.l.bf16 %v47
  %v112 = vunpack.c.l.bf16 %v48
  %v113 = vunpack.c.l.bf16 %v49
  %v114 = vunpack.c.l.bf16 %v50
  %v115 = vunpack.c.l.bf16 %v51
  %v116 = vunpack.c.l.bf16 %v52
  %v117 = vunpack.c.l.bf16 %v53
  %v118 = vunpack.c.l.bf16 %v54
  %v119 = vunpack.c.l.bf16 %v55
  %v120 = vunpack.c.l.bf16 %v56
  %v121 = vunpack.c.l.bf16 %v57
  %v122 = vunpack.c.l.bf16 %v58
  %v123 = vunpack.c.l.bf16 %v59
  %v124 = vunpack.c.l.bf16 %v60
  %v125 = vunpack.c.l.bf16 %v61
  %v126 = vunpack.c.l.bf16 %v62
  %v127 = vunpack.c.l.bf16 %v63
  %v128 = vunpack.c.l.bf16 %v64
  %v129 = vunpack.c.l.bf16 %v65
  %v130 = vunpack.c.l.bf16 %v66
  %v131 = vunpack.c.l.bf16 %v67
  %v132 = vunpack.c.l.bf16 %v68
  %v133 = vunpack.c.l.bf16 %v69
  %v134 = vunpack.c.l.bf16 %v70
  %v135 = vunpack.c.l.bf16 %v71
  %v136 = vunpack.c.l.bf16 %v72
  %v137 = vunpack.c.l.bf16 %v73
  %v138 = vunpack.c.l.bf16 %v74
  %v139 = vunpack.c.l.bf16 %v75
  %v140 = vunpack.c.l.bf16 %v76
  %v141 = vunpack.c.l.bf16 %v77
  %v142 = vld [vmem:[%s1] sm:$0x1]
  %v144 = vlaneseq
  %v145 = vshrl.u32 %v144, 7
  %v146 = vsub.s32 0, %v145
  %v147 = vrot.slane %v142, %v146
  %v149 = vmul.f32 %v78, %v147
  %v150 = vmul.f32 %v79, %v147
  %v151 = vmul.f32 %v80, %v147
  %v152 = vmul.f32 %v81, %v147
  %v153 = vmul.f32 %v82, %v147
  %v154 = vmul.f32 %v83, %v147
  %v155 = vmul.f32 %v84, %v147
  %v156 = vmul.f32 %v85, %v147
  %v157 = vmul.f32 %v86, %v147
  %v158 = vmul.f32 %v87, %v147
  %v159 = vmul.f32 %v88, %v147
  %v160 = vmul.f32 %v89, %v147
  %v161 = vmul.f32 %v90, %v147
  %v162 = vmul.f32 %v91, %v147
  %v163 = vmul.f32 %v92, %v147
  %v164 = vmul.f32 %v93, %v147
  %v165 = vmul.f32 %v94, %v147
  %v166 = vmul.f32 %v95, %v147
  %v167 = vmul.f32 %v96, %v147
  %v168 = vmul.f32 %v97, %v147
  %v169 = vmul.f32 %v98, %v147
  %v170 = vmul.f32 %v99, %v147
  %v171 = vmul.f32 %v100, %v147
  %v172 = vmul.f32 %v101, %v147
  %v173 = vmul.f32 %v102, %v147
  %v174 = vmul.f32 %v103, %v147
  %v175 = vmul.f32 %v104, %v147
  %v176 = vmul.f32 %v105, %v147
  %v177 = vmul.f32 %v106, %v147
  %v178 = vmul.f32 %v107, %v147
  %v179 = vmul.f32 %v108, %v147
  %v180 = vmul.f32 %v109, %v147
  %v181 = vmul.f32 %v110, %v147
  %v182 = vmul.f32 %v111, %v147
  %v183 = vmul.f32 %v112, %v147
  %v184 = vmul.f32 %v113, %v147
  %v185 = vmul.f32 %v114, %v147
  %v186 = vmul.f32 %v115, %v147
  %v187 = vmul.f32 %v116, %v147
  %v188 = vmul.f32 %v117, %v147
  %v189 = vmul.f32 %v118, %v147
  %v190 = vmul.f32 %v119, %v147
  %v191 = vmul.f32 %v120, %v147
  %v192 = vmul.f32 %v121, %v147
  %v193 = vmul.f32 %v122, %v147
  %v194 = vmul.f32 %v123, %v147
  %v195 = vmul.f32 %v124, %v147
  %v196 = vmul.f32 %v125, %v147
  %v197 = vmul.f32 %v126, %v147
  %v198 = vmul.f32 %v127, %v147
  %v199 = vmul.f32 %v128, %v147
  %v200 = vmul.f32 %v129, %v147
  %v201 = vmul.f32 %v130, %v147
  %v202 = vmul.f32 %v131, %v147
  %v203 = vmul.f32 %v132, %v147
  %v204 = vmul.f32 %v133, %v147
  %v205 = vmul.f32 %v134, %v147
  %v206 = vmul.f32 %v135, %v147
  %v207 = vmul.f32 %v136, %v147
  %v208 = vmul.f32 %v137, %v147
  %v209 = vmul.f32 %v138, %v147
  %v210 = vmul.f32 %v139, %v147
  %v211 = vmul.f32 %v140, %v147
  %v212 = vmul.f32 %v141, %v147
  %v213 = vld [vmem:[%s2] sm:$0x1]
  %v215 = vlaneseq
  %v216 = vshrl.u32 %v215, 7
  %v217 = vsub.s32 0, %v216
  %v218 = vrot.slane %v213, %v217
  %v220 = vadd.f32 %v149, %v218
  %v221 = vadd.f32 %v150, %v218
  %v222 = vadd.f32 %v151, %v218
  %v223 = vadd.f32 %v152, %v218
  %v224 = vadd.f32 %v153, %v218
  %v225 = vadd.f32 %v154, %v218
  %v226 = vadd.f32 %v155, %v218
  %v227 = vadd.f32 %v156, %v218
  %v228 = vadd.f32 %v157, %v218
  %v229 = vadd.f32 %v158, %v218
  %v230 = vadd.f32 %v159, %v218
  %v231 = vadd.f32 %v160, %v218
  %v232 = vadd.f32 %v161, %v218
  %v233 = vadd.f32 %v162, %v218
  %v234 = vadd.f32 %v163, %v218
  %v235 = vadd.f32 %v164, %v218
  %v236 = vadd.f32 %v165, %v218
  %v237 = vadd.f32 %v166, %v218
  %v238 = vadd.f32 %v167, %v218
  %v239 = vadd.f32 %v168, %v218
  %v240 = vadd.f32 %v169, %v218
  %v241 = vadd.f32 %v170, %v218
  %v242 = vadd.f32 %v171, %v218
  %v243 = vadd.f32 %v172, %v218
  %v244 = vadd.f32 %v173, %v218
  %v245 = vadd.f32 %v174, %v218
  %v246 = vadd.f32 %v175, %v218
  %v247 = vadd.f32 %v176, %v218
  %v248 = vadd.f32 %v177, %v218
  %v249 = vadd.f32 %v178, %v218
  %v250 = vadd.f32 %v179, %v218
  %v251 = vadd.f32 %v180, %v218
  %v252 = vadd.f32 %v181, %v218
  %v253 = vadd.f32 %v182, %v218
  %v254 = vadd.f32 %v183, %v218
  %v255 = vadd.f32 %v184, %v218
  %v256 = vadd.f32 %v185, %v218
  %v257 = vadd.f32 %v186, %v218
  %v258 = vadd.f32 %v187, %v218
  %v259 = vadd.f32 %v188, %v218
  %v260 = vadd.f32 %v189, %v218
  %v261 = vadd.f32 %v190, %v218
  %v262 = vadd.f32 %v191, %v218
  %v263 = vadd.f32 %v192, %v218
  %v264 = vadd.f32 %v193, %v218
  %v265 = vadd.f32 %v194, %v218
  %v266 = vadd.f32 %v195, %v218
  %v267 = vadd.f32 %v196, %v218
  %v268 = vadd.f32 %v197, %v218
  %v269 = vadd.f32 %v198, %v218
  %v270 = vadd.f32 %v199, %v218
  %v271 = vadd.f32 %v200, %v218
  %v272 = vadd.f32 %v201, %v218
  %v273 = vadd.f32 %v202, %v218
  %v274 = vadd.f32 %v203, %v218
  %v275 = vadd.f32 %v204, %v218
  %v276 = vadd.f32 %v205, %v218
  %v277 = vadd.f32 %v206, %v218
  %v278 = vadd.f32 %v207, %v218
  %v279 = vadd.f32 %v208, %v218
  %v280 = vadd.f32 %v209, %v218
  %v281 = vadd.f32 %v210, %v218
  %v282 = vadd.f32 %v211, %v218
  %v283 = vadd.f32 %v212, %v218
  %v284 = vmax.f32 %v220, 0.0
  %v285 = vmax.f32 %v221, 0.0
  %v286 = vmax.f32 %v222, 0.0
  %v287 = vmax.f32 %v223, 0.0
  %v288 = vmax.f32 %v224, 0.0
  %v289 = vmax.f32 %v225, 0.0
  %v290 = vmax.f32 %v226, 0.0
  %v291 = vmax.f32 %v227, 0.0
  %v292 = vmax.f32 %v228, 0.0
  %v293 = vmax.f32 %v229, 0.0
  %v294 = vmax.f32 %v230, 0.0
  %v295 = vmax.f32 %v231, 0.0
  %v296 = vmax.f32 %v232, 0.0
  %v297 = vmax.f32 %v233, 0.0
  %v298 = vmax.f32 %v234, 0.0
  %v299 = vmax.f32 %v235, 0.0
  %v300 = vmax.f32 %v236, 0.0
  %v301 = vmax.f32 %v237, 0.0
  %v302 = vmax.f32 %v238, 0.0
  %v303 = vmax.f32 %v239, 0.0
  %v304 = vmax.f32 %v240, 0.0
  %v305 = vmax.f32 %v241, 0.0
  %v306 = vmax.f32 %v242, 0.0
  %v307 = vmax.f32 %v243, 0.0
  %v308 = vmax.f32 %v244, 0.0
  %v309 = vmax.f32 %v245, 0.0
  %v310 = vmax.f32 %v246, 0.0
  %v311 = vmax.f32 %v247, 0.0
  %v312 = vmax.f32 %v248, 0.0
  %v313 = vmax.f32 %v249, 0.0
  %v314 = vmax.f32 %v250, 0.0
  %v315 = vmax.f32 %v251, 0.0
  %v316 = vmax.f32 %v252, 0.0
  %v317 = vmax.f32 %v253, 0.0
  %v318 = vmax.f32 %v254, 0.0
  %v319 = vmax.f32 %v255, 0.0
  %v320 = vmax.f32 %v256, 0.0
  %v321 = vmax.f32 %v257, 0.0
  %v322 = vmax.f32 %v258, 0.0
  %v323 = vmax.f32 %v259, 0.0
  %v324 = vmax.f32 %v260, 0.0
  %v325 = vmax.f32 %v261, 0.0
  %v326 = vmax.f32 %v262, 0.0
  %v327 = vmax.f32 %v263, 0.0
  %v328 = vmax.f32 %v264, 0.0
  %v329 = vmax.f32 %v265, 0.0
  %v330 = vmax.f32 %v266, 0.0
  %v331 = vmax.f32 %v267, 0.0
  %v332 = vmax.f32 %v268, 0.0
  %v333 = vmax.f32 %v269, 0.0
  %v334 = vmax.f32 %v270, 0.0
  %v335 = vmax.f32 %v271, 0.0
  %v336 = vmax.f32 %v272, 0.0
  %v337 = vmax.f32 %v273, 0.0
  %v338 = vmax.f32 %v274, 0.0
  %v339 = vmax.f32 %v275, 0.0
  %v340 = vmax.f32 %v276, 0.0
  %v341 = vmax.f32 %v277, 0.0
  %v342 = vmax.f32 %v278, 0.0
  %v343 = vmax.f32 %v279, 0.0
  %v344 = vmax.f32 %v280, 0.0
  %v345 = vmax.f32 %v281, 0.0
  %v346 = vmax.f32 %v282, 0.0
  %v347 = vmax.f32 %v283, 0.0
  %v348 = vpack.c.bf16 %v285, %v284
  %v349 = vpack.c.bf16 %v287, %v286
  %v350 = vpack.c.bf16 %v289, %v288
  %v351 = vpack.c.bf16 %v291, %v290
  %v352 = vpack.c.bf16 %v293, %v292
  %v353 = vpack.c.bf16 %v295, %v294
  %v354 = vpack.c.bf16 %v297, %v296
  %v355 = vpack.c.bf16 %v299, %v298
  %v356 = vpack.c.bf16 %v301, %v300
  %v357 = vpack.c.bf16 %v303, %v302
  %v358 = vpack.c.bf16 %v305, %v304
  %v359 = vpack.c.bf16 %v307, %v306
  %v360 = vpack.c.bf16 %v309, %v308
  %v361 = vpack.c.bf16 %v311, %v310
  %v362 = vpack.c.bf16 %v313, %v312
  %v363 = vpack.c.bf16 %v315, %v314
  %v364 = vpack.c.bf16 %v317, %v316
  %v365 = vpack.c.bf16 %v319, %v318
  %v366 = vpack.c.bf16 %v321, %v320
  %v367 = vpack.c.bf16 %v323, %v322
  %v368 = vpack.c.bf16 %v325, %v324
  %v369 = vpack.c.bf16 %v327, %v326
  %v370 = vpack.c.bf16 %v329, %v328
  %v371 = vpack.c.bf16 %v331, %v330
  %v372 = vpack.c.bf16 %v333, %v332
  %v373 = vpack.c.bf16 %v335, %v334
  %v374 = vpack.c.bf16 %v337, %v336
  %v375 = vpack.c.bf16 %v339, %v338
  %v376 = vpack.c.bf16 %v341, %v340
  %v377 = vpack.c.bf16 %v343, %v342
  %v378 = vpack.c.bf16 %v345, %v344
  %v379 = vpack.c.bf16 %v347, %v346
  %v412 = vunpack.c.l.b16 %v348
  %v413 = vunpack.c.h.b16 %v348
  %v414 = vunpack.c.l.b16 %v349
  %v415 = vunpack.c.h.b16 %v349
  %v416 = vunpack.c.l.b16 %v350
  %v417 = vunpack.c.h.b16 %v350
  %v418 = vunpack.c.l.b16 %v351
  %v419 = vunpack.c.h.b16 %v351
  %v420 = vunpack.c.l.b16 %v352
  %v421 = vunpack.c.h.b16 %v352
  %v422 = vunpack.c.l.b16 %v353
  %v423 = vunpack.c.h.b16 %v353
  %v424 = vunpack.c.l.b16 %v354
  %v425 = vunpack.c.h.b16 %v354
  %v426 = vunpack.c.l.b16 %v355
  %v427 = vunpack.c.h.b16 %v355
  %v428 = vunpack.c.l.b16 %v356
  %v429 = vunpack.c.h.b16 %v356
  %v430 = vunpack.c.l.b16 %v357
  %v431 = vunpack.c.h.b16 %v357
  %v432 = vunpack.c.l.b16 %v358
  %v433 = vunpack.c.h.b16 %v358
  %v434 = vunpack.c.l.b16 %v359
  %v435 = vunpack.c.h.b16 %v359
  %v436 = vunpack.c.l.b16 %v360
  %v437 = vunpack.c.h.b16 %v360
  %v438 = vunpack.c.l.b16 %v361
  %v439 = vunpack.c.h.b16 %v361
  %v440 = vunpack.c.l.b16 %v362
  %v441 = vunpack.c.h.b16 %v362
  %v442 = vunpack.c.l.b16 %v363
  %v443 = vunpack.c.h.b16 %v363
  %v444 = vunpack.c.l.b16 %v364
  %v445 = vunpack.c.h.b16 %v364
  %v446 = vunpack.c.l.b16 %v365
  %v447 = vunpack.c.h.b16 %v365
  %v448 = vunpack.c.l.b16 %v366
  %v449 = vunpack.c.h.b16 %v366
  %v450 = vunpack.c.l.b16 %v367
  %v451 = vunpack.c.h.b16 %v367
  %v452 = vunpack.c.l.b16 %v368
  %v453 = vunpack.c.h.b16 %v368
  %v454 = vunpack.c.l.b16 %v369
  %v455 = vunpack.c.h.b16 %v369
  %v456 = vunpack.c.l.b16 %v370
  %v457 = vunpack.c.h.b16 %v370
  %v458 = vunpack.c.l.b16 %v371
  %v459 = vunpack.c.h.b16 %v371
  %v460 = vunpack.c.l.b16 %v372
  %v461 = vunpack.c.h.b16 %v372
  %v462 = vunpack.c.l.b16 %v373
  %v463 = vunpack.c.h.b16 %v373
  %v464 = vunpack.c.l.b16 %v374
  %v465 = vunpack.c.h.b16 %v374
  %v466 = vunpack.c.l.b16 %v375
  %v467 = vunpack.c.h.b16 %v375
  %v468 = vunpack.c.l.b16 %v376
  %v469 = vunpack.c.h.b16 %v376
  %v470 = vunpack.c.l.b16 %v377
  %v471 = vunpack.c.h.b16 %v377
  %v472 = vunpack.c.l.b16 %v378
  %v473 = vunpack.c.h.b16 %v378
  %v474 = vunpack.c.l.b16 %v379
  %v475 = vunpack.c.h.b16 %v379
  %v476 = vpack.c.b16 %v412, %v412
  %v477 = vpack.c.b16 %v413, %v413
  %v478 = vpack.c.b16 %v414, %v414
  %v479 = vpack.c.b16 %v415, %v415
  %v480 = vpack.c.b16 %v416, %v416
  %v481 = vpack.c.b16 %v417, %v417
  %v482 = vpack.c.b16 %v418, %v418
  %v483 = vpack.c.b16 %v419, %v419
  %v484 = vpack.c.b16 %v420, %v420
  %v485 = vpack.c.b16 %v421, %v421
  %v486 = vpack.c.b16 %v422, %v422
  %v487 = vpack.c.b16 %v423, %v423
  %v488 = vpack.c.b16 %v424, %v424
  %v489 = vpack.c.b16 %v425, %v425
  %v490 = vpack.c.b16 %v426, %v426
  %v491 = vpack.c.b16 %v427, %v427
  %v492 = vpack.c.b16 %v428, %v428
  %v493 = vpack.c.b16 %v429, %v429
  %v494 = vpack.c.b16 %v430, %v430
  %v495 = vpack.c.b16 %v431, %v431
  %v496 = vpack.c.b16 %v432, %v432
  %v497 = vpack.c.b16 %v433, %v433
  %v498 = vpack.c.b16 %v434, %v434
  %v499 = vpack.c.b16 %v435, %v435
  %v500 = vpack.c.b16 %v436, %v436
  %v501 = vpack.c.b16 %v437, %v437
  %v502 = vpack.c.b16 %v438, %v438
  %v503 = vpack.c.b16 %v439, %v439
  %v504 = vpack.c.b16 %v440, %v440
  %v505 = vpack.c.b16 %v441, %v441
  %v506 = vpack.c.b16 %v442, %v442
  %v507 = vpack.c.b16 %v443, %v443
  %v508 = vpack.c.b16 %v444, %v444
  %v509 = vpack.c.b16 %v445, %v445
  %v510 = vpack.c.b16 %v446, %v446
  %v511 = vpack.c.b16 %v447, %v447
  %v512 = vpack.c.b16 %v448, %v448
  %v513 = vpack.c.b16 %v449, %v449
  %v514 = vpack.c.b16 %v450, %v450
  %v515 = vpack.c.b16 %v451, %v451
  %v516 = vpack.c.b16 %v452, %v452
  %v517 = vpack.c.b16 %v453, %v453
  %v518 = vpack.c.b16 %v454, %v454
  %v519 = vpack.c.b16 %v455, %v455
  %v520 = vpack.c.b16 %v456, %v456
  %v521 = vpack.c.b16 %v457, %v457
  %v522 = vpack.c.b16 %v458, %v458
  %v523 = vpack.c.b16 %v459, %v459
  %v524 = vpack.c.b16 %v460, %v460
  %v525 = vpack.c.b16 %v461, %v461
  %v526 = vpack.c.b16 %v462, %v462
  %v527 = vpack.c.b16 %v463, %v463
  %v528 = vpack.c.b16 %v464, %v464
  %v529 = vpack.c.b16 %v465, %v465
  %v530 = vpack.c.b16 %v466, %v466
  %v531 = vpack.c.b16 %v467, %v467
  %v532 = vpack.c.b16 %v468, %v468
  %v533 = vpack.c.b16 %v469, %v469
  %v534 = vpack.c.b16 %v470, %v470
  %v535 = vpack.c.b16 %v471, %v471
  %v536 = vpack.c.b16 %v472, %v472
  %v537 = vpack.c.b16 %v473, %v473
  %v538 = vpack.c.b16 %v474, %v474
  %v539 = vpack.c.b16 %v475, %v475
  %vm604 = vcmask 257024
  %605 = vst.msk [vmem:[%s3] sm:$0xf] %vm604, %v476
  %606 = vst.msk [vmem:[%s3 + $0x4] sm:$0xf] %vm604, %v477
  %607 = vst.msk [vmem:[%s3 + $0x8] sm:$0xf] %vm604, %v478
  %608 = vst.msk [vmem:[%s3 + $0xc] sm:$0xf] %vm604, %v479
  %609 = vst.msk [vmem:[%s3 + $0x10] sm:$0xf] %vm604, %v480
  %610 = vst.msk [vmem:[%s3 + $0x14] sm:$0xf] %vm604, %v481
  %611 = vst.msk [vmem:[%s3 + $0x18] sm:$0xf] %vm604, %v482
  %612 = vst.msk [vmem:[%s3 + $0x1c] sm:$0xf] %vm604, %v483
  %613 = vst.msk [vmem:[%s3 + $0x20] sm:$0xf] %vm604, %v484
  %614 = vst.msk [vmem:[%s3 + $0x24] sm:$0xf] %vm604, %v485
  %615 = vst.msk [vmem:[%s3 + $0x28] sm:$0xf] %vm604, %v486
  %616 = vst.msk [vmem:[%s3 + $0x2c] sm:$0xf] %vm604, %v487
  %617 = vst.msk [vmem:[%s3 + $0x30] sm:$0xf] %vm604, %v488
  %618 = vst.msk [vmem:[%s3 + $0x34] sm:$0xf] %vm604, %v489
  %619 = vst.msk [vmem:[%s3 + $0x38] sm:$0xf] %vm604, %v490
  %620 = vst.msk [vmem:[%s3 + $0x3c] sm:$0xf] %vm604, %v491
  %621 = vst.msk [vmem:[%s3 + $0x40] sm:$0xf] %vm604, %v492
  %622 = vst.msk [vmem:[%s3 + $0x44] sm:$0xf] %vm604, %v493
  %623 = vst.msk [vmem:[%s3 + $0x48] sm:$0xf] %vm604, %v494
  %624 = vst.msk [vmem:[%s3 + $0x4c] sm:$0xf] %vm604, %v495
  %625 = vst.msk [vmem:[%s3 + $0x50] sm:$0xf] %vm604, %v496
  %626 = vst.msk [vmem:[%s3 + $0x54] sm:$0xf] %vm604, %v497
  %627 = vst.msk [vmem:[%s3 + $0x58] sm:$0xf] %vm604, %v498
  %628 = vst.msk [vmem:[%s3 + $0x5c] sm:$0xf] %vm604, %v499
  %629 = vst.msk [vmem:[%s3 + $0x60] sm:$0xf] %vm604, %v500
  %630 = vst.msk [vmem:[%s3 + $0x64] sm:$0xf] %vm604, %v501
  %631 = vst.msk [vmem:[%s3 + $0x68] sm:$0xf] %vm604, %v502
  %632 = vst.msk [vmem:[%s3 + $0x6c] sm:$0xf] %vm604, %v503
  %633 = vst.msk [vmem:[%s3 + $0x70] sm:$0xf] %vm604, %v504
  %634 = vst.msk [vmem:[%s3 + $0x74] sm:$0xf] %vm604, %v505
  %635 = vst.msk [vmem:[%s3 + $0x78] sm:$0xf] %vm604, %v506
  %636 = vst.msk [vmem:[%s3 + $0x7c] sm:$0xf] %vm604, %v507
  %637 = vst.msk [vmem:[%s3 + $0x80] sm:$0xf] %vm604, %v508
  %638 = vst.msk [vmem:[%s3 + $0x84] sm:$0xf] %vm604, %v509
  %639 = vst.msk [vmem:[%s3 + $0x88] sm:$0xf] %vm604, %v510
  %640 = vst.msk [vmem:[%s3 + $0x8c] sm:$0xf] %vm604, %v511
  %641 = vst.msk [vmem:[%s3 + $0x90] sm:$0xf] %vm604, %v512
  %642 = vst.msk [vmem:[%s3 + $0x94] sm:$0xf] %vm604, %v513
  %643 = vst.msk [vmem:[%s3 + $0x98] sm:$0xf] %vm604, %v514
  %644 = vst.msk [vmem:[%s3 + $0x9c] sm:$0xf] %vm604, %v515
  %645 = vst.msk [vmem:[%s3 + $0xa0] sm:$0xf] %vm604, %v516
  %646 = vst.msk [vmem:[%s3 + $0xa4] sm:$0xf] %vm604, %v517
  %647 = vst.msk [vmem:[%s3 + $0xa8] sm:$0xf] %vm604, %v518
  %648 = vst.msk [vmem:[%s3 + $0xac] sm:$0xf] %vm604, %v519
  %649 = vst.msk [vmem:[%s3 + $0xb0] sm:$0xf] %vm604, %v520
  %650 = vst.msk [vmem:[%s3 + $0xb4] sm:$0xf] %vm604, %v521
  %651 = vst.msk [vmem:[%s3 + $0xb8] sm:$0xf] %vm604, %v522
  %652 = vst.msk [vmem:[%s3 + $0xbc] sm:$0xf] %vm604, %v523
  %653 = vst.msk [vmem:[%s3 + $0xc0] sm:$0xf] %vm604, %v524
  %654 = vst.msk [vmem:[%s3 + $0xc4] sm:$0xf] %vm604, %v525
  %655 = vst.msk [vmem:[%s3 + $0xc8] sm:$0xf] %vm604, %v526
  %656 = vst.msk [vmem:[%s3 + $0xcc] sm:$0xf] %vm604, %v527
  %657 = vst.msk [vmem:[%s3 + $0xd0] sm:$0xf] %vm604, %v528
  %658 = vst.msk [vmem:[%s3 + $0xd4] sm:$0xf] %vm604, %v529
  %659 = vst.msk [vmem:[%s3 + $0xd8] sm:$0xf] %vm604, %v530
  %660 = vst.msk [vmem:[%s3 + $0xdc] sm:$0xf] %vm604, %v531
  %661 = vst.msk [vmem:[%s3 + $0xe0] sm:$0xf] %vm604, %v532
  %662 = vst.msk [vmem:[%s3 + $0xe4] sm:$0xf] %vm604, %v533
  %663 = vst.msk [vmem:[%s3 + $0xe8] sm:$0xf] %vm604, %v534
  %664 = vst.msk [vmem:[%s3 + $0xec] sm:$0xf] %vm604, %v535
  %665 = vst.msk [vmem:[%s3 + $0xf0] sm:$0xf] %vm604, %v536
  %666 = vst.msk [vmem:[%s3 + $0xf4] sm:$0xf] %vm604, %v537
  %667 = vst.msk [vmem:[%s3 + $0xf8] sm:$0xf] %vm604, %v538
  %668 = vst.msk [vmem:[%s3 + $0xfc] sm:$0xf] %vm604, %v539
  // Predicated region
  $region14: #{convolution_block_forward.5} parent=0 // pred_check
    _
  $region15: #{convolution_block_forward.5} parent=0 // pred_check_branch
    %670 = sbr.rel (0) target = $region17
  $region16: #{convolution_block_forward.5} parent=0 // pred_region
    _
  $region17: #{convolution_block_forward.5} parent=0 // pred_fallthru
    _
  // Predicated region
  $region18: #{convolution_block_forward.5} parent=0 // pred_check
    _
  $region19: #{convolution_block_forward.5} parent=0 // pred_check_branch
    %672 = sbr.rel (0) target = $region21
  $region20: #{convolution_block_forward.5} parent=0 // pred_region
    _
  $region21: #{convolution_block_forward.5} parent=0 // pred_fallthru
    _

// kernel: convolution_block_forward.7
$region0: #{convolution_block_forward.7}
  #allocation0 [shape = 'u32[]', space=smem, size = 0x4, offset = 0x4, fixed_abs, tag = 'smem constant byte address 0x4 - core index']
  #allocation1 [shape = 'u32[144,128]{1,0:T(1,128)}', space=vmem, size = 0x12000, scoped, tag = 'internal scratch']
  %s0 = inlined_call_operand.vmem [shape: bf16[512,32], index: 0, kind: input, shape index: {}]
  %s1 = inlined_call_operand.vmem [shape: f32[1,32], index: 1, kind: input, shape index: {}]
  %s2 = inlined_call_operand.vmem [shape: f32[1,32], index: 2, kind: input, shape index: {}]
  %s3 = inlined_call_operand.hbm [shape: f32[512,32], index: 3, kind: output, shape index: {}]
  %s4 = sld [smem:[#allocation0]]
  $region22: #{convolution_block_forward.7} parent=0
    _
  %s6 = ssub.s32 1, %s4
  %s7 = scalar_select 0, %s6, %s4
  $region1: #{convolution_block_forward.7} parent=0
    #allocation2 [shape = 'u8[262144]{0}', space=vmem, size = 0x40000, scoped, tag = 'output window, operand 0, single buffered']
    #allocation3 [shape = 's32[1]{0}', space=sflag, size = 0x4, scoped, tag = 'scoped memory for convolution_block_forward.7']
    %8 = vsyncpa [#allocation3], 0
    // Predicated region
    $region2: #{convolution_block_forward.7} parent=1 // pred_check
      _
    $region3: #{convolution_block_forward.7} parent=1 // pred_check_branch
      %10 = sbr.rel (0) target = $region5
    $region4: #{convolution_block_forward.7} parent=1 // pred_region
      _
    $region5: #{convolution_block_forward.7} parent=1 // pred_fallthru
      _
    // Predicated region
    $region6: #{convolution_block_forward.7} parent=1 // pred_check
      _
    $region7: #{convolution_block_forward.7} parent=1 // pred_check_branch
      %12 = sbr.rel (0) target = $region9
    $region8: #{convolution_block_forward.7} parent=1 // pred_region
      _
    $region9: #{convolution_block_forward.7} parent=1 // pred_fallthru
      _
    // Predicated region
    $region10: #{convolution_block_forward.7} parent=1 // pred_check
      _
    $region11: #{convolution_block_forward.7} parent=1 // pred_check_branch
      %14 = sbr.rel (0) target = $region13
    $region12: #{convolution_block_forward.7} parent=1 // pred_region
      _
    $region13: #{convolution_block_forward.7} parent=1 // pred_fallthru
      _
    %v15 = vld [vmem:[%s0] sm:$0xf]
    %v16 = vld [vmem:[%s0 + $0x4] sm:$0xf]
    %v17 = vld [vmem:[%s0 + $0x8] sm:$0xf]
    %v18 = vld [vmem:[%s0 + $0xc] sm:$0xf]
    %v19 = vld [vmem:[%s0 + $0x10] sm:$0xf]
    %v20 = vld [vmem:[%s0 + $0x14] sm:$0xf]
    %v21 = vld [vmem:[%s0 + $0x18] sm:$0xf]
    %v22 = vld [vmem:[%s0 + $0x1c] sm:$0xf]
    %v23 = vld [vmem:[%s0 + $0x20] sm:$0xf]
    %v24 = vld [vmem:[%s0 + $0x24] sm:$0xf]
    %v25 = vld [vmem:[%s0 + $0x28] sm:$0xf]
    %v26 = vld [vmem:[%s0 + $0x2c] sm:$0xf]
    %v27 = vld [vmem:[%s0 + $0x30] sm:$0xf]
    %v28 = vld [vmem:[%s0 + $0x34] sm:$0xf]
    %v29 = vld [vmem:[%s0 + $0x38] sm:$0xf]
    %v30 = vld [vmem:[%s0 + $0x3c] sm:$0xf]
    %v31 = vld [vmem:[%s0 + $0x40] sm:$0xf]
    %v32 = vld [vmem:[%s0 + $0x44] sm:$0xf]
    %v33 = vld [vmem:[%s0 + $0x48] sm:$0xf]
    %v34 = vld [vmem:[%s0 + $0x4c] sm:$0xf]
    %v35 = vld [vmem:[%s0 + $0x50] sm:$0xf]
    %v36 = vld [vmem:[%s0 + $0x54] sm:$0xf]
    %v37 = vld [vmem:[%s0 + $0x58] sm:$0xf]
    %v38 = vld [vmem:[%s0 + $0x5c] sm:$0xf]
    %v39 = vld [vmem:[%s0 + $0x60] sm:$0xf]
    %v40 = vld [vmem:[%s0 + $0x64] sm:$0xf]
    %v41 = vld [vmem:[%s0 + $0x68] sm:$0xf]
    %v42 = vld [vmem:[%s0 + $0x6c] sm:$0xf]
    %v43 = vld [vmem:[%s0 + $0x70] sm:$0xf]
    %v44 = vld [vmem:[%s0 + $0x74] sm:$0xf]
    %v45 = vld [vmem:[%s0 + $0x78] sm:$0xf]
    %v46 = vld [vmem:[%s0 + $0x7c] sm:$0xf]
    %v47 = vld [vmem:[%s0 + $0x80] sm:$0xf]
    %v48 = vld [vmem:[%s0 + $0x84] sm:$0xf]
    %v49 = vld [vmem:[%s0 + $0x88] sm:$0xf]
    %v50 = vld [vmem:[%s0 + $0x8c] sm:$0xf]
    %v51 = vld [vmem:[%s0 + $0x90] sm:$0xf]
    %v52 = vld [vmem:[%s0 + $0x94] sm:$0xf]
    %v53 = vld [vmem:[%s0 + $0x98] sm:$0xf]
    %v54 = vld [vmem:[%s0 + $0x9c] sm:$0xf]
    %v55 = vld [vmem:[%s0 + $0xa0] sm:$0xf]
    %v56 = vld [vmem:[%s0 + $0xa4] sm:$0xf]
    %v57 = vld [vmem:[%s0 + $0xa8] sm:$0xf]
    %v58 = vld [vmem:[%s0 + $0xac] sm:$0xf]
    %v59 = vld [vmem:[%s0 + $0xb0] sm:$0xf]
    %v60 = vld [vmem:[%s0 + $0xb4] sm:$0xf]
    %v61 = vld [vmem:[%s0 + $0xb8] sm:$0xf]
    %v62 = vld [vmem:[%s0 + $0xbc] sm:$0xf]
    %v63 = vld [vmem:[%s0 + $0xc0] sm:$0xf]
    %v64 = vld [vmem:[%s0 + $0xc4] sm:$0xf]
    %v65 = vld [vmem:[%s0 + $0xc8] sm:$0xf]
    %v66 = vld [vmem:[%s0 + $0xcc] sm:$0xf]
    %v67 = vld [vmem:[%s0 + $0xd0] sm:$0xf]
    %v68 = vld [vmem:[%s0 + $0xd4] sm:$0xf]
    %v69 = vld [vmem:[%s0 + $0xd8] sm:$0xf]
    %v70 = vld [vmem:[%s0 + $0xdc] sm:$0xf]
    %v71 = vld [vmem:[%s0 + $0xe0] sm:$0xf]
    %v72 = vld [vmem:[%s0 + $0xe4] sm:$0xf]
    %v73 = vld [vmem:[%s0 + $0xe8] sm:$0xf]
    %v74 = vld [vmem:[%s0 + $0xec] sm:$0xf]
    %v75 = vld [vmem:[%s0 + $0xf0] sm:$0xf]
    %v76 = vld [vmem:[%s0 + $0xf4] sm:$0xf]
    %v77 = vld [vmem:[%s0 + $0xf8] sm:$0xf]
    %v78 = vld [vmem:[%s0 + $0xfc] sm:$0xf]
    %v79 = vunpack.c.l.bf16 %v15
    %v80 = vunpack.c.l.bf16 %v16
    %v81 = vunpack.c.l.bf16 %v17
    %v82 = vunpack.c.l.bf16 %v18
    %v83 = vunpack.c.l.bf16 %v19
    %v84 = vunpack.c.l.bf16 %v20
    %v85 = vunpack.c.l.bf16 %v21
    %v86 = vunpack.c.l.bf16 %v22
    %v87 = vunpack.c.l.bf16 %v23
    %v88 = vunpack.c.l.bf16 %v24
    %v89 = vunpack.c.l.bf16 %v25
    %v90 = vunpack.c.l.bf16 %v26
    %v91 = vunpack.c.l.bf16 %v27
    %v92 = vunpack.c.l.bf16 %v28
    %v93 = vunpack.c.l.bf16 %v29
    %v94 = vunpack.c.l.bf16 %v30
    %v95 = vunpack.c.l.bf16 %v31
    %v96 = vunpack.c.l.bf16 %v32
    %v97 = vunpack.c.l.bf16 %v33
    %v98 = vunpack.c.l.bf16 %v34
    %v99 = vunpack.c.l.bf16 %v35
    %v100 = vunpack.c.l.bf16 %v36
    %v101 = vunpack.c.l.bf16 %v37
    %v102 = vunpack.c.l.bf16 %v38
    %v103 = vunpack.c.l.bf16 %v39
    %v104 = vunpack.c.l.bf16 %v40
    %v105 = vunpack.c.l.bf16 %v41
    %v106 = vunpack.c.l.bf16 %v42
    %v107 = vunpack.c.l.bf16 %v43
    %v108 = vunpack.c.l.bf16 %v44
    %v109 = vunpack.c.l.bf16 %v45
    %v110 = vunpack.c.l.bf16 %v46
    %v111 = vunpack.c.l.bf16 %v47
    %v112 = vunpack.c.l.bf16 %v48
    %v113 = vunpack.c.l.bf16 %v49
    %v114 = vunpack.c.l.bf16 %v50
    %v115 = vunpack.c.l.bf16 %v51
    %v116 = vunpack.c.l.bf16 %v52
    %v117 = vunpack.c.l.bf16 %v53
    %v118 = vunpack.c.l.bf16 %v54
    %v119 = vunpack.c.l.bf16 %v55
    %v120 = vunpack.c.l.bf16 %v56
    %v121 = vunpack.c.l.bf16 %v57
    %v122 = vunpack.c.l.bf16 %v58
    %v123 = vunpack.c.l.bf16 %v59
    %v124 = vunpack.c.l.bf16 %v60
    %v125 = vunpack.c.l.bf16 %v61
    %v126 = vunpack.c.l.bf16 %v62
    %v127 = vunpack.c.l.bf16 %v63
    %v128 = vunpack.c.l.bf16 %v64
    %v129 = vunpack.c.l.bf16 %v65
    %v130 = vunpack.c.l.bf16 %v66
    %v131 = vunpack.c.l.bf16 %v67
    %v132 = vunpack.c.l.bf16 %v68
    %v133 = vunpack.c.l.bf16 %v69
    %v134 = vunpack.c.l.bf16 %v70
    %v135 = vunpack.c.l.bf16 %v71
    %v136 = vunpack.c.l.bf16 %v72
    %v137 = vunpack.c.l.bf16 %v73
    %v138 = vunpack.c.l.bf16 %v74
    %v139 = vunpack.c.l.bf16 %v75
    %v140 = vunpack.c.l.bf16 %v76
    %v141 = vunpack.c.l.bf16 %v77
    %v142 = vunpack.c.l.bf16 %v78
    %v143 = vld [vmem:[%s1] sm:$0x1]
    %v145 = vlaneseq
    %v146 = vshrl.u32 %v145, 7
    %v147 = vsub.s32 0, %v146
    %v148 = vrot.slane %v143, %v147
    %v150 = vmul.f32 %v79, %v148
    %v151 = vmul.f32 %v80, %v148
    %v152 = vmul.f32 %v81, %v148
    %v153 = vmul.f32 %v82, %v148
    %v154 = vmul.f32 %v83, %v148
    %v155 = vmul.f32 %v84, %v148
    %v156 = vmul.f32 %v85, %v148
    %v157 = vmul.f32 %v86, %v148
    %v158 = vmul.f32 %v87, %v148
    %v159 = vmul.f32 %v88, %v148
    %v160 = vmul.f32 %v89, %v148
    %v161 = vmul.f32 %v90, %v148
    %v162 = vmul.f32 %v91, %v148
    %v163 = vmul.f32 %v92, %v148
    %v164 = vmul.f32 %v93, %v148
    %v165 = vmul.f32 %v94, %v148
    %v166 = vmul.f32 %v95, %v148
    %v167 = vmul.f32 %v96, %v148
    %v168 = vmul.f32 %v97, %v148
    %v169 = vmul.f32 %v98, %v148
    %v170 = vmul.f32 %v99, %v148
    %v171 = vmul.f32 %v100, %v148
    %v172 = vmul.f32 %v101, %v148
    %v173 = vmul.f32 %v102, %v148
    %v174 = vmul.f32 %v103, %v148
    %v175 = vmul.f32 %v104, %v148
    %v176 = vmul.f32 %v105, %v148
    %v177 = vmul.f32 %v106, %v148
    %v178 = vmul.f32 %v107, %v148
    %v179 = vmul.f32 %v108, %v148
    %v180 = vmul.f32 %v109, %v148
    %v181 = vmul.f32 %v110, %v148
    %v182 = vmul.f32 %v111, %v148
    %v183 = vmul.f32 %v112, %v148
    %v184 = vmul.f32 %v113, %v148
    %v185 = vmul.f32 %v114, %v148
    %v186 = vmul.f32 %v115, %v148
    %v187 = vmul.f32 %v116, %v148
    %v188 = vmul.f32 %v117, %v148
    %v189 = vmul.f32 %v118, %v148
    %v190 = vmul.f32 %v119, %v148
    %v191 = vmul.f32 %v120, %v148
    %v192 = vmul.f32 %v121, %v148
    %v193 = vmul.f32 %v122, %v148
    %v194 = vmul.f32 %v123, %v148
    %v195 = vmul.f32 %v124, %v148
    %v196 = vmul.f32 %v125, %v148
    %v197 = vmul.f32 %v126, %v148
    %v198 = vmul.f32 %v127, %v148
    %v199 = vmul.f32 %v128, %v148
    %v200 = vmul.f32 %v129, %v148
    %v201 = vmul.f32 %v130, %v148
    %v202 = vmul.f32 %v131, %v148
    %v203 = vmul.f32 %v132, %v148
    %v204 = vmul.f32 %v133, %v148
    %v205 = vmul.f32 %v134, %v148
    %v206 = vmul.f32 %v135, %v148
    %v207 = vmul.f32 %v136, %v148
    %v208 = vmul.f32 %v137, %v148
    %v209 = vmul.f32 %v138, %v148
    %v210 = vmul.f32 %v139, %v148
    %v211 = vmul.f32 %v140, %v148
    %v212 = vmul.f32 %v141, %v148
    %v213 = vmul.f32 %v142, %v148
    %v214 = vld [vmem:[%s2] sm:$0x1]
    %v216 = vlaneseq
    %v217 = vshrl.u32 %v216, 7
    %v218 = vsub.s32 0, %v217
    %v219 = vrot.slane %v214, %v218
    %v221 = vadd.f32 %v150, %v219
    %v222 = vadd.f32 %v151, %v219
    %v223 = vadd.f32 %v152, %v219
    %v224 = vadd.f32 %v153, %v219
    %v225 = vadd.f32 %v154, %v219
    %v226 = vadd.f32 %v155, %v219
    %v227 = vadd.f32 %v156, %v219
    %v228 = vadd.f32 %v157, %v219
    %v229 = vadd.f32 %v158, %v219
    %v230 = vadd.f32 %v159, %v219
    %v231 = vadd.f32 %v160, %v219
    %v232 = vadd.f32 %v161, %v219
    %v233 = vadd.f32 %v162, %v219
    %v234 = vadd.f32 %v163, %v219
    %v235 = vadd.f32 %v164, %v219
    %v236 = vadd.f32 %v165, %v219
    %v237 = vadd.f32 %v166, %v219
    %v238 = vadd.f32 %v167, %v219
    %v239 = vadd.f32 %v168, %v219
    %v240 = vadd.f32 %v169, %v219
    %v241 = vadd.f32 %v170, %v219
    %v242 = vadd.f32 %v171, %v219
    %v243 = vadd.f32 %v172, %v219
    %v244 = vadd.f32 %v173, %v219
    %v245 = vadd.f32 %v174, %v219
    %v246 = vadd.f32 %v175, %v219
    %v247 = vadd.f32 %v176, %v219
    %v248 = vadd.f32 %v177, %v219
    %v249 = vadd.f32 %v178, %v219
    %v250 = vadd.f32 %v179, %v219
    %v251 = vadd.f32 %v180, %v219
    %v252 = vadd.f32 %v181, %v219
    %v253 = vadd.f32 %v182, %v219
    %v254 = vadd.f32 %v183, %v219
    %v255 = vadd.f32 %v184, %v219
    %v256 = vadd.f32 %v185, %v219
    %v257 = vadd.f32 %v186, %v219
    %v258 = vadd.f32 %v187, %v219
    %v259 = vadd.f32 %v188, %v219
    %v260 = vadd.f32 %v189, %v219
    %v261 = vadd.f32 %v190, %v219
    %v262 = vadd.f32 %v191, %v219
    %v263 = vadd.f32 %v192, %v219
    %v264 = vadd.f32 %v193, %v219
    %v265 = vadd.f32 %v194, %v219
    %v266 = vadd.f32 %v195, %v219
    %v267 = vadd.f32 %v196, %v219
    %v268 = vadd.f32 %v197, %v219
    %v269 = vadd.f32 %v198, %v219
    %v270 = vadd.f32 %v199, %v219
    %v271 = vadd.f32 %v200, %v219
    %v272 = vadd.f32 %v201, %v219
    %v273 = vadd.f32 %v202, %v219
    %v274 = vadd.f32 %v203, %v219
    %v275 = vadd.f32 %v204, %v219
    %v276 = vadd.f32 %v205, %v219
    %v277 = vadd.f32 %v206, %v219
    %v278 = vadd.f32 %v207, %v219
    %v279 = vadd.f32 %v208, %v219
    %v280 = vadd.f32 %v209, %v219
    %v281 = vadd.f32 %v210, %v219
    %v282 = vadd.f32 %v211, %v219
    %v283 = vadd.f32 %v212, %v219
    %v284 = vadd.f32 %v213, %v219
    %v285 = vmax.f32 %v221, 0.0
    %v286 = vmax.f32 %v222, 0.0
    %v287 = vmax.f32 %v223, 0.0
    %v288 = vmax.f32 %v224, 0.0
    %v289 = vmax.f32 %v225, 0.0
    %v290 = vmax.f32 %v226, 0.0
    %v291 = vmax.f32 %v227, 0.0
    %v292 = vmax.f32 %v228, 0.0
    %v293 = vmax.f32 %v229, 0.0
    %v294 = vmax.f32 %v230, 0.0
    %v295 = vmax.f32 %v231, 0.0
    %v296 = vmax.f32 %v232, 0.0
    %v297 = vmax.f32 %v233, 0.0
    %v298 = vmax.f32 %v234, 0.0
    %v299 = vmax.f32 %v235, 0.0
    %v300 = vmax.f32 %v236, 0.0
    %v301 = vmax.f32 %v237, 0.0
    %v302 = vmax.f32 %v238, 0.0
    %v303 = vmax.f32 %v239, 0.0
    %v304 = vmax.f32 %v240, 0.0
    %v305 = vmax.f32 %v241, 0.0
    %v306 = vmax.f32 %v242, 0.0
    %v307 = vmax.f32 %v243, 0.0
    %v308 = vmax.f32 %v244, 0.0
    %v309 = vmax.f32 %v245, 0.0
    %v310 = vmax.f32 %v246, 0.0
    %v311 = vmax.f32 %v247, 0.0
    %v312 = vmax.f32 %v248, 0.0
    %v313 = vmax.f32 %v249, 0.0
    %v314 = vmax.f32 %v250, 0.0
    %v315 = vmax.f32 %v251, 0.0
    %v316 = vmax.f32 %v252, 0.0
    %v317 = vmax.f32 %v253, 0.0
    %v318 = vmax.f32 %v254, 0.0
    %v319 = vmax.f32 %v255, 0.0
    %v320 = vmax.f32 %v256, 0.0
    %v321 = vmax.f32 %v257, 0.0
    %v322 = vmax.f32 %v258, 0.0
    %v323 = vmax.f32 %v259, 0.0
    %v324 = vmax.f32 %v260, 0.0
    %v325 = vmax.f32 %v261, 0.0
    %v326 = vmax.f32 %v262, 0.0
    %v327 = vmax.f32 %v263, 0.0
    %v328 = vmax.f32 %v264, 0.0
    %v329 = vmax.f32 %v265, 0.0
    %v330 = vmax.f32 %v266, 0.0
    %v331 = vmax.f32 %v267, 0.0
    %v332 = vmax.f32 %v268, 0.0
    %v333 = vmax.f32 %v269, 0.0
    %v334 = vmax.f32 %v270, 0.0
    %v335 = vmax.f32 %v271, 0.0
    %v336 = vmax.f32 %v272, 0.0
    %v337 = vmax.f32 %v273, 0.0
    %v338 = vmax.f32 %v274, 0.0
    %v339 = vmax.f32 %v275, 0.0
    %v340 = vmax.f32 %v276, 0.0
    %v341 = vmax.f32 %v277, 0.0
    %v342 = vmax.f32 %v278, 0.0
    %v343 = vmax.f32 %v279, 0.0
    %v344 = vmax.f32 %v280, 0.0
    %v345 = vmax.f32 %v281, 0.0
    %v346 = vmax.f32 %v282, 0.0
    %v347 = vmax.f32 %v283, 0.0
    %v348 = vmax.f32 %v284, 0.0
    %vm349 = vcmask 261120
    %350 = vst.msk [vmem:[#allocation2] sm:$0xff] %vm349, %v285
    %351 = vst.msk [vmem:[#allocation2 + $0x8] sm:$0xff] %vm349, %v286
    %352 = vst.msk [vmem:[#allocation2 + $0x10] sm:$0xff] %vm349, %v287
    %353 = vst.msk [vmem:[#allocation2 + $0x18] sm:$0xff] %vm349, %v288
    %354 = vst.msk [vmem:[#allocation2 + $0x20] sm:$0xff] %vm349, %v289
    %355 = vst.msk [vmem:[#allocation2 + $0x28] sm:$0xff] %vm349, %v290
    %356 = vst.msk [vmem:[#allocation2 + $0x30] sm:$0xff] %vm349, %v291
    %357 = vst.msk [vmem:[#allocation2 + $0x38] sm:$0xff] %vm349, %v292
    %358 = vst.msk [vmem:[#allocation2 + $0x40] sm:$0xff] %vm349, %v293
    %359 = vst.msk [vmem:[#allocation2 + $0x48] sm:$0xff] %vm349, %v294
    %360 = vst.msk [vmem:[#allocation2 + $0x50] sm:$0xff] %vm349, %v295
    %361 = vst.msk [vmem:[#allocation2 + $0x58] sm:$0xff] %vm349, %v296
    %362 = vst.msk [vmem:[#allocation2 + $0x60] sm:$0xff] %vm349, %v297
    %363 = vst.msk [vmem:[#allocation2 + $0x68] sm:$0xff] %vm349, %v298
    %364 = vst.msk [vmem:[#allocation2 + $0x70] sm:$0xff] %vm349, %v299
    %365 = vst.msk [vmem:[#allocation2 + $0x78] sm:$0xff] %vm349, %v300
    %366 = vst.msk [vmem:[#allocation2 + $0x80] sm:$0xff] %vm349, %v301
    %367 = vst.msk [vmem:[#allocation2 + $0x88] sm:$0xff] %vm349, %v302
    %368 = vst.msk [vmem:[#allocation2 + $0x90] sm:$0xff] %vm349, %v303
    %369 = vst.msk [vmem:[#allocation2 + $0x98] sm:$0xff] %vm349, %v304
    %370 = vst.msk [vmem:[#allocation2 + $0xa0] sm:$0xff] %vm349, %v305
    %371 = vst.msk [vmem:[#allocation2 + $0xa8] sm:$0xff] %vm349, %v306
    %372 = vst.msk [vmem:[#allocation2 + $0xb0] sm:$0xff] %vm349, %v307
    %373 = vst.msk [vmem:[#allocation2 + $0xb8] sm:$0xff] %vm349, %v308
    %374 = vst.msk [vmem:[#allocation2 + $0xc0] sm:$0xff] %vm349, %v309
    %375 = vst.msk [vmem:[#allocation2 + $0xc8] sm:$0xff] %vm349, %v310
    %376 = vst.msk [vmem:[#allocation2 + $0xd0] sm:$0xff] %vm349, %v311
    %377 = vst.msk [vmem:[#allocation2 + $0xd8] sm:$0xff] %vm349, %v312
    %378 = vst.msk [vmem:[#allocation2 + $0xe0] sm:$0xff] %vm349, %v313
    %379 = vst.msk [vmem:[#allocation2 + $0xe8] sm:$0xff] %vm349, %v314
    %380 = vst.msk [vmem:[#allocation2 + $0xf0] sm:$0xff] %vm349, %v315
    %381 = vst.msk [vmem:[#allocation2 + $0xf8] sm:$0xff] %vm349, %v316
    %382 = vst.msk [vmem:[#allocation2 + $0x100] sm:$0xff] %vm349, %v317
    %383 = vst.msk [vmem:[#allocation2 + $0x108] sm:$0xff] %vm349, %v318
    %384 = vst.msk [vmem:[#allocation2 + $0x110] sm:$0xff] %vm349, %v319
    %385 = vst.msk [vmem:[#allocation2 + $0x118] sm:$0xff] %vm349, %v320
    %386 = vst.msk [vmem:[#allocation2 + $0x120] sm:$0xff] %vm349, %v321
    %387 = vst.msk [vmem:[#allocation2 + $0x128] sm:$0xff] %vm349, %v322
    %388 = vst.msk [vmem:[#allocation2 + $0x130] sm:$0xff] %vm349, %v323
    %389 = vst.msk [vmem:[#allocation2 + $0x138] sm:$0xff] %vm349, %v324
    %390 = vst.msk [vmem:[#allocation2 + $0x140] sm:$0xff] %vm349, %v325
    %391 = vst.msk [vmem:[#allocation2 + $0x148] sm:$0xff] %vm349, %v326
    %392 = vst.msk [vmem:[#allocation2 + $0x150] sm:$0xff] %vm349, %v327
    %393 = vst.msk [vmem:[#allocation2 + $0x158] sm:$0xff] %vm349, %v328
    %394 = vst.msk [vmem:[#allocation2 + $0x160] sm:$0xff] %vm349, %v329
    %395 = vst.msk [vmem:[#allocation2 + $0x168] sm:$0xff] %vm349, %v330
    %396 = vst.msk [vmem:[#allocation2 + $0x170] sm:$0xff] %vm349, %v331
    %397 = vst.msk [vmem:[#allocation2 + $0x178] sm:$0xff] %vm349, %v332
    %398 = vst.msk [vmem:[#allocation2 + $0x180] sm:$0xff] %vm349, %v333
    %399 = vst.msk [vmem:[#allocation2 + $0x188] sm:$0xff] %vm349, %v334
    %400 = vst.msk [vmem:[#allocation2 + $0x190] sm:$0xff] %vm349, %v335
    %401 = vst.msk [vmem:[#allocation2 + $0x198] sm:$0xff] %vm349, %v336
    %402 = vst.msk [vmem:[#allocation2 + $0x1a0] sm:$0xff] %vm349, %v337
    %403 = vst.msk [vmem:[#allocation2 + $0x1a8] sm:$0xff] %vm349, %v338
    %404 = vst.msk [vmem:[#allocation2 + $0x1b0] sm:$0xff] %vm349, %v339
    %405 = vst.msk [vmem:[#allocation2 + $0x1b8] sm:$0xff] %vm349, %v340
    %406 = vst.msk [vmem:[#allocation2 + $0x1c0] sm:$0xff] %vm349, %v341
    %407 = vst.msk [vmem:[#allocation2 + $0x1c8] sm:$0xff] %vm349, %v342
    %408 = vst.msk [vmem:[#allocation2 + $0x1d0] sm:$0xff] %vm349, %v343
    %409 = vst.msk [vmem:[#allocation2 + $0x1d8] sm:$0xff] %vm349, %v344
    %410 = vst.msk [vmem:[#allocation2 + $0x1e0] sm:$0xff] %vm349, %v345
    %411 = vst.msk [vmem:[#allocation2 + $0x1e8] sm:$0xff] %vm349, %v346
    %412 = vst.msk [vmem:[#allocation2 + $0x1f0] sm:$0xff] %vm349, %v347
    %413 = vst.msk [vmem:[#allocation2 + $0x1f8] sm:$0xff] %vm349, %v348
    // Predicated region
    $region14: #{convolution_block_forward.7} parent=1 // pred_check
      _
    $region15: #{convolution_block_forward.7} parent=1 // pred_check_branch
      %415 = sbr.rel (0) target = $region17
    $region16: #{convolution_block_forward.7} parent=1 // pred_region
      %s417 = ssub.s32 8192, 8192
      %418 = vsyncadd [#allocation3], %s417
      %s419 = sshll.u32 [#allocation2], 4
      %s420 = int_to_ptr.vmem [resolvable:$true] %s419
      %425 = dma.vmem_to_hbm [thread:$0]  %s420, 8192, %s3, [#allocation3], 128, 128, 8
    $region17: #{convolution_block_forward.7} parent=1 // pred_fallthru
      _
    // Predicated region
    $region18: #{convolution_block_forward.7} parent=1 // pred_check
      _
    $region19: #{convolution_block_forward.7} parent=1 // pred_check_branch
      %427 = sbr.rel (0) target = $region21
    $region20: #{convolution_block_forward.7} parent=1 // pred_region
      %428 = dma.done [#allocation3], 8192
    $region21: #{convolution_block_forward.7} parent=1 // pred_fallthru
      _
    %429 = vsyncpa [#allocation3], 1

// kernel: convolution_block_forward.4
$region0: #{convolution_block_forward.4}
  #allocation0 [shape = 'u32[]', space=smem, size = 0x4, offset = 0x4, fixed_abs, tag = 'smem constant byte address 0x4 - core index']
  #allocation1 [shape = 'u32[144,128]{1,0:T(1,128)}', space=vmem, size = 0x12000, scoped, tag = 'internal scratch']
  #allocation2 [shape = 'bf16[256,36]{1,0:T(16,128)(2,1)}', space=vmem, size = 0x10000, scoped, tag = 'scratch operand']
  %s0 = inlined_call_operand.vmem [shape: bf16[2,18,18,4], index: 0, kind: input, shape index: {}]
  %s1 = inlined_call_operand.vmem [shape: bf16[36,32], index: 1, kind: input, shape index: {}]
  %s2 = inlined_call_operand.vmem [shape: bf16[2,256,32], index: 2, kind: output, shape index: {0}]
  %s3 = inlined_call_operand.vmem [shape: f32[2,2,32], index: 3, kind: output, shape index: {1}]
  %4 = xla_tuple %s2, %s3
  %s5 = sld [smem:[#allocation0]]
  $region49: #{convolution_block_forward.4} parent=0
    _
  %s7 = ssub.s32 1, %s5
  %s8 = scalar_select 0, %s7, %s5
  loop: start=0, step=1, limit=4
  $region2: #{convolution_block_forward.4} parent=0 // loop_pre_header
    _
  $region3: #{convolution_block_forward.4} parent=0 // loop_header
    %s10 = sphi 0, %s14
    %p11 = scmp.ge.s32.totalorder %s10, 4
    %s17 = sphi 0, %s29
    %s18 = sphi 0, %s25
    %s19 = sphi 0, %s17
    %s20 = sphi 0, %s18
    %s21 = sphi 0, %s19
    %s22 = sphi 0, %s20
    %s32 = sphi 0, %s34
    %s35 = sphi 0, %s32
    %s36 = sphi 0, %s35
    %s52 = sphi 0, %s36
    %s58 = sphi 0, %s60
    %s61 = sphi 0, %s58
    %s62 = sphi 0, %s61
    %s78 = sphi 0, %s62
    %s86 = sphi 0, %s88
    %s89 = sphi 0, %s86
    %s90 = sphi 0, %s89
    %s106 = sphi 0, %s90
    %s114 = sphi 0, %s116
    %s117 = sphi 0, %s114
    %s118 = sphi 0, %s117
    %s134 = sphi 0, %s118
  $region4: #{convolution_block_forward.4} parent=0 // loop_header_branch
    %13 = sbr.rel (%p11) target = $region8
  $region5: #{convolution_block_forward.4} parent=0 // loop_body
    %s15 = ssub.s32 %s10, 1
    %s16 = ssub.s32 %s10, 2
    %s23 = sadd.s32 1, %s18
    %p24 = scmp.ge.s32.totalorder %s23, 2
    %s25 = scalar_select %p24, 0, %s23
    %s26 = sadd.s32 1, %s17
    %s27 = scalar_select %p24, %s26, %s17
    %p28 = scmp.ge.s32.totalorder %s27, 1
    %s29 = scalar_select %p28, 0, %s27
    %s30 = ssub.s32 %s18, %s25
    %p31 = scmp.eq.s32.totalorder %s30, 0
    %s33 = sadd.s32 %s32, 1
    %s34 = scalar_select %p31, %s32, %s33
    %p37 = pneg %p31
    %p38 = scmp.eq.s32.totalorder %s10, 1
    %p39 = por %p37, %p38
    %p40 = scmp.ne.s32.totalorder %s32, %s35
    %p41 = scmp.eq.s32.totalorder %s10, 0
    %p42 = por %p40, %p41
    %p43 = scmp.ne.s32.totalorder %s32, %s35
    %p44 = scmp.eq.s32.totalorder %s15, 1
    %p45 = por %p43, %p44
    %p46 = scmp.ne.s32.totalorder %s35, %s36
    %p47 = scmp.eq.s32.totalorder %s15, 0
    %p48 = por %p46, %p47
    %p49 = scmp.ne.s32.totalorder %s35, %s36
    %p50 = scmp.eq.s32.totalorder %s16, 1
    %p51 = por %p49, %p50
    %p53 = scmp.ne.s32.totalorder %s36, %s52
    %p54 = scmp.eq.s32.totalorder %s16, 0
    %p55 = por %p53, %p54
    %s56 = ssub.s32 %s17, %s29
    %p57 = scmp.eq.s32.totalorder %s56, 0
    %s59 = sadd.s32 %s58, 1
    %s60 = scalar_select %p57, %s58, %s59
    %p63 = pneg %p57
    %p64 = scmp.eq.s32.totalorder %s10, 1
    %p65 = por %p63, %p64
    %p66 = scmp.ne.s32.totalorder %s58, %s61
    %p67 = scmp.eq.s32.totalorder %s10, 0
    %p68 = por %p66, %p67
    %p69 = scmp.ne.s32.totalorder %s58, %s61
    %p70 = scmp.eq.s32.totalorder %s15, 1
    %p71 = por %p69, %p70
    %p72 = scmp.ne.s32.totalorder %s61, %s62
    %p73 = scmp.eq.s32.totalorder %s15, 0
    %p74 = por %p72, %p73
    %p75 = scmp.ne.s32.totalorder %s61, %s62
    %p76 = scmp.eq.s32.totalorder %s16, 1
    %p77 = por %p75, %p76
    %p79 = scmp.ne.s32.totalorder %s62, %s78
    %p80 = scmp.eq.s32.totalorder %s16, 0
    %p81 = por %p79, %p80
    %s82 = ssub.s32 %s18, %s25
    %s83 = ssub.s32 %s17, %s29
    %s84 = sor.u32 %s82, %s83
    %p85 = scmp.eq.s32.totalorder %s84, 0
    %s87 = sadd.s32 %s86, 1
    %s88 = scalar_select %p85, %s86, %s87
    %p91 = pneg %p85
    %p92 = scmp.eq.s32.totalorder %s10, 1
    %p93 = por %p91, %p92
    %p94 = scmp.ne.s32.totalorder %s86, %s89
    %p95 = scmp.eq.s32.totalorder %s10, 0
    %p96 = por %p94, %p95
    %p97 = scmp.ne.s32.totalorder %s86, %s89
    %p98 = scmp.eq.s32.totalorder %s15, 1
    %p99 = por %p97, %p98
    %p100 = scmp.ne.s32.totalorder %s89, %s90
    %p101 = scmp.eq.s32.totalorder %s15, 0
    %p102 = por %p100, %p101
    %p103 = scmp.ne.s32.totalorder %s89, %s90
    %p104 = scmp.eq.s32.totalorder %s16, 1
    %p105 = por %p103, %p104
    %p107 = scmp.ne.s32.totalorder %s90, %s106
    %p108 = scmp.eq.s32.totalorder %s16, 0
    %p109 = por %p107, %p108
    %s110 = ssub.s32 %s18, %s25
    %s111 = ssub.s32 %s17, %s29
    %s112 = sor.u32 %s110, %s111
    %p113 = scmp.eq.s32.totalorder %s112, 0
    %s115 = sadd.s32 %s114, 1
    %s116 = scalar_select %p113, %s114, %s115
    %p119 = pneg %p113
    %p120 = scmp.eq.s32.totalorder %s10, 1
    %p121 = por %p119, %p120
    %p122 = scmp.ne.s32.totalorder %s114, %s117
    %p123 = scmp.eq.s32.totalorder %s10, 0
    %p124 = por %p122, %p123
    %p125 = scmp.ne.s32.totalorder %s114, %s117
    %p126 = scmp.eq.s32.totalorder %s15, 1
    %p127 = por %p125, %p126
    %p128 = scmp.ne.s32.totalorder %s117, %s118
    %p129 = scmp.eq.s32.totalorder %s15, 0
    %p130 = por %p128, %p129
    %p131 = scmp.ne.s32.totalorder %s117, %s118
    %p132 = scmp.eq.s32.totalorder %s16, 1
    %p133 = por %p131, %p132
    %p135 = scmp.ne.s32.totalorder %s118, %s134
    %p136 = scmp.eq.s32.totalorder %s16, 0
    %p137 = por %p135, %p136
    %p138 = scmp.le.s32.totalorder 1, %s10
    %p139 = scmp.lt.s32.totalorder %s10, 3
    %p140 = pnand %p138, %p139
    %p141 = pneg %p140
    // Predicated region
    $region9: #{convolution_block_forward.4} parent=5 // pred_check
      _
    $region10: #{convolution_block_forward.4} parent=5 // pred_check_branch
      %143 = sbr.rel (%p140) target = $region12
    $region11: #{convolution_block_forward.4} parent=5 // pred_region
      %s144 = ssub.s32 %s10, 1
      // Predicated region
      $region13: #{convolution_block_forward.4} parent=11 // pred_check
        %p145 = pneg %p74
      $region14: #{convolution_block_forward.4} parent=11 // pred_check_branch
        %147 = sbr.rel (%p145) target = $region16
      $region15: #{convolution_block_forward.4} parent=11 // pred_region
        %p148 = scmp.lt.s32.totalorder %s19, 0
        %s149 = scalar_select %p148, %s19, 0
        %s150 = smul.addr %s149, 4
        %s151 = scalar_lea.vmem %s1, %s150
      $region16: #{convolution_block_forward.4} parent=11 // pred_fallthru
        _
    $region12: #{convolution_block_forward.4} parent=5 // pred_fallthru
      _
    %p152 = scmp.lt.s32.totalorder %s10, 2
    // Predicated region
    $region17: #{convolution_block_forward.4} parent=5 // pred_check
      %p153 = pneg %p152
    $region18: #{convolution_block_forward.4} parent=5 // pred_check_branch
      %155 = sbr.rel (%p153) target = $region20
    $region19: #{convolution_block_forward.4} parent=5 // pred_region
      // Predicated region
      $region21: #{convolution_block_forward.4} parent=19 // pred_check
        %p156 = pneg %p42
      $region22: #{convolution_block_forward.4} parent=19 // pred_check_branch
        %158 = sbr.rel (%p156) target = $region24
      $region23: #{convolution_block_forward.4} parent=19 // pred_region
        %p159 = scmp.lt.s32.totalorder %s18, 1
        %s160 = scalar_select %p159, %s18, 1
        %s161 = smul.addr %s160, 54
        %s162 = smul.addr %s161, 4
        %s163 = scalar_lea.vmem %s0, %s162
      $region24: #{convolution_block_forward.4} parent=19 // pred_fallthru
        _
    $region20: #{convolution_block_forward.4} parent=5 // pred_fallthru
      _
    %p164 = scmp.le.s32.totalorder 1, %s10
    %p165 = scmp.lt.s32.totalorder %s10, 3
    %p166 = pnand %p164, %p165
    %p167 = pneg %p166
    // Predicated region
    $region25: #{convolution_block_forward.4} parent=5 // pred_check
      _
    $region26: #{convolution_block_forward.4} parent=5 // pred_check_branch
      %169 = sbr.rel (%p166) target = $region28
    $region27: #{convolution_block_forward.4} parent=5 // pred_region
      %s170 = ssub.s32 %s10, 1
      %p171 = scmp.lt.s32.totalorder %s20, 1
      %s172 = scalar_select %p171, %s20, 1
      %s173 = smul.addr %s172, 54
      %s174 = smul.addr %s173, 4
      %s175 = scalar_lea.vmem %s0, %s174
      %p176 = pneg %p48
      %p177 = pneg %p45
      %p178 = scmp.lt.s32.totalorder %s19, 0
      %s179 = scalar_select %p178, %s19, 0
      %s180 = smul.addr %s179, 4
      %s181 = scalar_lea.vmem %s1, %s180
      %p182 = pneg %p74
      %p183 = pneg %p71
      %p184 = pneg %p102
      %p185 = pneg %p99
      %p186 = scmp.lt.s32.totalorder %s20, 1
      %s187 = scalar_select %p186, %s20, 1
      %p188 = scmp.lt.s32.totalorder %s19, 0
      %s189 = scalar_select %p188, %s19, 0
      %s190 = smul.addr %s187, 32
      %s191 = sadd.s32 %s189, %s190
      %s192 = smul.addr %s191, 4
      %s193 = scalar_lea.vmem %s2, %s192
      %p194 = pneg %p130
      %p195 = pneg %p127
      %p196 = scmp.lt.s32.totalorder %s20, 1
      %s197 = scalar_select %p196, %s20, 1
      %p198 = scmp.lt.s32.totalorder %s19, 0
      %s199 = scalar_select %p198, %s19, 0
      %s200 = sadd.s32 %s199, %s197
      %s201 = smul.addr %s200, 2
      %s202 = scalar_lea.vmem %s3, %s201
      %p203 = scmp.lt.s32.totalorder %s20, 1
      %s204 = scalar_select %p203, %s20, 1
      %s205 = smul.addr %s204, 54
      %s206 = smul.addr %s205, 4
      %s207 = scalar_lea.vmem %s0, %s206
      %p208 = scmp.lt.s32.totalorder %s19, 0
      %s209 = scalar_select %p208, %s19, 0
      %s210 = smul.addr %s209, 4
      %s211 = scalar_lea.vmem %s1, %s210
      %p212 = scmp.lt.s32.totalorder %s20, 1
      %s213 = scalar_select %p212, %s20, 1
      %p214 = scmp.lt.s32.totalorder %s19, 0
      %s215 = scalar_select %p214, %s19, 0
      %s216 = smul.addr %s213, 32
      %s217 = sadd.s32 %s215, %s216
      %s218 = smul.addr %s217, 4
      %s219 = scalar_lea.vmem %s2, %s218
      %p220 = scmp.lt.s32.totalorder %s20, 1
      %s221 = scalar_select %p220, %s20, 1
      %p222 = scmp.lt.s32.totalorder %s19, 0
      %s223 = scalar_select %p222, %s19, 0
      %s224 = sadd.s32 %s223, %s221
      %s225 = smul.addr %s224, 2
      %s226 = scalar_lea.vmem %s3, %s225
      %v228 = vld [vmem:[%s207] sm:$0xf]
      %v229 = vld [vmem:[%s207 + $0x4] sm:$0xf]
      %v230 = vld [vmem:[%s207 + $0x8] sm:$0x1]
      %v231 = vld [vmem:[%s207 + $0xc] sm:$0xf]
      %v232 = vld [vmem:[%s207 + $0x10] sm:$0xf]
      %v233 = vld [vmem:[%s207 + $0x14] sm:$0x1]
      %v234 = vld [vmem:[%s207 + $0x18] sm:$0xf]
      %v235 = vld [vmem:[%s207 + $0x1c] sm:$0xf]
      %v236 = vld [vmem:[%s207 + $0x20] sm:$0x1]
      %v237 = vld [vmem:[%s207 + $0x24] sm:$0xf]
      %v238 = vld [vmem:[%s207 + $0x28] sm:$0xf]
      %v239 = vld [vmem:[%s207 + $0x2c] sm:$0x1]
      %v240 = vld [vmem:[%s207 + $0x30] sm:$0xf]
      %v241 = vld [vmem:[%s207 + $0x34] sm:$0xf]
      %v242 = vld [vmem:[%s207 + $0x38] sm:$0x1]
      %v243 = vld [vmem:[%s207 + $0x3c] sm:$0xf]
      %v244 = vld [vmem:[%s207 + $0x40] sm:$0xf]
      %v245 = vld [vmem:[%s207 + $0x44] sm:$0x1]
      %v246 = vld [vmem:[%s207 + $0x48] sm:$0xf]
      %v247 = vld [vmem:[%s207 + $0x4c] sm:$0xf]
      %v248 = vld [vmem:[%s207 + $0x50] sm:$0x1]
      %v249 = vld [vmem:[%s207 + $0x54] sm:$0xf]
      %v250 = vld [vmem:[%s207 + $0x58] sm:$0xf]
      %v251 = vld [vmem:[%s207 + $0x5c] sm:$0x1]
      %v252 = vld [vmem:[%s207 + $0x60] sm:$0xf]
      %v253 = vld [vmem:[%s207 + $0x64] sm:$0xf]
      %v254 = vld [vmem:[%s207 + $0x68] sm:$0x1]
      %v255 = vld [vmem:[%s207 + $0x6c] sm:$0xf]
      %v256 = vld [vmem:[%s207 + $0x70] sm:$0xf]
      %v257 = vld [vmem:[%s207 + $0x74] sm:$0x1]
      %v258 = vld [vmem:[%s207 + $0x78] sm:$0xf]
      %v259 = vld [vmem:[%s207 + $0x7c] sm:$0xf]
      %v260 = vld [vmem:[%s207 + $0x80] sm:$0x1]
      %v261 = vld [vmem:[%s207 + $0x84] sm:$0xf]
      %v262 = vld [vmem:[%s207 + $0x88] sm:$0xf]
      %v263 = vld [vmem:[%s207 + $0x8c] sm:$0x1]
      %v264 = vld [vmem:[%s207 + $0x90] sm:$0xf]
      %v265 = vld [vmem:[%s207 + $0x94] sm:$0xf]
      %v266 = vld [vmem:[%s207 + $0x98] sm:$0x1]
      %v267 = vld [vmem:[%s207 + $0x9c] sm:$0xf]
      %v268 = vld [vmem:[%s207 + $0xa0] sm:$0xf]
      %v269 = vld [vmem:[%s207 + $0xa4] sm:$0x1]
      %v270 = vld [vmem:[%s207 + $0xa8] sm:$0xf]
      %v271 = vld [vmem:[%s207 + $0xac] sm:$0xf]
      %v272 = vld [vmem:[%s207 + $0xb0] sm:$0x1]
      %v273 = vld [vmem:[%s207 + $0xb4] sm:$0xf]
      %v274 = vld [vmem:[%s207 + $0xb8] sm:$0xf]
      %v275 = vld [vmem:[%s207 + $0xbc] sm:$0x1]
      %v276 = vld [vmem:[%s207 + $0xc0] sm:$0xf]
      %v277 = vld [vmem:[%s207 + $0xc4] sm:$0xf]
      %v278 = vld [vmem:[%s207 + $0xc8] sm:$0x1]
      %v279 = vld [vmem:[%s207 + $0xcc] sm:$0xf]
      %v280 = vld [vmem:[%s207 + $0xd0] sm:$0xf]
      %v281 = vld [vmem:[%s207 + $0xd4] sm:$0x1]
      %v314 = vunpack.c.l.b16 %v228
      %v315 = vunpack.c.l.b16 %v229
      %v316 = vunpack.c.l.b16 %v231
      %v317 = vunpack.c.l.b16 %v232
      %v318 = vunpack.c.l.b16 %v234
      %v319 = vunpack.c.l.b16 %v235
      %v320 = vunpack.c.l.b16 %v237
      %v321 = vunpack.c.l.b16 %v238
      %v322 = vunpack.c.l.b16 %v240
      %v323 = vunpack.c.l.b16 %v241
      %v324 = vunpack.c.l.b16 %v243
      %v325 = vunpack.c.l.b16 %v244
      %v326 = vunpack.c.l.b16 %v246
      %v327 = vunpack.c.l.b16 %v247
      %v328 = vunpack.c.l.b16 %v249
      %v329 = vunpack.c.l.b16 %v250
      %v330 = vunpack.c.l.b16 %v252
      %v331 = vunpack.c.l.b16 %v253
      %v332 = vunpack.c.l.b16 %v255
      %v333 = vunpack.c.l.b16 %v256
      %v334 = vunpack.c.l.b16 %v258
      %v335 = vunpack.c.l.b16 %v259
      %v336 = vunpack.c.l.b16 %v261
      %v337 = vunpack.c.l.b16 %v262
      %v338 = vunpack.c.l.b16 %v264
      %v339 = vunpack.c.l.b16 %v265
      %v340 = vunpack.c.l.b16 %v267
      %v341 = vunpack.c.l.b16 %v268
      %v342 = vunpack.c.l.b16 %v270
      %v343 = vunpack.c.l.b16 %v271
      %v344 = vunpack.c.l.b16 %v273
      %v345 = vunpack.c.l.b16 %v274
      %v346 = vpack.c.b16 %v315, %v314
      %v347 = vpack.c.b16 %v317, %v316
      %v348 = vpack.c.b16 %v319, %v318
      %v349 = vpack.c.b16 %v321, %v320
      %v350 = vpack.c.b16 %v323, %v322
      %v351 = vpack.c.b16 %v325, %v324
      %v352 = vpack.c.b16 %v327, %v326
      %v353 = vpack.c.b16 %v329, %v328
      %v354 = vpack.c.b16 %v331, %v330
      %v355 = vpack.c.b16 %v333, %v332
      %v356 = vpack.c.b16 %v335, %v334
      %v357 = vpack.c.b16 %v337, %v336
      %v358 = vpack.c.b16 %v339, %v338
      %v359 = vpack.c.b16 %v341, %v340
      %v360 = vpack.c.b16 %v343, %v342
      %v361 = vpack.c.b16 %v345, %v344
      %vm378 = vcmask 31744
      %379 = vst.msk [vmem:[#allocation2] sm:$0xff] %vm378, %v346
      %380 = vst.msk [vmem:[#allocation2 + $0x8] sm:$0xff] %vm378, %v347
      %381 = vst.msk [vmem:[#allocation2 + $0x10] sm:$0xff] %vm378, %v348
      %382 = vst.msk [vmem:[#allocation2 + $0x18] sm:$0xff] %vm378, %v349
      %383 = vst.msk [vmem:[#allocation2 + $0x20] sm:$0xff] %vm378, %v350
      %384 = vst.msk [vmem:[#allocation2 + $0x28] sm:$0xff] %vm378, %v351
      %385 = vst.msk [vmem:[#allocation2 + $0x30] sm:$0xff] %vm378, %v352
      %386 = vst.msk [vmem:[#allocation2 + $0x38] sm:$0xff] %vm378, %v353
      %387 = vst.msk [vmem:[#allocation2 + $0x40] sm:$0xff] %vm378, %v354
      %388 = vst.msk [vmem:[#allocation2 + $0x48] sm:$0xff] %vm378, %v355
      %389 = vst.msk [vmem:[#allocation2 + $0x50] sm:$0xff] %vm378, %v356
      %390 = vst.msk [vmem:[#allocation2 + $0x58] sm:$0xff] %vm378, %v357
      %391 = vst.msk [vmem:[#allocation2 + $0x60] sm:$0xff] %vm378, %v358
      %392 = vst.msk [vmem:[#allocation2 + $0x68] sm:$0xff] %vm378, %v359
      %393 = vst.msk [vmem:[#allocation2 + $0x70] sm:$0xff] %vm378, %v360
      %394 = vst.msk [vmem:[#allocation2 + $0x78] sm:$0xff] %vm378, %v361
      %vm395 = vsmask.f32 3328
      %vm396 = vsmask.f32 7440
      %vm397 = vmor %vm395, %vm396
      %v399 = vshrl.u32 %v228, 16
      %v401 = vrot.slane %v399, 4
      %v402 = vshll.u32 %v228, 16
      %v404 = vrot.slane %v402, 5
      %v405 = vor.u32 %v401, %v404
      %v406 = vrot.slane %v405, 4
      %v408 = vshll.u32 %v229, 16
      %v410 = vrot.slane %v408, 5
      %v411 = vsel %vm397, %v406, %v410
      %v412 = vshrl.u32 %v229, 16
      %v414 = vrot.slane %v412, 4
      %v415 = vor.u32 %v414, %v410
      %v416 = vrot.slane %v415, 4
      %v418 = vshll.u32 %v230, 16
      %v420 = vrot.slane %v418, 5
      %v421 = vsel %vm397, %v416, %v420
      %v423 = vshrl.u32 %v231, 16
      %v425 = vrot.slane %v423, 4
      %v426 = vshll.u32 %v231, 16
      %v428 = vrot.slane %v426, 5
      %v429 = vor.u32 %v425, %v428
      %v430 = vrot.slane %v429, 4
      %v432 = vshll.u32 %v232, 16
      %v434 = vrot.slane %v432, 5
      %v435 = vsel %vm397, %v430, %v434
      %v436 = vshrl.u32 %v232, 16
      %v438 = vrot.slane %v436, 4
      %v439 = vor.u32 %v438, %v434
      %v440 = vrot.slane %v439, 4
      %v442 = vshll.u32 %v233, 16
      %v444 = vrot.slane %v442, 5
      %v445 = vsel %vm397, %v440, %v444
      %v447 = vshrl.u32 %v234, 16
      %v449 = vrot.slane %v447, 4
      %v450 = vshll.u32 %v234, 16
      %v452 = vrot.slane %v450, 5
      %v453 = vor.u32 %v449, %v452
      %v454 = vrot.slane %v453, 4
      %v456 = vshll.u32 %v235, 16
      %v458 = vrot.slane %v456, 5
      %v459 = vsel %vm397, %v454, %v458
      %v460 = vshrl.u32 %v235, 16
      %v462 = vrot.slane %v460, 4
      %v463 = vor.u32 %v462, %v458
      %v464 = vrot.slane %v463, 4
      %v466 = vshll.u32 %v236, 16
      %v468 = vrot.slane %v466, 5
      %v469 = vsel %vm397, %v464, %v468
      %v471 = vshrl.u32 %v237, 16
      %v473 = vrot.slane %v471, 4
      %v474 = vshll.u32 %v237, 16
      %v476 = vrot.slane %v474, 5
      %v477 = vor.u32 %v473, %v476
      %v478 = vrot.slane %v477, 4
      %v480 = vshll.u32 %v238, 16
      %v482 = vrot.slane %v480, 5
      %v483 = vsel %vm397, %v478, %v482
      %v484 = vshrl.u32 %v238, 16
      %v486 = vrot.slane %v484, 4
      %v487 = vor.u32 %v486, %v482
      %v488 = vrot.slane %v487, 4
      %v490 = vshll.u32 %v239, 16
      %v492 = vrot.slane %v490, 5
      %v493 = vsel %vm397, %v488, %v492
      %v495 = vshrl.u32 %v240, 16
      %v497 = vrot.slane %v495, 4
      %v498 = vshll.u32 %v240, 16
      %v500 = vrot.slane %v498, 5
      %v501 = vor.u32 %v497, %v500
      %v502 = vrot.slane %v501, 4
      %v504 = vshll.u32 %v241, 16
      %v506 = vrot.slane %v504, 5
      %v507 = vsel %vm397, %v502, %v506
      %v508 = vshrl.u32 %v241, 16
      %v510 = vrot.slane %v508, 4
      %v511 = vor.u32 %v510, %v506
      %v512 = vrot.slane %v511, 4
      %v514 = vshll.u32 %v242, 16
      %v516 = vrot.slane %v514, 5
      %v517 = vsel %vm397, %v512, %v516
      %v519 = vshrl.u32 %v243, 16
      %v521 = vrot.slane %v519, 4
      %v522 = vshll.u32 %v243, 16
      %v524 = vrot.slane %v522, 5
      %v525 = vor.u32 %v521, %v524
      %v526 = vrot.slane %v525, 4
      %v528 = vshll.u32 %v244, 16
      %v530 = vrot.slane %v528, 5
      %v531 = vsel %vm397, %v526, %v530
      %v532 = vshrl.u32 %v244, 16
      %v534 = vrot.slane %v532, 4
      %v535 = vor.u32 %v534, %v530
      %v536 = vrot.slane %v535, 4
      %v538 = vshll.u32 %v245, 16
      %v540 = vrot.slane %v538, 5
      %v541 = vsel %vm397, %v536, %v540
      %v543 = vshrl.u32 %v246, 16
      %v545 = vrot.slane %v543, 4
      %v546 = vshll.u32 %v246, 16
      %v548 = vrot.slane %v546, 5
      %v549 = vor.u32 %v545, %v548
      %v550 = vrot.slane %v549, 4
      %v552 = vshll.u32 %v247, 16
      %v554 = vrot.slane %v552, 5
      %v555 = vsel %vm397, %v550, %v554
      %v556 = vshrl.u32 %v247, 16
      %v558 = vrot.slane %v556, 4
      %v559 = vor.u32 %v558, %v554
      %v560 = vrot.slane %v559, 4
      %v562 = vshll.u32 %v248, 16
      %v564 = vrot.slane %v562, 5
      %v565 = vsel %vm397, %v560, %v564
      %v567 = vshrl.u32 %v249, 16
      %v569 = vrot.slane %v567, 4
      %v570 = vshll.u32 %v249, 16
      %v572 = vrot.slane %v570, 5
      %v573 = vor.u32 %v569, %v572
      %v574 = vrot.slane %v573, 4
      %v576 = vshll.u32 %v250, 16
      %v578 = vrot.slane %v576, 5
      %v579 = vsel %vm397, %v574, %v578
      %v580 = vshrl.u32 %v250, 16
      %v582 = vrot.slane %v580, 4
      %v583 = vor.u32 %v582, %v578
      %v584 = vrot.slane %v583, 4
      %v586 = vshll.u32 %v251, 16
      %v588 = vrot.slane %v586, 5
      %v589 = vsel %vm397, %v584, %v588
      %v591 = vshrl.u32 %v252, 16
      %v593 = vrot.slane %v591, 4
      %v594 = vshll.u32 %v252, 16
      %v596 = vrot.slane %v594, 5
      %v597 = vor.u32 %v593, %v596
      %v598 = vrot.slane %v597, 4
      %v600 = vshll.u32 %v253, 16
      %v602 = vrot.slane %v600, 5
      %v603 = vsel %vm397, %v598, %v602
      %v604 = vshrl.u32 %v253, 16
      %v606 = vrot.slane %v604, 4
      %v607 = vor.u32 %v606, %v602
      %v608 = vrot.slane %v607, 4
      %v610 = vshll.u32 %v254, 16
      %v612 = vrot.slane %v610, 5
      %v613 = vsel %vm397, %v608, %v612
      %v615 = vshrl.u32 %v255, 16
      %v617 = vrot.slane %v615, 4
      %v618 = vshll.u32 %v255, 16
      %v620 = vrot.slane %v618, 5
      %v621 = vor.u32 %v617, %v620
      %v622 = vrot.slane %v621, 4
      %v624 = vshll.u32 %v256, 16
      %v626 = vrot.slane %v624, 5
      %v627 = vsel %vm397, %v622, %v626
      %v628 = vshrl.u32 %v256, 16
      %v630 = vrot.slane %v628, 4
      %v631 = vor.u32 %v630, %v626
      %v632 = vrot.slane %v631, 4
      %v634 = vshll.u32 %v257, 16
      %v636 = vrot.slane %v634, 5
      %v637 = vsel %vm397, %v632, %v636
      %v639 = vshrl.u32 %v258, 16
      %v641 = vrot.slane %v639, 4
      %v642 = vshll.u32 %v258, 16
      %v644 = vrot.slane %v642, 5
      %v645 = vor.u32 %v641, %v644
      %v646 = vrot.slane %v645, 4
      %v648 = vshll.u32 %v259, 16
      %v650 = vrot.slane %v648, 5
      %v651 = vsel %vm397, %v646, %v650
      %v652 = vshrl.u32 %v259, 16
      %v654 = vrot.slane %v652, 4
      %v655 = vor.u32 %v654, %v650
      %v656 = vrot.slane %v655, 4
      %v658 = vshll.u32 %v260, 16
      %v660 = vrot.slane %v658, 5
      %v661 = vsel %vm397, %v656, %v660
      %v663 = vshrl.u32 %v261, 16
      %v665 = vrot.slane %v663, 4
      %v666 = vshll.u32 %v261, 16
      %v668 = vrot.slane %v666, 5
      %v669 = vor.u32 %v665, %v668
      %v670 = vrot.slane %v669, 4
      %v672 = vshll.u32 %v262, 16
      %v674 = vrot.slane %v672, 5
      %v675 = vsel %vm397, %v670, %v674
      %v676 = vshrl.u32 %v262, 16
      %v678 = vrot.slane %v676, 4
      %v679 = vor.u32 %v678, %v674
      %v680 = vrot.slane %v679, 4
      %v682 = vshll.u32 %v263, 16
      %v684 = vrot.slane %v682, 5
      %v685 = vsel %vm397, %v680, %v684
      %v687 = vshrl.u32 %v264, 16
      %v689 = vrot.slane %v687, 4
      %v690 = vshll.u32 %v264, 16
      %v692 = vrot.slane %v690, 5
      %v693 = vor.u32 %v689, %v692
      %v694 = vrot.slane %v693, 4
      %v696 = vshll.u32 %v265, 16
      %v698 = vrot.slane %v696, 5
      %v699 = vsel %vm397, %v694, %v698
      %v700 = vshrl.u32 %v265, 16
      %v702 = vrot.slane %v700, 4
      %v703 = vor.u32 %v702, %v698
      %v704 = vrot.slane %v703, 4
      %v706 = vshll.u32 %v266, 16
      %v708 = vrot.slane %v706, 5
      %v709 = vsel %vm397, %v704, %v708
      %v711 = vshrl.u32 %v267, 16
      %v713 = vrot.slane %v711, 4
      %v714 = vshll.u32 %v267, 16
      %v716 = vrot.slane %v714, 5
      %v717 = vor.u32 %v713, %v716
      %v718 = vrot.slane %v717, 4
      %v720 = vshll.u32 %v268, 16
      %v722 = vrot.slane %v720, 5
      %v723 = vsel %vm397, %v718, %v722
      %v724 = vshrl.u32 %v268, 16
      %v726 = vrot.slane %v724, 4
      %v727 = vor.u32 %v726, %v722
      %v728 = vrot.slane %v727, 4
      %v730 = vshll.u32 %v269, 16
      %v732 = vrot.slane %v730, 5
      %v733 = vsel %vm397, %v728, %v732
      %v735 = vshrl.u32 %v270, 16
      %v737 = vrot.slane %v735, 4
      %v738 = vshll.u32 %v270, 16
      %v740 = vrot.slane %v738, 5
      %v741 = vor.u32 %v737, %v740
      %v742 = vrot.slane %v741, 4
      %v744 = vshll.u32 %v271, 16
      %v746 = vrot.slane %v744, 5
      %v747 = vsel %vm397, %v742, %v746
      %v748 = vshrl.u32 %v271, 16
      %v750 = vrot.slane %v748, 4
      %v751 = vor.u32 %v750, %v746
      %v752 = vrot.slane %v751, 4
      %v754 = vshll.u32 %v272, 16
      %v756 = vrot.slane %v754, 5
      %v757 = vsel %vm397, %v752, %v756
      %v759 = vshrl.u32 %v273, 16
      %v761 = vrot.slane %v759, 4
      %v762 = vshll.u32 %v273, 16
      %v764 = vrot.slane %v762, 5
      %v765 = vor.u32 %v761, %v764
      %v766 = vrot.slane %v765, 4
      %v768 = vshll.u32 %v274, 16
      %v770 = vrot.slane %v768, 5
      %v771 = vsel %vm397, %v766, %v770
      %v772 = vshrl.u32 %v274, 16
      %v774 = vrot.slane %v772, 4
      %v775 = vor.u32 %v774, %v770
      %v776 = vrot.slane %v775, 4
      %v778 = vshll.u32 %v275, 16
      %v780 = vrot.slane %v778, 5
      %v781 = vsel %vm397, %v776, %v780
      %v782 = vunpack.c.l.b16 %v411
      %v783 = vunpack.c.l.b16 %v421
      %v784 = vunpack.c.l.b16 %v435
      %v785 = vunpack.c.l.b16 %v445
      %v786 = vunpack.c.l.b16 %v459
      %v787 = vunpack.c.l.b16 %v469
      %v788 = vunpack.c.l.b16 %v483
      %v789 = vunpack.c.l.b16 %v493
      %v790 = vunpack.c.l.b16 %v507
      %v791 = vunpack.c.l.b16 %v517
      %v792 = vunpack.c.l.b16 %v531
      %v793 = vunpack.c.l.b16 %v541
      %v794 = vunpack.c.l.b16 %v555
      %v795 = vunpack.c.l.b16 %v565
      %v796 = vunpack.c.l.b16 %v579
      %v797 = vunpack.c.l.b16 %v589
      %v798 = vunpack.c.l.b16 %v603
      %v799 = vunpack.c.l.b16 %v613
      %v800 = vunpack.c.l.b16 %v627
      %v801 = vunpack.c.l.b16 %v637
      %v802 = vunpack.c.l.b16 %v651
      %v803 = vunpack.c.l.b16 %v661
      %v804 = vunpack.c.l.b16 %v675
      %v805 = vunpack.c.l.b16 %v685
      %v806 = vunpack.c.l.b16 %v699
      %v807 = vunpack.c.l.b16 %v709
      %v808 = vunpack.c.l.b16 %v723
      %v809 = vunpack.c.l.b16 %v733
      %v810 = vunpack.c.l.b16 %v747
      %v811 = vunpack.c.l.b16 %v757
      %v812 = vunpack.c.l.b16 %v771
      %v813 = vunpack.c.l.b16 %v781
      %v814 = vpack.c.b16 %v783, %v782
      %v815 = vpack.c.b16 %v785, %v784
      %v816 = vpack.c.b16 %v787, %v786
      %v817 = vpack.c.b16 %v789, %v788
      %v818 = vpack.c.b16 %v791, %v790
      %v819 = vpack.c.b16 %v793, %v792
      %v820 = vpack.c.b16 %v795, %v794
      %v821 = vpack.c.b16 %v797, %v796
      %v822 = vpack.c.b16 %v799, %v798
      %v823 = vpack.c.b16 %v801, %v800
      %v824 = vpack.c.b16 %v803, %v802
      %v825 = vpack.c.b16 %v805, %v804
      %v826 = vpack.c.b16 %v807, %v806
      %v827 = vpack.c.b16 %v809, %v808
      %v828 = vpack.c.b16 %v811, %v810
      %v829 = vpack.c.b16 %v813, %v812
      %830 = vrot.lane.b32.xlu0 %v814, 4
      %v831 = vpop.permute.xlu0 %830
      %832 = vrot.lane.b32.xlu0 %v815, 4
      %v833 = vpop.permute.xlu0 %832
      %834 = vrot.lane.b32.xlu0 %v816, 4
      %v835 = vpop.permute.xlu0 %834
      %836 = vrot.lane.b32.xlu0 %v817, 4
      %v837 = vpop.permute.xlu0 %836
      %838 = vrot.lane.b32.xlu0 %v818, 4
      %v839 = vpop.permute.xlu0 %838
      %840 = vrot.lane.b32.xlu0 %v819, 4
      %v841 = vpop.permute.xlu0 %840
      %842 = vrot.lane.b32.xlu0 %v820, 4
      %v843 = vpop.permute.xlu0 %842
      %844 = vrot.lane.b32.xlu0 %v821, 4
      %v845 = vpop.permute.xlu0 %844
      %846 = vrot.lane.b32.xlu0 %v822, 4
      %v847 = vpop.permute.xlu0 %846
      %848 = vrot.lane.b32.xlu0 %v823, 4
      %v849 = vpop.permute.xlu0 %848
      %850 = vrot.lane.b32.xlu0 %v824, 4
      %v851 = vpop.permute.xlu0 %850
      %852 = vrot.lane.b32.xlu0 %v825, 4
      %v853 = vpop.permute.xlu0 %852
      %854 = vrot.lane.b32.xlu0 %v826, 4
      %v855 = vpop.permute.xlu0 %854
      %856 = vrot.lane.b32.xlu0 %v827, 4
      %v857 = vpop.permute.xlu0 %856
      %858 = vrot.lane.b32.xlu0 %v828, 4
      %v859 = vpop.permute.xlu0 %858
      %860 = vrot.lane.b32.xlu0 %v829, 4
      %v861 = vpop.permute.xlu0 %860
      %vm878 = vcmask 64544
      %879 = vst.msk [vmem:[#allocation2] sm:$0xff] %vm878, %v831
      %880 = vst.msk [vmem:[#allocation2 + $0x8] sm:$0xff] %vm878, %v833
      %881 = vst.msk [vmem:[#allocation2 + $0x10] sm:$0xff] %vm878, %v835
      %882 = vst.msk [vmem:[#allocation2 + $0x18] sm:$0xff] %vm878, %v837
      %883 = vst.msk [vmem:[#allocation2 + $0x20] sm:$0xff] %vm878, %v839
      %884 = vst.msk [vmem:[#allocation2 + $0x28] sm:$0xff] %vm878, %v841
      %885 = vst.msk [vmem:[#allocation2 + $0x30] sm:$0xff] %vm878, %v843
      %886 = vst.msk [vmem:[#allocation2 + $0x38] sm:$0xff] %vm878, %v845
      %887 = vst.msk [vmem:[#allocation2 + $0x40] sm:$0xff] %vm878, %v847
      %888 = vst.msk [vmem:[#allocation2 + $0x48] sm:$0xff] %vm878, %v849
      %889 = vst.msk [vmem:[#allocation2 + $0x50] sm:$0xff] %vm878, %v851
      %890 = vst.msk [vmem:[#allocation2 + $0x58] sm:$0xff] %vm878, %v853
      %891 = vst.msk [vmem:[#allocation2 + $0x60] sm:$0xff] %vm878, %v855
      %892 = vst.msk [vmem:[#allocation2 + $0x68] sm:$0xff] %vm878, %v857
      %893 = vst.msk [vmem:[#allocation2 + $0x70] sm:$0xff] %vm878, %v859
      %894 = vst.msk [vmem:[#allocation2 + $0x78] sm:$0xff] %vm878, %v861
      %vm911 = vcmask 1042432
      %vm912 = vcmask 1046532
      %vm913 = vmor %vm911, %vm912
      %v914 = vrot.slane %v228, 5
      %v915 = vrot.slane %v914, 4
      %v916 = vrot.slane %v229, 5
      %v917 = vsel %vm913, %v915, %v916
      %v918 = vrot.slane %v916, 4
      %v919 = vrot.slane %v230, 5
      %v920 = vsel %vm913, %v918, %v919
      %v921 = vrot.slane %v231, 5
      %v922 = vrot.slane %v921, 4
      %v923 = vrot.slane %v232, 5
      %v924 = vsel %vm913, %v922, %v923
      %v925 = vrot.slane %v923, 4
      %v926 = vrot.slane %v233, 5
      %v927 = vsel %vm913, %v925, %v926
      %v928 = vrot.slane %v234, 5
      %v929 = vrot.slane %v928, 4
      %v930 = vrot.slane %v235, 5
      %v931 = vsel %vm913, %v929, %v930
      %v932 = vrot.slane %v930, 4
      %v933 = vrot.slane %v236, 5
      %v934 = vsel %vm913, %v932, %v933
      %v935 = vrot.slane %v237, 5
      %v936 = vrot.slane %v935, 4
      %v937 = vrot.slane %v238, 5
      %v938 = vsel %vm913, %v936, %v937
      %v939 = vrot.slane %v937, 4
      %v940 = vrot.slane %v239, 5
      %v941 = vsel %vm913, %v939, %v940
      %v942 = vrot.slane %v240, 5
      %v943 = vrot.slane %v942, 4
      %v944 = vrot.slane %v241, 5
      %v945 = vsel %vm913, %v943, %v944
      %v946 = vrot.slane %v944, 4
      %v947 = vrot.slane %v242, 5
      %v948 = vsel %vm913, %v946, %v947
      %v949 = vrot.slane %v243, 5
      %v950 = vrot.slane %v949, 4
      %v951 = vrot.slane %v244, 5
      %v952 = vsel %vm913, %v950, %v951
      %v953 = vrot.slane %v951, 4
      %v954 = vrot.slane %v245, 5
      %v955 = vsel %vm913, %v953, %v954
      %v956 = vrot.slane %v246, 5
      %v957 = vrot.slane %v956, 4
      %v958 = vrot.slane %v247, 5
      %v959 = vsel %vm913, %v957, %v958
      %v960 = vrot.slane %v958, 4
      %v961 = vrot.slane %v248, 5
      %v962 = vsel %vm913, %v960, %v961
      %v963 = vrot.slane %v249, 5
      %v964 = vrot.slane %v963, 4
      %v965 = vrot.slane %v250, 5
      %v966 = vsel %vm913, %v964, %v965
      %v967 = vrot.slane %v965, 4
      %v968 = vrot.slane %v251, 5
      %v969 = vsel %vm913, %v967, %v968
      %v970 = vrot.slane %v252, 5
      %v971 = vrot.slane %v970, 4
      %v972 = vrot.slane %v253, 5
      %v973 = vsel %vm913, %v971, %v972
      %v974 = vrot.slane %v972, 4
      %v975 = vrot.slane %v254, 5
      %v976 = vsel %vm913, %v974, %v975
      %v977 = vrot.slane %v255, 5
      %v978 = vrot.slane %v977, 4
      %v979 = vrot.slane %v256, 5
      %v980 = vsel %vm913, %v978, %v979
      %v981 = vrot.slane %v979, 4
      %v982 = vrot.slane %v257, 5
      %v983 = vsel %vm913, %v981, %v982
      %v984 = vrot.slane %v258, 5
      %v985 = vrot.slane %v984, 4
      %v986 = vrot.slane %v259, 5
      %v987 = vsel %vm913, %v985, %v986
      %v988 = vrot.slane %v986, 4
      %v989 = vrot.slane %v260, 5
      %v990 = vsel %vm913, %v988, %v989
      %v991 = vrot.slane %v261, 5
      %v992 = vrot.slane %v991, 4
      %v993 = vrot.slane %v262, 5
      %v994 = vsel %vm913, %v992, %v993
      %v995 = vrot.slane %v993, 4
      %v996 = vrot.slane %v263, 5
      %v997 = vsel %vm913, %v995, %v996
      %v998 = vrot.slane %v264, 5
      %v999 = vrot.slane %v998, 4
      %v1000 = vrot.slane %v265, 5
      %v1001 = vsel %vm913, %v999, %v1000
      %v1002 = vrot.slane %v1000, 4
      %v1003 = vrot.slane %v266, 5
      %v1004 = vsel %vm913, %v1002, %v1003
      %v1005 = vrot.slane %v267, 5
      %v1006 = vrot.slane %v1005, 4
      %v1007 = vrot.slane %v268, 5
      %v1008 = vsel %vm913, %v1006, %v1007
      %v1009 = vrot.slane %v1007, 4
      %v1010 = vrot.slane %v269, 5
      %v1011 = vsel %vm913, %v1009, %v1010
      %v1012 = vrot.slane %v270, 5
      %v1013 = vrot.slane %v1012, 4
      %v1014 = vrot.slane %v271, 5
      %v1015 = vsel %vm913, %v1013, %v1014
      %v1016 = vrot.slane %v1014, 4
      %v1017 = vrot.slane %v272, 5
      %v1018 = vsel %vm913, %v1016, %v1017
      %v1019 = vrot.slane %v273, 5
      %v1020 = vrot.slane %v1019, 4
      %v1021 = vrot.slane %v274, 5
      %v1022 = vsel %vm913, %v1020, %v1021
      %v1023 = vrot.slane %v1021, 4
      %v1024 = vrot.slane %v275, 5
      %v1025 = vsel %vm913, %v1023, %v1024
      %v1026 = vunpack.c.l.b16 %v917
      %v1027 = vunpack.c.l.b16 %v920
      %v1028 = vunpack.c.l.b16 %v924
      %v1029 = vunpack.c.l.b16 %v927
      %v1030 = vunpack.c.l.b16 %v931
      %v1031 = vunpack.c.l.b16 %v934
      %v1032 = vunpack.c.l.b16 %v938
      %v1033 = vunpack.c.l.b16 %v941
      %v1034 = vunpack.c.l.b16 %v945
      %v1035 = vunpack.c.l.b16 %v948
      %v1036 = vunpack.c.l.b16 %v952
      %v1037 = vunpack.c.l.b16 %v955
      %v1038 = vunpack.c.l.b16 %v959
      %v1039 = vunpack.c.l.b16 %v962
      %v1040 = vunpack.c.l.b16 %v966
      %v1041 = vunpack.c.l.b16 %v969
      %v1042 = vunpack.c.l.b16 %v973
      %v1043 = vunpack.c.l.b16 %v976
      %v1044 = vunpack.c.l.b16 %v980
      %v1045 = vunpack.c.l.b16 %v983
      %v1046 = vunpack.c.l.b16 %v987
      %v1047 = vunpack.c.l.b16 %v990
      %v1048 = vunpack.c.l.b16 %v994
      %v1049 = vunpack.c.l.b16 %v997
      %v1050 = vunpack.c.l.b16 %v1001
      %v1051 = vunpack.c.l.b16 %v1004
      %v1052 = vunpack.c.l.b16 %v1008
      %v1053 = vunpack.c.l.b16 %v1011
      %v1054 = vunpack.c.l.b16 %v1015
      %v1055 = vunpack.c.l.b16 %v1018
      %v1056 = vunpack.c.l.b16 %v1022
      %v1057 = vunpack.c.l.b16 %v1025
      %v1058 = vpack.c.b16 %v1027, %v1026
      %v1059 = vpack.c.b16 %v1029, %v1028
      %v1060 = vpack.c.b16 %v1031, %v1030
      %v1061 = vpack.c.b16 %v1033, %v1032
      %v1062 = vpack.c.b16 %v1035, %v1034
      %v1063 = vpack.c.b16 %v1037, %v1036
      %v1064 = vpack.c.b16 %v1039, %v1038
      %v1065 = vpack.c.b16 %v1041, %v1040
      %v1066 = vpack.c.b16 %v1043, %v1042
      %v1067 = vpack.c.b16 %v1045, %v1044
      %v1068 = vpack.c.b16 %v1047, %v1046
      %v1069 = vpack.c.b16 %v1049, %v1048
      %v1070 = vpack.c.b16 %v1051, %v1050
      %v1071 = vpack.c.b16 %v1053, %v1052
      %v1072 = vpack.c.b16 %v1055, %v1054
      %v1073 = vpack.c.b16 %v1057, %v1056
      %1074 = vrot.lane.b32.xlu0 %v1058, 8
      %v1075 = vpop.permute.xlu0 %1074
      %1076 = vrot.lane.b32.xlu0 %v1059, 8
      %v1077 = vpop.permute.xlu0 %1076
      %1078 = vrot.lane.b32.xlu0 %v1060, 8
      %v1079 = vpop.permute.xlu0 %1078
      %1080 = vrot.lane.b32.xlu0 %v1061, 8
      %v1081 = vpop.permute.xlu0 %1080
      %1082 = vrot.lane.b32.xlu0 %v1062, 8
      %v1083 = vpop.permute.xlu0 %1082
      %1084 = vrot.lane.b32.xlu0 %v1063, 8
      %v1085 = vpop.permute.xlu0 %1084
      %1086 = vrot.lane.b32.xlu0 %v1064, 8
      %v1087 = vpop.permute.xlu0 %1086
      %1088 = vrot.lane.b32.xlu0 %v1065, 8
      %v1089 = vpop.permute.xlu0 %1088
      %1090 = vrot.lane.b32.xlu0 %v1066, 8
      %v1091 = vpop.permute.xlu0 %1090
      %1092 = vrot.lane.b32.xlu0 %v1067, 8
      %v1093 = vpop.permute.xlu0 %1092
      %1094 = vrot.lane.b32.xlu0 %v1068, 8
      %v1095 = vpop.permute.xlu0 %1094
      %1096 = vrot.lane.b32.xlu0 %v1069, 8
      %v1097 = vpop.permute.xlu0 %1096
      %1098 = vrot.lane.b32.xlu0 %v1070, 8
      %v1099 = vpop.permute.xlu0 %1098
      %1100 = vrot.lane.b32.xlu0 %v1071, 8
      %v1101 = vpop.permute.xlu0 %1100
      %1102 = vrot.lane.b32.xlu0 %v1072, 8
      %v1103 = vpop.permute.xlu0 %1102
      %1104 = vrot.lane.b32.xlu0 %v1073, 8
      %v1105 = vpop.permute.xlu0 %1104
      %vm1122 = vcmask 97344
      %1123 = vst.msk [vmem:[#allocation2] sm:$0xff] %vm1122, %v1075
      %1124 = vst.msk [vmem:[#allocation2 + $0x8] sm:$0xff] %vm1122, %v1077
      %1125 = vst.msk [vmem:[#allocation2 + $0x10] sm:$0xff] %vm1122, %v1079
      %1126 = vst.msk [vmem:[#allocation2 + $0x18] sm:$0xff] %vm1122, %v1081
      %1127 = vst.msk [vmem:[#allocation2 + $0x20] sm:$0xff] %vm1122, %v1083
      %1128 = vst.msk [vmem:[#allocation2 + $0x28] sm:$0xff] %vm1122, %v1085
      %1129 = vst.msk [vmem:[#allocation2 + $0x30] sm:$0xff] %vm1122, %v1087
      %1130 = vst.msk [vmem:[#allocation2 + $0x38] sm:$0xff] %vm1122, %v1089
      %1131 = vst.msk [vmem:[#allocation2 + $0x40] sm:$0xff] %vm1122, %v1091
      %1132 = vst.msk [vmem:[#allocation2 + $0x48] sm:$0xff] %vm1122, %v1093
      %1133 = vst.msk [vmem:[#allocation2 + $0x50] sm:$0xff] %vm1122, %v1095
      %1134 = vst.msk [vmem:[#allocation2 + $0x58] sm:$0xff] %vm1122, %v1097
      %1135 = vst.msk [vmem:[#allocation2 + $0x60] sm:$0xff] %vm1122, %v1099
      %1136 = vst.msk [vmem:[#allocation2 + $0x68] sm:$0xff] %vm1122, %v1101
      %1137 = vst.msk [vmem:[#allocation2 + $0x70] sm:$0xff] %vm1122, %v1103
      %1138 = vst.msk [vmem:[#allocation2 + $0x78] sm:$0xff] %vm1122, %v1105
      %v1141 = vunpack.c.l.b16 %v276
      %v1142 = vunpack.c.l.b16 %v277
      %v1143 = vpack.c.b16 %v1142, %v1141
      %1144 = vrot.lane.b32.xlu0 %v347, 12
      %v1145 = vpop.permute.xlu0 %1144
      %1146 = vrot.lane.b32.xlu0 %v348, 12
      %v1147 = vpop.permute.xlu0 %1146
      %1148 = vrot.lane.b32.xlu0 %v349, 12
      %v1149 = vpop.permute.xlu0 %1148
      %1150 = vrot.lane.b32.xlu0 %v350, 12
      %v1151 = vpop.permute.xlu0 %1150
      %1152 = vrot.lane.b32.xlu0 %v351, 12
      %v1153 = vpop.permute.xlu0 %1152
      %1154 = vrot.lane.b32.xlu0 %v352, 12
      %v1155 = vpop.permute.xlu0 %1154
      %1156 = vrot.lane.b32.xlu0 %v353, 12
      %v1157 = vpop.permute.xlu0 %1156
      %1158 = vrot.lane.b32.xlu0 %v354, 12
      %v1159 = vpop.permute.xlu0 %1158
      %1160 = vrot.lane.b32.xlu0 %v355, 12
      %v1161 = vpop.permute.xlu0 %1160
      %1162 = vrot.lane.b32.xlu0 %v356, 12
      %v1163 = vpop.permute.xlu0 %1162
      %1164 = vrot.lane.b32.xlu0 %v357, 12
      %v1165 = vpop.permute.xlu0 %1164
      %1166 = vrot.lane.b32.xlu0 %v358, 12
      %v1167 = vpop.permute.xlu0 %1166
      %1168 = vrot.lane.b32.xlu0 %v359, 12
      %v1169 = vpop.permute.xlu0 %1168
      %1170 = vrot.lane.b32.xlu0 %v360, 12
      %v1171 = vpop.permute.xlu0 %1170
      %1172 = vrot.lane.b32.xlu0 %v361, 12
      %v1173 = vpop.permute.xlu0 %1172
      %1174 = vrot.lane.b32.xlu0 %v1143, 12
      %v1175 = vpop.permute.xlu0 %1174
      %vm1192 = vcmask 130144
      %1193 = vst.msk [vmem:[#allocation2] sm:$0xff] %vm1192, %v1145
      %1194 = vst.msk [vmem:[#allocation2 + $0x8] sm:$0xff] %vm1192, %v1147
      %1195 = vst.msk [vmem:[#allocation2 + $0x10] sm:$0xff] %vm1192, %v1149
      %1196 = vst.msk [vmem:[#allocation2 + $0x18] sm:$0xff] %vm1192, %v1151
      %1197 = vst.msk [vmem:[#allocation2 + $0x20] sm:$0xff] %vm1192, %v1153
      %1198 = vst.msk [vmem:[#allocation2 + $0x28] sm:$0xff] %vm1192, %v1155
      %1199 = vst.msk [vmem:[#allocation2 + $0x30] sm:$0xff] %vm1192, %v1157
      %1200 = vst.msk [vmem:[#allocation2 + $0x38] sm:$0xff] %vm1192, %v1159
      %1201 = vst.msk [vmem:[#allocation2 + $0x40] sm:$0xff] %vm1192, %v1161
      %1202 = vst.msk [vmem:[#allocation2 + $0x48] sm:$0xff] %vm1192, %v1163
      %1203 = vst.msk [vmem:[#allocation2 + $0x50] sm:$0xff] %vm1192, %v1165
      %1204 = vst.msk [vmem:[#allocation2 + $0x58] sm:$0xff] %vm1192, %v1167
      %1205 = vst.msk [vmem:[#allocation2 + $0x60] sm:$0xff] %vm1192, %v1169
      %1206 = vst.msk [vmem:[#allocation2 + $0x68] sm:$0xff] %vm1192, %v1171
      %1207 = vst.msk [vmem:[#allocation2 + $0x70] sm:$0xff] %vm1192, %v1173
      %1208 = vst.msk [vmem:[#allocation2 + $0x78] sm:$0xff] %vm1192, %v1175
      %v1210 = vshrl.u32 %v276, 16
      %v1212 = vrot.slane %v1210, 4
      %v1213 = vshll.u32 %v276, 16
      %v1215 = vrot.slane %v1213, 5
      %v1216 = vor.u32 %v1212, %v1215
      %v1217 = vrot.slane %v1216, 4
      %v1219 = vshll.u32 %v277, 16
      %v1221 = vrot.slane %v1219, 5
      %v1222 = vsel %vm397, %v1217, %v1221
      %v1223 = vshrl.u32 %v277, 16
      %v1225 = vrot.slane %v1223, 4
      %v1226 = vor.u32 %v1225, %v1221
      %v1227 = vrot.slane %v1226, 4
      %v1229 = vshll.u32 %v278, 16
      %v1231 = vrot.slane %v1229, 5
      %v1232 = vsel %vm397, %v1227, %v1231
      %v1233 = vunpack.c.l.b16 %v1222
      %v1234 = vunpack.c.l.b16 %v1232
      %v1235 = vpack.c.b16 %v1234, %v1233
      %1236 = vrot.lane.b32.xlu0 %v815, 16
      %v1237 = vpop.permute.xlu0 %1236
      %1238 = vrot.lane.b32.xlu0 %v816, 16
      %v1239 = vpop.permute.xlu0 %1238
      %1240 = vrot.lane.b32.xlu0 %v817, 16
      %v1241 = vpop.permute.xlu0 %1240
      %1242 = vrot.lane.b32.xlu0 %v818, 16
      %v1243 = vpop.permute.xlu0 %1242
      %1244 = vrot.lane.b32.xlu0 %v819, 16
      %v1245 = vpop.permute.xlu0 %1244
      %1246 = vrot.lane.b32.xlu0 %v820, 16
      %v1247 = vpop.permute.xlu0 %1246
      %1248 = vrot.lane.b32.xlu0 %v821, 16
      %v1249 = vpop.permute.xlu0 %1248
      %1250 = vrot.lane.b32.xlu0 %v822, 16
      %v1251 = vpop.permute.xlu0 %1250
      %1252 = vrot.lane.b32.xlu0 %v823, 16
      %v1253 = vpop.permute.xlu0 %1252
      %1254 = vrot.lane.b32.xlu0 %v824, 16
      %v1255 = vpop.permute.xlu0 %1254
      %1256 = vrot.lane.b32.xlu0 %v825, 16
      %v1257 = vpop.permute.xlu0 %1256
      %1258 = vrot.lane.b32.xlu0 %v826, 16
      %v1259 = vpop.permute.xlu0 %1258
      %1260 = vrot.lane.b32.xlu0 %v827, 16
      %v1261 = vpop.permute.xlu0 %1260
      %1262 = vrot.lane.b32.xlu0 %v828, 16
      %v1263 = vpop.permute.xlu0 %1262
      %1264 = vrot.lane.b32.xlu0 %v829, 16
      %v1265 = vpop.permute.xlu0 %1264
      %1266 = vrot.lane.b32.xlu0 %v1235, 16
      %v1267 = vpop.permute.xlu0 %1266
      %vm1284 = vcmask 162944
      %1285 = vst.msk [vmem:[#allocation2] sm:$0xff] %vm1284, %v1237
      %1286 = vst.msk [vmem:[#allocation2 + $0x8] sm:$0xff] %vm1284, %v1239
      %1287 = vst.msk [vmem:[#allocation2 + $0x10] sm:$0xff] %vm1284, %v1241
      %1288 = vst.msk [vmem:[#allocation2 + $0x18] sm:$0xff] %vm1284, %v1243
      %1289 = vst.msk [vmem:[#allocation2 + $0x20] sm:$0xff] %vm1284, %v1245
      %1290 = vst.msk [vmem:[#allocation2 + $0x28] sm:$0xff] %vm1284, %v1247
      %1291 = vst.msk [vmem:[#allocation2 + $0x30] sm:$0xff] %vm1284, %v1249
      %1292 = vst.msk [vmem:[#allocation2 + $0x38] sm:$0xff] %vm1284, %v1251
      %1293 = vst.msk [vmem:[#allocation2 + $0x40] sm:$0xff] %vm1284, %v1253
      %1294 = vst.msk [vmem:[#allocation2 + $0x48] sm:$0xff] %vm1284, %v1255
      %1295 = vst.msk [vmem:[#allocation2 + $0x50] sm:$0xff] %vm1284, %v1257
      %1296 = vst.msk [vmem:[#allocation2 + $0x58] sm:$0xff] %vm1284, %v1259
      %1297 = vst.msk [vmem:[#allocation2 + $0x60] sm:$0xff] %vm1284, %v1261
      %1298 = vst.msk [vmem:[#allocation2 + $0x68] sm:$0xff] %vm1284, %v1263
      %1299 = vst.msk [vmem:[#allocation2 + $0x70] sm:$0xff] %vm1284, %v1265
      %1300 = vst.msk [vmem:[#allocation2 + $0x78] sm:$0xff] %vm1284, %v1267
      %v1302 = vrot.slane %v276, 5
      %v1303 = vrot.slane %v1302, 4
      %v1304 = vrot.slane %v277, 5
      %v1305 = vsel %vm913, %v1303, %v1304
      %v1306 = vrot.slane %v1304, 4
      %v1307 = vrot.slane %v278, 5
      %v1308 = vsel %vm913, %v1306, %v1307
      %v1309 = vunpack.c.l.b16 %v1305
      %v1310 = vunpack.c.l.b16 %v1308
      %v1311 = vpack.c.b16 %v1310, %v1309
      %1312 = vrot.lane.b32.xlu0 %v1059, 20
      %v1313 = vpop.permute.xlu0 %1312
      %1314 = vrot.lane.b32.xlu0 %v1060, 20
      %v1315 = vpop.permute.xlu0 %1314
      %1316 = vrot.lane.b32.xlu0 %v1061, 20
      %v1317 = vpop.permute.xlu0 %1316
      %1318 = vrot.lane.b32.xlu0 %v1062, 20
      %v1319 = vpop.permute.xlu0 %1318
      %1320 = vrot.lane.b32.xlu0 %v1063, 20
      %v1321 = vpop.permute.xlu0 %1320
      %1322 = vrot.lane.b32.xlu0 %v1064, 20
      %v1323 = vpop.permute.xlu0 %1322
      %1324 = vrot.lane.b32.xlu0 %v1065, 20
      %v1325 = vpop.permute.xlu0 %1324
      %1326 = vrot.lane.b32.xlu0 %v1066, 20
      %v1327 = vpop.permute.xlu0 %1326
      %1328 = vrot.lane.b32.xlu0 %v1067, 20
      %v1329 = vpop.permute.xlu0 %1328
      %1330 = vrot.lane.b32.xlu0 %v1068, 20
      %v1331 = vpop.permute.xlu0 %1330
      %1332 = vrot.lane.b32.xlu0 %v1069, 20
      %v1333 = vpop.permute.xlu0 %1332
      %1334 = vrot.lane.b32.xlu0 %v1070, 20
      %v1335 = vpop.permute.xlu0 %1334
      %1336 = vrot.lane.b32.xlu0 %v1071, 20
      %v1337 = vpop.permute.xlu0 %1336
      %1338 = vrot.lane.b32.xlu0 %v1072, 20
      %v1339 = vpop.permute.xlu0 %1338
      %1340 = vrot.lane.b32.xlu0 %v1073, 20
      %v1341 = vpop.permute.xlu0 %1340
      %1342 = vrot.lane.b32.xlu0 %v1311, 20
      %v1343 = vpop.permute.xlu0 %1342
      %vm1360 = vcmask 195744
      %1361 = vst.msk [vmem:[#allocation2] sm:$0xff] %vm1360, %v1313
      %1362 = vst.msk [vmem:[#allocation2 + $0x8] sm:$0xff] %vm1360, %v1315
      %1363 = vst.msk [vmem:[#allocation2 + $0x10] sm:$0xff] %vm1360, %v1317
      %1364 = vst.msk [vmem:[#allocation2 + $0x18] sm:$0xff] %vm1360, %v1319
      %1365 = vst.msk [vmem:[#allocation2 + $0x20] sm:$0xff] %vm1360, %v1321
      %1366 = vst.msk [vmem:[#allocation2 + $0x28] sm:$0xff] %vm1360, %v1323
      %1367 = vst.msk [vmem:[#allocation2 + $0x30] sm:$0xff] %vm1360, %v1325
      %1368 = vst.msk [vmem:[#allocation2 + $0x38] sm:$0xff] %vm1360, %v1327
      %1369 = vst.msk [vmem:[#allocation2 + $0x40] sm:$0xff] %vm1360, %v1329
      %1370 = vst.msk [vmem:[#allocation2 + $0x48] sm:$0xff] %vm1360, %v1331
      %1371 = vst.msk [vmem:[#allocation2 + $0x50] sm:$0xff] %vm1360, %v1333
      %1372 = vst.msk [vmem:[#allocation2 + $0x58] sm:$0xff] %vm1360, %v1335
      %1373 = vst.msk [vmem:[#allocation2 + $0x60] sm:$0xff] %vm1360, %v1337
      %1374 = vst.msk [vmem:[#allocation2 + $0x68] sm:$0xff] %vm1360, %v1339
      %1375 = vst.msk [vmem:[#allocation2 + $0x70] sm:$0xff] %vm1360, %v1341
      %1376 = vst.msk [vmem:[#allocation2 + $0x78] sm:$0xff] %vm1360, %v1343
      %v1379 = vunpack.c.l.b16 %v279
      %v1380 = vunpack.c.l.b16 %v280
      %v1381 = vpack.c.b16 %v1380, %v1379
      %1382 = vrot.lane.b32.xlu0 %v348, 24
      %v1383 = vpop.permute.xlu0 %1382
      %1384 = vrot.lane.b32.xlu0 %v349, 24
      %v1385 = vpop.permute.xlu0 %1384
      %1386 = vrot.lane.b32.xlu0 %v350, 24
      %v1387 = vpop.permute.xlu0 %1386
      %1388 = vrot.lane.b32.xlu0 %v351, 24
      %v1389 = vpop.permute.xlu0 %1388
      %1390 = vrot.lane.b32.xlu0 %v352, 24
      %v1391 = vpop.permute.xlu0 %1390
      %1392 = vrot.lane.b32.xlu0 %v353, 24
      %v1393 = vpop.permute.xlu0 %1392
      %1394 = vrot.lane.b32.xlu0 %v354, 24
      %v1395 = vpop.permute.xlu0 %1394
      %1396 = vrot.lane.b32.xlu0 %v355, 24
      %v1397 = vpop.permute.xlu0 %1396
      %1398 = vrot.lane.b32.xlu0 %v356, 24
      %v1399 = vpop.permute.xlu0 %1398
      %1400 = vrot.lane.b32.xlu0 %v357, 24
      %v1401 = vpop.permute.xlu0 %1400
      %1402 = vrot.lane.b32.xlu0 %v358, 24
      %v1403 = vpop.permute.xlu0 %1402
      %1404 = vrot.lane.b32.xlu0 %v359, 24
      %v1405 = vpop.permute.xlu0 %1404
      %1406 = vrot.lane.b32.xlu0 %v360, 24
      %v1407 = vpop.permute.xlu0 %1406
      %1408 = vrot.lane.b32.xlu0 %v361, 24
      %v1409 = vpop.permute.xlu0 %1408
      %1410 = vrot.lane.b32.xlu0 %v1143, 24
      %v1411 = vpop.permute.xlu0 %1410
      %1412 = vrot.lane.b32.xlu0 %v1381, 24
      %v1413 = vpop.permute.xlu0 %1412
      %vm1430 = vcmask 228544
      %1431 = vst.msk [vmem:[#allocation2] sm:$0xff] %vm1430, %v1383
      %1432 = vst.msk [vmem:[#allocation2 + $0x8] sm:$0xff] %vm1430, %v1385
      %1433 = vst.msk [vmem:[#allocation2 + $0x10] sm:$0xff] %vm1430, %v1387
      %1434 = vst.msk [vmem:[#allocation2 + $0x18] sm:$0xff] %vm1430, %v1389
      %1435 = vst.msk [vmem:[#allocation2 + $0x20] sm:$0xff] %vm1430, %v1391
      %1436 = vst.msk [vmem:[#allocation2 + $0x28] sm:$0xff] %vm1430, %v1393
      %1437 = vst.msk [vmem:[#allocation2 + $0x30] sm:$0xff] %vm1430, %v1395
      %1438 = vst.msk [vmem:[#allocation2 + $0x38] sm:$0xff] %vm1430, %v1397
      %1439 = vst.msk [vmem:[#allocation2 + $0x40] sm:$0xff] %vm1430, %v1399
      %1440 = vst.msk [vmem:[#allocation2 + $0x48] sm:$0xff] %vm1430, %v1401
      %1441 = vst.msk [vmem:[#allocation2 + $0x50] sm:$0xff] %vm1430, %v1403
      %1442 = vst.msk [vmem:[#allocation2 + $0x58] sm:$0xff] %vm1430, %v1405
      %1443 = vst.msk [vmem:[#allocation2 + $0x60] sm:$0xff] %vm1430, %v1407
      %1444 = vst.msk [vmem:[#allocation2 + $0x68] sm:$0xff] %vm1430, %v1409
      %1445 = vst.msk [vmem:[#allocation2 + $0x70] sm:$0xff] %vm1430, %v1411
      %1446 = vst.msk [vmem:[#allocation2 + $0x78] sm:$0xff] %vm1430, %v1413
      %v1448 = vshrl.u32 %v279, 16
      %v1450 = vrot.slane %v1448, 4
      %v1451 = vshll.u32 %v279, 16
      %v1453 = vrot.slane %v1451, 5
      %v1454 = vor.u32 %v1450, %v1453
      %v1455 = vrot.slane %v1454, 4
      %v1457 = vshll.u32 %v280, 16
      %v1459 = vrot.slane %v1457, 5
      %v1460 = vsel %vm397, %v1455, %v1459
      %v1461 = vshrl.u32 %v280, 16
      %v1463 = vrot.slane %v1461, 4
      %v1464 = vor.u32 %v1463, %v1459
      %v1465 = vrot.slane %v1464, 4
      %v1467 = vshll.u32 %v281, 16
      %v1469 = vrot.slane %v1467, 5
      %v1470 = vsel %vm397, %v1465, %v1469
      %v1471 = vunpack.c.l.b16 %v1460
      %v1472 = vunpack.c.l.b16 %v1470
      %v1473 = vpack.c.b16 %v1472, %v1471
      %1474 = vrot.lane.b32.xlu0 %v816, 28
      %v1475 = vpop.permute.xlu0 %1474
      %1476 = vrot.lane.b32.xlu0 %v817, 28
      %v1477 = vpop.permute.xlu0 %1476
      %1478 = vrot.lane.b32.xlu0 %v818, 28
      %v1479 = vpop.permute.xlu0 %1478
      %1480 = vrot.lane.b32.xlu0 %v819, 28
      %v1481 = vpop.permute.xlu0 %1480
      %1482 = vrot.lane.b32.xlu0 %v820, 28
      %v1483 = vpop.permute.xlu0 %1482
      %1484 = vrot.lane.b32.xlu0 %v821, 28
      %v1485 = vpop.permute.xlu0 %1484
      %1486 = vrot.lane.b32.xlu0 %v822, 28
      %v1487 = vpop.permute.xlu0 %1486
      %1488 = vrot.lane.b32.xlu0 %v823, 28
      %v1489 = vpop.permute.xlu0 %1488
      %1490 = vrot.lane.b32.xlu0 %v824, 28
      %v1491 = vpop.permute.xlu0 %1490
      %1492 = vrot.lane.b32.xlu0 %v825, 28
      %v1493 = vpop.permute.xlu0 %1492
      %1494 = vrot.lane.b32.xlu0 %v826, 28
      %v1495 = vpop.permute.xlu0 %1494
      %1496 = vrot.lane.b32.xlu0 %v827, 28
      %v1497 = vpop.permute.xlu0 %1496
      %1498 = vrot.lane.b32.xlu0 %v828, 28
      %v1499 = vpop.permute.xlu0 %1498
      %1500 = vrot.lane.b32.xlu0 %v829, 28
      %v1501 = vpop.permute.xlu0 %1500
      %1502 = vrot.lane.b32.xlu0 %v1235, 28
      %v1503 = vpop.permute.xlu0 %1502
      %1504 = vrot.lane.b32.xlu0 %v1473, 28
      %v1505 = vpop.permute.xlu0 %1504
      %vm1522 = vcmask 261344
      %1523 = vst.msk [vmem:[#allocation2] sm:$0xff] %vm1522, %v1475
      %1524 = vst.msk [vmem:[#allocation2 + $0x8] sm:$0xff] %vm1522, %v1477
      %1525 = vst.msk [vmem:[#allocation2 + $0x10] sm:$0xff] %vm1522, %v1479
      %1526 = vst.msk [vmem:[#allocation2 + $0x18] sm:$0xff] %vm1522, %v1481
      %1527 = vst.msk [vmem:[#allocation2 + $0x20] sm:$0xff] %vm1522, %v1483
      %1528 = vst.msk [vmem:[#allocation2 + $0x28] sm:$0xff] %vm1522, %v1485
      %1529 = vst.msk [vmem:[#allocation2 + $0x30] sm:$0xff] %vm1522, %v1487
      %1530 = vst.msk [vmem:[#allocation2 + $0x38] sm:$0xff] %vm1522, %v1489
      %1531 = vst.msk [vmem:[#allocation2 + $0x40] sm:$0xff] %vm1522, %v1491
      %1532 = vst.msk [vmem:[#allocation2 + $0x48] sm:$0xff] %vm1522, %v1493
      %1533 = vst.msk [vmem:[#allocation2 + $0x50] sm:$0xff] %vm1522, %v1495
      %1534 = vst.msk [vmem:[#allocation2 + $0x58] sm:$0xff] %vm1522, %v1497
      %1535 = vst.msk [vmem:[#allocation2 + $0x60] sm:$0xff] %vm1522, %v1499
      %1536 = vst.msk [vmem:[#allocation2 + $0x68] sm:$0xff] %vm1522, %v1501
      %1537 = vst.msk [vmem:[#allocation2 + $0x70] sm:$0xff] %vm1522, %v1503
      %1538 = vst.msk [vmem:[#allocation2 + $0x78] sm:$0xff] %vm1522, %v1505
      %v1540 = vrot.slane %v279, 5
      %v1541 = vrot.slane %v1540, 4
      %v1542 = vrot.slane %v280, 5
      %v1543 = vsel %vm913, %v1541, %v1542
      %v1544 = vrot.slane %v1542, 4
      %v1545 = vrot.slane %v281, 5
      %v1546 = vsel %vm913, %v1544, %v1545
      %v1547 = vunpack.c.l.b16 %v1543
      %v1548 = vunpack.c.l.b16 %v1546
      %v1549 = vpack.c.b16 %v1548, %v1547
      %1550 = vrot.lane.b32.xlu0 %v1060, 32
      %v1551 = vpop.permute.xlu0 %1550
      %1552 = vrot.lane.b32.xlu0 %v1061, 32
      %v1553 = vpop.permute.xlu0 %1552
      %1554 = vrot.lane.b32.xlu0 %v1062, 32
      %v1555 = vpop.permute.xlu0 %1554
      %1556 = vrot.lane.b32.xlu0 %v1063, 32
      %v1557 = vpop.permute.xlu0 %1556
      %1558 = vrot.lane.b32.xlu0 %v1064, 32
      %v1559 = vpop.permute.xlu0 %1558
      %1560 = vrot.lane.b32.xlu0 %v1065, 32
      %v1561 = vpop.permute.xlu0 %1560
      %1562 = vrot.lane.b32.xlu0 %v1066, 32
      %v1563 = vpop.permute.xlu0 %1562
      %1564 = vrot.lane.b32.xlu0 %v1067, 32
      %v1565 = vpop.permute.xlu0 %1564
      %1566 = vrot.lane.b32.xlu0 %v1068, 32
      %v1567 = vpop.permute.xlu0 %1566
      %1568 = vrot.lane.b32.xlu0 %v1069, 32
      %v1569 = vpop.permute.xlu0 %1568
      %1570 = vrot.lane.b32.xlu0 %v1070, 32
      %v1571 = vpop.permute.xlu0 %1570
      %1572 = vrot.lane.b32.xlu0 %v1071, 32
      %v1573 = vpop.permute.xlu0 %1572
      %1574 = vrot.lane.b32.xlu0 %v1072, 32
      %v1575 = vpop.permute.xlu0 %1574
      %1576 = vrot.lane.b32.xlu0 %v1073, 32
      %v1577 = vpop.permute.xlu0 %1576
      %1578 = vrot.lane.b32.xlu0 %v1311, 32
      %v1579 = vpop.permute.xlu0 %1578
      %1580 = vrot.lane.b32.xlu0 %v1549, 32
      %v1581 = vpop.permute.xlu0 %1580
      %vm1598 = vcmask 294144
      %1599 = vst.msk [vmem:[#allocation2] sm:$0xff] %vm1598, %v1551
      %1600 = vst.msk [vmem:[#allocation2 + $0x8] sm:$0xff] %vm1598, %v1553
      %1601 = vst.msk [vmem:[#allocation2 + $0x10] sm:$0xff] %vm1598, %v1555
      %1602 = vst.msk [vmem:[#allocation2 + $0x18] sm:$0xff] %vm1598, %v1557
      %1603 = vst.msk [vmem:[#allocation2 + $0x20] sm:$0xff] %vm1598, %v1559
      %1604 = vst.msk [vmem:[#allocation2 + $0x28] sm:$0xff] %vm1598, %v1561
      %1605 = vst.msk [vmem:[#allocation2 + $0x30] sm:$0xff] %vm1598, %v1563
      %1606 = vst.msk [vmem:[#allocation2 + $0x38] sm:$0xff] %vm1598, %v1565
      %1607 = vst.msk [vmem:[#allocation2 + $0x40] sm:$0xff] %vm1598, %v1567
      %1608 = vst.msk [vmem:[#allocation2 + $0x48] sm:$0xff] %vm1598, %v1569
      %1609 = vst.msk [vmem:[#allocation2 + $0x50] sm:$0xff] %vm1598, %v1571
      %1610 = vst.msk [vmem:[#allocation2 + $0x58] sm:$0xff] %vm1598, %v1573
      %1611 = vst.msk [vmem:[#allocation2 + $0x60] sm:$0xff] %vm1598, %v1575
      %1612 = vst.msk [vmem:[#allocation2 + $0x68] sm:$0xff] %vm1598, %v1577
      %1613 = vst.msk [vmem:[#allocation2 + $0x70] sm:$0xff] %vm1598, %v1579
      %1614 = vst.msk [vmem:[#allocation2 + $0x78] sm:$0xff] %vm1598, %v1581
      %v1615 = vld [vmem:[#allocation2] sm:$0xff]
      %v1616 = vld [vmem:[#allocation2 + $0x8] sm:$0xff]
      %v1617 = vld [vmem:[#allocation2 + $0x10] sm:$0xff]
      %v1618 = vld [vmem:[#allocation2 + $0x18] sm:$0xff]
      %v1619 = vld [vmem:[#allocation2 + $0x20] sm:$0xff]
      %v1620 = vld [vmem:[#allocation2 + $0x28] sm:$0xff]
      %v1621 = vld [vmem:[#allocation2 + $0x30] sm:$0xff]
      %v1622 = vld [vmem:[#allocation2 + $0x38] sm:$0xff]
      %v1623 = vld [vmem:[#allocation2 + $0x40] sm:$0xff]
      %v1624 = vld [vmem:[#allocation2 + $0x48] sm:$0xff]
      %v1625 = vld [vmem:[#allocation2 + $0x50] sm:$0xff]
      %v1626 = vld [vmem:[#allocation2 + $0x58] sm:$0xff]
      %v1627 = vld [vmem:[#allocation2 + $0x60] sm:$0xff]
      %v1628 = vld [vmem:[#allocation2 + $0x68] sm:$0xff]
      %v1629 = vld [vmem:[#allocation2 + $0x70] sm:$0xff]
      %v1630 = vld [vmem:[#allocation2 + $0x78] sm:$0xff]
      %v1631 = vld [vmem:[%s211] sm:$0xf]
      %v1632 = vld [vmem:[%s211 + $0x4] sm:$0xf]
      %v1633 = vld [vmem:[%s211 + $0x8] sm:$0xf]
      %v1634 = vld [vmem:[%s211 + $0xc] sm:$0xf]
      %v1635 = vld [vmem:[%s211 + $0x10] sm:$0x3]
      %v1641 = vunpack.c.l.b16 %v1631
      %v1642 = vunpack.c.l.b16 %v1632
      %v1643 = vunpack.c.l.b16 %v1633
      %v1644 = vunpack.c.l.b16 %v1634
      %v1645 = vunpack.c.l.b16 %v1635
      %v1646 = vpack.c.b16 %v1642, %v1641
      %v1647 = vpack.c.b16 %v1644, %v1643
      %v1648 = vpack.c.b16 %v1645, %v1645
      %vm1651 = vcmask 293888
      %v1653 = vsel %vm1651, %v1615, 0
      %v1656 = vsel %vm1651, %v1616, 0
      %v1659 = vsel %vm1651, %v1617, 0
      %v1662 = vsel %vm1651, %v1618, 0
      %v1665 = vsel %vm1651, %v1619, 0
      %v1668 = vsel %vm1651, %v1620, 0
      %v1671 = vsel %vm1651, %v1621, 0
      %v1674 = vsel %vm1651, %v1622, 0
      %v1677 = vsel %vm1651, %v1623, 0
      %v1680 = vsel %vm1651, %v1624, 0
      %v1683 = vsel %vm1651, %v1625, 0
      %v1686 = vsel %vm1651, %v1626, 0
      %v1689 = vsel %vm1651, %v1627, 0
      %v1692 = vsel %vm1651, %v1628, 0
      %v1695 = vsel %vm1651, %v1629, 0
      %v1698 = vsel %vm1651, %v1630, 0
      %vm1700 = vcmask 1041408
      %v1702 = vsel %vm1700, %v1648, 0
      %1704 = vmatprep.subr.bf16.mxu0 0
      %1705 = vmatpush1.bf16.msra.mxu0 %v1646
      %1706 = vmatprep.subr.bf16.mxu0 0
      %1707 = vmatpush1.bf16.msra.mxu0 %v1647
      %1708 = vmatprep.subr.bf16.mxu0 0
      %1709 = vmatpush1.bf16.msra.mxu0 %v1702
      %1710 = vmatprep.subr.bf16.mxu0 0
      %1711 = vmatpush1.bf16.msra.mxu0 0
      %1712 = vmatprep.subr.bf16.mxu0 0
      %1713 = vmatpush1.bf16.msra.mxu0 0
      %1714 = vmatprep.subr.bf16.mxu0 0
      %1715 = vmatpush1.bf16.msra.mxu0 0
      %1716 = vmatprep.subr.bf16.mxu0 0
      %1717 = vmatpush1.bf16.msra.mxu0 0
      %1718 = vmatprep.subr.bf16.mxu0 0
      %1719 = vmatpush1.bf16.msra.mxu0 0
      %1720 = vmatprep.subr.bf16.mxu0 0
      %1721 = vmatpush1.bf16.msra.mxu0 0
      %1722 = vmatprep.subr.bf16.mxu0 0
      %1723 = vmatpush1.bf16.msra.mxu0 0
      %1724 = vmatprep.subr.bf16.mxu0 0
      %1725 = vmatpush1.bf16.msra.mxu0 0
      %1726 = vmatprep.subr.bf16.mxu0 0
      %1727 = vmatpush1.bf16.msra.mxu0 0
      %1728 = vmatprep.subr.bf16.mxu0 0
      %1729 = vmatpush1.bf16.msra.mxu0 0
      %1730 = vmatprep.subr.bf16.mxu0 0
      %1731 = vmatpush1.bf16.msra.mxu0 0
      %1732 = vmatprep.subr.bf16.mxu0 0
      %1733 = vmatpush1.bf16.msra.mxu0 0
      %1734 = vmatprep.subr.bf16.mxu0 0
      %1735 = vmatpush1.bf16.msra.mxu0 0
      %1736 = vmatprep.mubr.bf16.mxu0 0
      %1737 = vmatmul.mubr.bf16.gmra.mrb[0].mxu0 %v1653
      %v1738 = vpop.f32.mrb[0].mxu0
      %v1739 = vadd.f32 0.0, %v1738
      %v1740 = vpop.f32.mrb[0].mxu0
      %v1741 = vpop.f32.mrb[0].mxu0
      %v1742 = vadd.f32 0.0, %v1741
      %v1743 = vpop.f32.mrb[0].mxu0
      %1744 = vmatprep.mubr.bf16.mxu0 0
      %1745 = vmatmul.mubr.bf16.gmra.mrb[0].mxu0 %v1656
      %v1746 = vpop.f32.mrb[0].mxu0
      %v1747 = vadd.f32 0.0, %v1746
      %v1748 = vpop.f32.mrb[0].mxu0
      %v1749 = vpop.f32.mrb[0].mxu0
      %v1750 = vadd.f32 0.0, %v1749
      %v1751 = vpop.f32.mrb[0].mxu0
      %1752 = vmatprep.mubr.bf16.mxu0 0
      %1753 = vmatmul.mubr.bf16.gmra.mrb[0].mxu0 %v1659
      %v1754 = vpop.f32.mrb[0].mxu0
      %v1755 = vadd.f32 0.0, %v1754
      %v1756 = vpop.f32.mrb[0].mxu0
      %v1757 = vpop.f32.mrb[0].mxu0
      %v1758 = vadd.f32 0.0, %v1757
      %v1759 = vpop.f32.mrb[0].mxu0
      %1760 = vmatprep.mubr.bf16.mxu0 0
      %1761 = vmatmul.mubr.bf16.gmra.mrb[0].mxu0 %v1662
      %v1762 = vpop.f32.mrb[0].mxu0
      %v1763 = vadd.f32 0.0, %v1762
      %v1764 = vpop.f32.mrb[0].mxu0
      %v1765 = vpop.f32.mrb[0].mxu0
      %v1766 = vadd.f32 0.0, %v1765
      %v1767 = vpop.f32.mrb[0].mxu0
      %1768 = vmatprep.mubr.bf16.mxu0 0
      %1769 = vmatmul.mubr.bf16.gmra.mrb[0].mxu0 %v1665
      %v1770 = vpop.f32.mrb[0].mxu0
      %v1771 = vadd.f32 0.0, %v1770
      %v1772 = vpop.f32.mrb[0].mxu0
      %v1773 = vpop.f32.mrb[0].mxu0
      %v1774 = vadd.f32 0.0, %v1773
      %v1775 = vpop.f32.mrb[0].mxu0
      %1776 = vmatprep.mubr.bf16.mxu0 0
      %1777 = vmatmul.mubr.bf16.gmra.mrb[0].mxu0 %v1668
      %v1778 = vpop.f32.mrb[0].mxu0
      %v1779 = vadd.f32 0.0, %v1778
      %v1780 = vpop.f32.mrb[0].mxu0
      %v1781 = vpop.f32.mrb[0].mxu0
      %v1782 = vadd.f32 0.0, %v1781
      %v1783 = vpop.f32.mrb[0].mxu0
      %1784 = vmatprep.mubr.bf16.mxu0 0
      %1785 = vmatmul.mubr.bf16.gmra.mrb[0].mxu0 %v1671
      %v1786 = vpop.f32.mrb[0].mxu0
      %v1787 = vadd.f32 0.0, %v1786
      %v1788 = vpop.f32.mrb[0].mxu0
      %v1789 = vpop.f32.mrb[0].mxu0
      %v1790 = vadd.f32 0.0, %v1789
      %v1791 = vpop.f32.mrb[0].mxu0
      %1792 = vmatprep.mubr.bf16.mxu0 0
      %1793 = vmatmul.mubr.bf16.gmra.mrb[0].mxu0 %v1674
      %v1794 = vpop.f32.mrb[0].mxu0
      %v1795 = vadd.f32 0.0, %v1794
      %v1796 = vpop.f32.mrb[0].mxu0
      %v1797 = vpop.f32.mrb[0].mxu0
      %v1798 = vadd.f32 0.0, %v1797
      %v1799 = vpop.f32.mrb[0].mxu0
      %1800 = vmatprep.mubr.bf16.mxu0 0
      %1801 = vmatmul.mubr.bf16.gmra.mrb[0].mxu0 %v1677
      %v1802 = vpop.f32.mrb[0].mxu0
      %v1803 = vadd.f32 0.0, %v1802
      %v1804 = vpop.f32.mrb[0].mxu0
      %v1805 = vpop.f32.mrb[0].mxu0
      %v1806 = vadd.f32 0.0, %v1805
      %v1807 = vpop.f32.mrb[0].mxu0
      %1808 = vmatprep.mubr.bf16.mxu0 0
      %1809 = vmatmul.mubr.bf16.gmra.mrb[0].mxu0 %v1680
      %v1810 = vpop.f32.mrb[0].mxu0
      %v1811 = vadd.f32 0.0, %v1810
      %v1812 = vpop.f32.mrb[0].mxu0
      %v1813 = vpop.f32.mrb[0].mxu0
      %v1814 = vadd.f32 0.0, %v1813
      %v1815 = vpop.f32.mrb[0].mxu0
      %1816 = vmatprep.mubr.bf16.mxu0 0
      %1817 = vmatmul.mubr.bf16.gmra.mrb[0].mxu0 %v1683
      %v1818 = vpop.f32.mrb[0].mxu0
      %v1819 = vadd.f32 0.0, %v1818
      %v1820 = vpop.f32.mrb[0].mxu0
      %v1821 = vpop.f32.mrb[0].mxu0
      %v1822 = vadd.f32 0.0, %v1821
      %v1823 = vpop.f32.mrb[0].mxu0
      %1824 = vmatprep.mubr.bf16.mxu0 0
      %1825 = vmatmul.mubr.bf16.gmra.mrb[0].mxu0 %v1686
      %v1826 = vpop.f32.mrb[0].mxu0
      %v1827 = vadd.f32 0.0, %v1826
      %v1828 = vpop.f32.mrb[0].mxu0
      %v1829 = vpop.f32.mrb[0].mxu0
      %v1830 = vadd.f32 0.0, %v1829
      %v1831 = vpop.f32.mrb[0].mxu0
      %1832 = vmatprep.mubr.bf16.mxu0 0
      %1833 = vmatmul.mubr.bf16.gmra.mrb[0].mxu0 %v1689
      %v1834 = vpop.f32.mrb[0].mxu0
      %v1835 = vadd.f32 0.0, %v1834
      %v1836 = vpop.f32.mrb[0].mxu0
      %v1837 = vpop.f32.mrb[0].mxu0
      %v1838 = vadd.f32 0.0, %v1837
      %v1839 = vpop.f32.mrb[0].mxu0
      %1840 = vmatprep.mubr.bf16.mxu0 0
      %1841 = vmatmul.mubr.bf16.gmra.mrb[0].mxu0 %v1692
      %v1842 = vpop.f32.mrb[0].mxu0
      %v1843 = vadd.f32 0.0, %v1842
      %v1844 = vpop.f32.mrb[0].mxu0
      %v1845 = vpop.f32.mrb[0].mxu0
      %v1846 = vadd.f32 0.0, %v1845
      %v1847 = vpop.f32.mrb[0].mxu0
      %1848 = vmatprep.mubr.bf16.mxu0 0
      %1849 = vmatmul.mubr.bf16.gmra.mrb[0].mxu0 %v1695
      %v1850 = vpop.f32.mrb[0].mxu0
      %v1851 = vadd.f32 0.0, %v1850
      %v1852 = vpop.f32.mrb[0].mxu0
      %v1853 = vpop.f32.mrb[0].mxu0
      %v1854 = vadd.f32 0.0, %v1853
      %v1855 = vpop.f32.mrb[0].mxu0
      %1856 = vmatprep.mubr.bf16.mxu0 0
      %1857 = vmatmul.mubr.bf16.gmra.mrb[0].mxu0 %v1698
      %v1858 = vpop.f32.mrb[0].mxu0
      %v1859 = vadd.f32 0.0, %v1858
      %v1860 = vpop.f32.mrb[0].mxu0
      %v1861 = vpop.f32.mrb[0].mxu0
      %v1862 = vadd.f32 0.0, %v1861
      %v1863 = vpop.f32.mrb[0].mxu0
      %1864 = vdwg.mxu0
      %v1865 = vpack.c.bf16 %v1742, %v1739
      %v1866 = vpack.c.bf16 %v1750, %v1747
      %v1867 = vpack.c.bf16 %v1758, %v1755
      %v1868 = vpack.c.bf16 %v1766, %v1763
      %v1869 = vpack.c.bf16 %v1774, %v1771
      %v1870 = vpack.c.bf16 %v1782, %v1779
      %v1871 = vpack.c.bf16 %v1790, %v1787
      %v1872 = vpack.c.bf16 %v1798, %v1795
      %v1873 = vpack.c.bf16 %v1806, %v1803
      %v1874 = vpack.c.bf16 %v1814, %v1811
      %v1875 = vpack.c.bf16 %v1822, %v1819
      %v1876 = vpack.c.bf16 %v1830, %v1827
      %v1877 = vpack.c.bf16 %v1838, %v1835
      %v1878 = vpack.c.bf16 %v1846, %v1843
      %v1879 = vpack.c.bf16 %v1854, %v1851
      %v1880 = vpack.c.bf16 %v1862, %v1859
      %v1897 = vunpack.c.l.b16 %v1865
      %v1898 = vunpack.c.h.b16 %v1865
      %v1899 = vunpack.c.l.b16 %v1866
      %v1900 = vunpack.c.h.b16 %v1866
      %v1901 = vunpack.c.l.b16 %v1867
      %v1902 = vunpack.c.h.b16 %v1867
      %v1903 = vunpack.c.l.b16 %v1868
      %v1904 = vunpack.c.h.b16 %v1868
      %v1905 = vunpack.c.l.b16 %v1869
      %v1906 = vunpack.c.h.b16 %v1869
      %v1907 = vunpack.c.l.b16 %v1870
      %v1908 = vunpack.c.h.b16 %v1870
      %v1909 = vunpack.c.l.b16 %v1871
      %v1910 = vunpack.c.h.b16 %v1871
      %v1911 = vunpack.c.l.b16 %v1872
      %v1912 = vunpack.c.h.b16 %v1872
      %v1913 = vunpack.c.l.b16 %v1873
      %v1914 = vunpack.c.h.b16 %v1873
      %v1915 = vunpack.c.l.b16 %v1874
      %v1916 = vunpack.c.h.b16 %v1874
      %v1917 = vunpack.c.l.b16 %v1875
      %v1918 = vunpack.c.h.b16 %v1875
      %v1919 = vunpack.c.l.b16 %v1876
      %v1920 = vunpack.c.h.b16 %v1876
      %v1921 = vunpack.c.l.b16 %v1877
      %v1922 = vunpack.c.h.b16 %v1877
      %v1923 = vunpack.c.l.b16 %v1878
      %v1924 = vunpack.c.h.b16 %v1878
      %v1925 = vunpack.c.l.b16 %v1879
      %v1926 = vunpack.c.h.b16 %v1879
      %v1927 = vunpack.c.l.b16 %v1880
      %v1928 = vunpack.c.h.b16 %v1880
      %v1929 = vpack.c.b16 %v1897, %v1897
      %v1930 = vpack.c.b16 %v1898, %v1898
      %v1931 = vpack.c.b16 %v1899, %v1899
      %v1932 = vpack.c.b16 %v1900, %v1900
      %v1933 = vpack.c.b16 %v1901, %v1901
      %v1934 = vpack.c.b16 %v1902, %v1902
      %v1935 = vpack.c.b16 %v1903, %v1903
      %v1936 = vpack.c.b16 %v1904, %v1904
      %v1937 = vpack.c.b16 %v1905, %v1905
      %v1938 = vpack.c.b16 %v1906, %v1906
      %v1939 = vpack.c.b16 %v1907, %v1907
      %v1940 = vpack.c.b16 %v1908, %v1908
      %v1941 = vpack.c.b16 %v1909, %v1909
      %v1942 = vpack.c.b16 %v1910, %v1910
      %v1943 = vpack.c.b16 %v1911, %v1911
      %v1944 = vpack.c.b16 %v1912, %v1912
      %v1945 = vpack.c.b16 %v1913, %v1913
      %v1946 = vpack.c.b16 %v1914, %v1914
      %v1947 = vpack.c.b16 %v1915, %v1915
      %v1948 = vpack.c.b16 %v1916, %v1916
      %v1949 = vpack.c.b16 %v1917, %v1917
      %v1950 = vpack.c.b16 %v1918, %v1918
      %v1951 = vpack.c.b16 %v1919, %v1919
      %v1952 = vpack.c.b16 %v1920, %v1920
      %v1953 = vpack.c.b16 %v1921, %v1921
      %v1954 = vpack.c.b16 %v1922, %v1922
      %v1955 = vpack.c.b16 %v1923, %v1923
      %v1956 = vpack.c.b16 %v1924, %v1924
      %v1957 = vpack.c.b16 %v1925, %v1925
      %v1958 = vpack.c.b16 %v1926, %v1926
      %v1959 = vpack.c.b16 %v1927, %v1927
      %v1960 = vpack.c.b16 %v1928, %v1928
      %vm1993 = vcmask 257024
      %1994 = vst.msk [vmem:[%s219] sm:$0xf] %vm1993, %v1929
      %1995 = vst.msk [vmem:[%s219 + $0x4] sm:$0xf] %vm1993, %v1930
      %1996 = vst.msk [vmem:[%s219 + $0x8] sm:$0xf] %vm1993, %v1931
      %1997 = vst.msk [vmem:[%s219 + $0xc] sm:$0xf] %vm1993, %v1932
      %1998 = vst.msk [vmem:[%s219 + $0x10] sm:$0xf] %vm1993, %v1933
      %1999 = vst.msk [vmem:[%s219 + $0x14] sm:$0xf] %vm1993, %v1934
      %2000 = vst.msk [vmem:[%s219 + $0x18] sm:$0xf] %vm1993, %v1935
      %2001 = vst.msk [vmem:[%s219 + $0x1c] sm:$0xf] %vm1993, %v1936
      %2002 = vst.msk [vmem:[%s219 + $0x20] sm:$0xf] %vm1993, %v1937
      %2003 = vst.msk [vmem:[%s219 + $0x24] sm:$0xf] %vm1993, %v1938
      %2004 = vst.msk [vmem:[%s219 + $0x28] sm:$0xf] %vm1993, %v1939
      %2005 = vst.msk [vmem:[%s219 + $0x2c] sm:$0xf] %vm1993, %v1940
      %2006 = vst.msk [vmem:[%s219 + $0x30] sm:$0xf] %vm1993, %v1941
      %2007 = vst.msk [vmem:[%s219 + $0x34] sm:$0xf] %vm1993, %v1942
      %2008 = vst.msk [vmem:[%s219 + $0x38] sm:$0xf] %vm1993, %v1943
      %2009 = vst.msk [vmem:[%s219 + $0x3c] sm:$0xf] %vm1993, %v1944
      %2010 = vst.msk [vmem:[%s219 + $0x40] sm:$0xf] %vm1993, %v1945
      %2011 = vst.msk [vmem:[%s219 + $0x44] sm:$0xf] %vm1993, %v1946
      %2012 = vst.msk [vmem:[%s219 + $0x48] sm:$0xf] %vm1993, %v1947
      %2013 = vst.msk [vmem:[%s219 + $0x4c] sm:$0xf] %vm1993, %v1948
      %2014 = vst.msk [vmem:[%s219 + $0x50] sm:$0xf] %vm1993, %v1949
      %2015 = vst.msk [vmem:[%s219 + $0x54] sm:$0xf] %vm1993, %v1950
      %2016 = vst.msk [vmem:[%s219 + $0x58] sm:$0xf] %vm1993, %v1951
      %2017 = vst.msk [vmem:[%s219 + $0x5c] sm:$0xf] %vm1993, %v1952
      %2018 = vst.msk [vmem:[%s219 + $0x60] sm:$0xf] %vm1993, %v1953
      %2019 = vst.msk [vmem:[%s219 + $0x64] sm:$0xf] %vm1993, %v1954
      %2020 = vst.msk [vmem:[%s219 + $0x68] sm:$0xf] %vm1993, %v1955
      %2021 = vst.msk [vmem:[%s219 + $0x6c] sm:$0xf] %vm1993, %v1956
      %2022 = vst.msk [vmem:[%s219 + $0x70] sm:$0xf] %vm1993, %v1957
      %2023 = vst.msk [vmem:[%s219 + $0x74] sm:$0xf] %vm1993, %v1958
      %2024 = vst.msk [vmem:[%s219 + $0x78] sm:$0xf] %vm1993, %v1959
      %2025 = vst.msk [vmem:[%s219 + $0x7c] sm:$0xf] %vm1993, %v1960
      %vm2026 = vcmask 261120
      %v2027 = vsel %vm2026, %v1739, 0.0
      %v2028 = vsel %vm2026, %v1742, 0.0
      %v2029 = vadd.f32 %v2027, %v2028
      %v2030 = vsel %vm2026, %v1747, 0.0
      %v2031 = vadd.f32 %v2029, %v2030
      %v2032 = vsel %vm2026, %v1750, 0.0
      %v2033 = vadd.f32 %v2031, %v2032
      %v2034 = vsel %vm2026, %v1755, 0.0
      %v2035 = vadd.f32 %v2033, %v2034
      %v2036 = vsel %vm2026, %v1758, 0.0
      %v2037 = vadd.f32 %v2035, %v2036
      %v2038 = vsel %vm2026, %v1763, 0.0
      %v2039 = vadd.f32 %v2037, %v2038
      %v2040 = vsel %vm2026, %v1766, 0.0
      %v2041 = vadd.f32 %v2039, %v2040
      %v2042 = vsel %vm2026, %v1771, 0.0
      %v2043 = vadd.f32 %v2041, %v2042
      %v2044 = vsel %vm2026, %v1774, 0.0
      %v2045 = vadd.f32 %v2043, %v2044
      %v2046 = vsel %vm2026, %v1779, 0.0
      %v2047 = vadd.f32 %v2045, %v2046
      %v2048 = vsel %vm2026, %v1782, 0.0
      %v2049 = vadd.f32 %v2047, %v2048
      %v2050 = vsel %vm2026, %v1787, 0.0
      %v2051 = vadd.f32 %v2049, %v2050
      %v2052 = vsel %vm2026, %v1790, 0.0
      %v2053 = vadd.f32 %v2051, %v2052
      %v2054 = vsel %vm2026, %v1795, 0.0
      %v2055 = vadd.f32 %v2053, %v2054
      %v2056 = vsel %vm2026, %v1798, 0.0
      %v2057 = vadd.f32 %v2055, %v2056
      %v2058 = vsel %vm2026, %v1803, 0.0
      %v2059 = vadd.f32 %v2057, %v2058
      %v2060 = vsel %vm2026, %v1806, 0.0
      %v2061 = vadd.f32 %v2059, %v2060
      %v2062 = vsel %vm2026, %v1811, 0.0
      %v2063 = vadd.f32 %v2061, %v2062
      %v2064 = vsel %vm2026, %v1814, 0.0
      %v2065 = vadd.f32 %v2063, %v2064
      %v2066 = vsel %vm2026, %v1819, 0.0
      %v2067 = vadd.f32 %v2065, %v2066
      %v2068 = vsel %vm2026, %v1822, 0.0
      %v2069 = vadd.f32 %v2067, %v2068
      %v2070 = vsel %vm2026, %v1827, 0.0
      %v2071 = vadd.f32 %v2069, %v2070
      %v2072 = vsel %vm2026, %v1830, 0.0
      %v2073 = vadd.f32 %v2071, %v2072
      %v2074 = vsel %vm2026, %v1835, 0.0
      %v2075 = vadd.f32 %v2073, %v2074
      %v2076 = vsel %vm2026, %v1838, 0.0
      %v2077 = vadd.f32 %v2075, %v2076
      %v2078 = vsel %vm2026, %v1843, 0.0
      %v2079 = vadd.f32 %v2077, %v2078
      %v2080 = vsel %vm2026, %v1846, 0.0
      %v2081 = vadd.f32 %v2079, %v2080
      %v2082 = vsel %vm2026, %v1851, 0.0
      %v2083 = vadd.f32 %v2081, %v2082
      %v2084 = vsel %vm2026, %v1854, 0.0
      %v2085 = vadd.f32 %v2083, %v2084
      %v2086 = vsel %vm2026, %v1859, 0.0
      %v2087 = vadd.f32 %v2085, %v2086
      %v2088 = vsel %vm2026, %v1862, 0.0
      %v2089 = vadd.f32 %v2087, %v2088
      %v2090 = vrot.slane %v2089, 4
      %v2091 = vadd.f32 %v2089, %v2090
      %v2092 = vrot.slane %v2091, 2
      %v2093 = vadd.f32 %v2091, %v2092
      %v2094 = vrot.slane %v2093, 1
      %v2095 = vadd.f32 %v2093, %v2094
      %v2096 = vmul.f32 %v2095, 0.00390625
      %v2097 = vsub.f32 %v1739, %v2096
      %v2098 = vsub.f32 %v1742, %v2096
      %v2099 = vsub.f32 %v1747, %v2096
      %v2100 = vsub.f32 %v1750, %v2096
      %v2101 = vsub.f32 %v1755, %v2096
      %v2102 = vsub.f32 %v1758, %v2096
      %v2103 = vsub.f32 %v1763, %v2096
      %v2104 = vsub.f32 %v1766, %v2096
      %v2105 = vsub.f32 %v1771, %v2096
      %v2106 = vsub.f32 %v1774, %v2096
      %v2107 = vsub.f32 %v1779, %v2096
      %v2108 = vsub.f32 %v1782, %v2096
      %v2109 = vsub.f32 %v1787, %v2096
      %v2110 = vsub.f32 %v1790, %v2096
      %v2111 = vsub.f32 %v1795, %v2096
      %v2112 = vsub.f32 %v1798, %v2096
      %v2113 = vsub.f32 %v1803, %v2096
      %v2114 = vsub.f32 %v1806, %v2096
      %v2115 = vsub.f32 %v1811, %v2096
      %v2116 = vsub.f32 %v1814, %v2096
      %v2117 = vsub.f32 %v1819, %v2096
      %v2118 = vsub.f32 %v1822, %v2096
      %v2119 = vsub.f32 %v1827, %v2096
      %v2120 = vsub.f32 %v1830, %v2096
      %v2121 = vsub.f32 %v1835, %v2096
      %v2122 = vsub.f32 %v1838, %v2096
      %v2123 = vsub.f32 %v1843, %v2096
      %v2124 = vsub.f32 %v1846, %v2096
      %v2125 = vsub.f32 %v1851, %v2096
      %v2126 = vsub.f32 %v1854, %v2096
      %v2127 = vsub.f32 %v1859, %v2096
      %v2128 = vsub.f32 %v1862, %v2096
      %v2129 = vmul.f32 %v2097, %v2097
      %v2130 = vmul.f32 %v2098, %v2098
      %v2131 = vmul.f32 %v2099, %v2099
      %v2132 = vmul.f32 %v2100, %v2100
      %v2133 = vmul.f32 %v2101, %v2101
      %v2134 = vmul.f32 %v2102, %v2102
      %v2135 = vmul.f32 %v2103, %v2103
      %v2136 = vmul.f32 %v2104, %v2104
      %v2137 = vmul.f32 %v2105, %v2105
      %v2138 = vmul.f32 %v2106, %v2106
      %v2139 = vmul.f32 %v2107, %v2107
      %v2140 = vmul.f32 %v2108, %v2108
      %v2141 = vmul.f32 %v2109, %v2109
      %v2142 = vmul.f32 %v2110, %v2110
      %v2143 = vmul.f32 %v2111, %v2111
      %v2144 = vmul.f32 %v2112, %v2112
      %v2145 = vmul.f32 %v2113, %v2113
      %v2146 = vmul.f32 %v2114, %v2114
      %v2147 = vmul.f32 %v2115, %v2115
      %v2148 = vmul.f32 %v2116, %v2116
      %v2149 = vmul.f32 %v2117, %v2117
      %v2150 = vmul.f32 %v2118, %v2118
      %v2151 = vmul.f32 %v2119, %v2119
      %v2152 = vmul.f32 %v2120, %v2120
      %v2153 = vmul.f32 %v2121, %v2121
      %v2154 = vmul.f32 %v2122, %v2122
      %v2155 = vmul.f32 %v2123, %v2123
      %v2156 = vmul.f32 %v2124, %v2124
      %v2157 = vmul.f32 %v2125, %v2125
      %v2158 = vmul.f32 %v2126, %v2126
      %v2159 = vmul.f32 %v2127, %v2127
      %v2160 = vmul.f32 %v2128, %v2128
      %v2161 = vsel %vm2026, %v2129, 0.0
      %v2162 = vsel %vm2026, %v2130, 0.0
      %v2163 = vadd.f32 %v2161, %v2162
      %v2164 = vsel %vm2026, %v2131, 0.0
      %v2165 = vadd.f32 %v2163, %v2164
      %v2166 = vsel %vm2026, %v2132, 0.0
      %v2167 = vadd.f32 %v2165, %v2166
      %v2168 = vsel %vm2026, %v2133, 0.0
      %v2169 = vadd.f32 %v2167, %v2168
      %v2170 = vsel %vm2026, %v2134, 0.0
      %v2171 = vadd.f32 %v2169, %v2170
      %v2172 = vsel %vm2026, %v2135, 0.0
      %v2173 = vadd.f32 %v2171, %v2172
      %v2174 = vsel %vm2026, %v2136, 0.0
      %v2175 = vadd.f32 %v2173, %v2174
      %v2176 = vsel %vm2026, %v2137, 0.0
      %v2177 = vadd.f32 %v2175, %v2176
      %v2178 = vsel %vm2026, %v2138, 0.0
      %v2179 = vadd.f32 %v2177, %v2178
      %v2180 = vsel %vm2026, %v2139, 0.0
      %v2181 = vadd.f32 %v2179, %v2180
      %v2182 = vsel %vm2026, %v2140, 0.0
      %v2183 = vadd.f32 %v2181, %v2182
      %v2184 = vsel %vm2026, %v2141, 0.0
      %v2185 = vadd.f32 %v2183, %v2184
      %v2186 = vsel %vm2026, %v2142, 0.0
      %v2187 = vadd.f32 %v2185, %v2186
      %v2188 = vsel %vm2026, %v2143, 0.0
      %v2189 = vadd.f32 %v2187, %v2188
      %v2190 = vsel %vm2026, %v2144, 0.0
      %v2191 = vadd.f32 %v2189, %v2190
      %v2192 = vsel %vm2026, %v2145, 0.0
      %v2193 = vadd.f32 %v2191, %v2192
      %v2194 = vsel %vm2026, %v2146, 0.0
      %v2195 = vadd.f32 %v2193, %v2194
      %v2196 = vsel %vm2026, %v2147, 0.0
      %v2197 = vadd.f32 %v2195, %v2196
      %v2198 = vsel %vm2026, %v2148, 0.0
      %v2199 = vadd.f32 %v2197, %v2198
      %v2200 = vsel %vm2026, %v2149, 0.0
      %v2201 = vadd.f32 %v2199, %v2200
      %v2202 = vsel %vm2026, %v2150, 0.0
      %v2203 = vadd.f32 %v2201, %v2202
      %v2204 = vsel %vm2026, %v2151, 0.0
      %v2205 = vadd.f32 %v2203, %v2204
      %v2206 = vsel %vm2026, %v2152, 0.0
      %v2207 = vadd.f32 %v2205, %v2206
      %v2208 = vsel %vm2026, %v2153, 0.0
      %v2209 = vadd.f32 %v2207, %v2208
      %v2210 = vsel %vm2026, %v2154, 0.0
      %v2211 = vadd.f32 %v2209, %v2210
      %v2212 = vsel %vm2026, %v2155, 0.0
      %v2213 = vadd.f32 %v2211, %v2212
      %v2214 = vsel %vm2026, %v2156, 0.0
      %v2215 = vadd.f32 %v2213, %v2214
      %v2216 = vsel %vm2026, %v2157, 0.0
      %v2217 = vadd.f32 %v2215, %v2216
      %v2218 = vsel %vm2026, %v2158, 0.0
      %v2219 = vadd.f32 %v2217, %v2218
      %v2220 = vsel %vm2026, %v2159, 0.0
      %v2221 = vadd.f32 %v2219, %v2220
      %v2222 = vsel %vm2026, %v2160, 0.0
      %v2223 = vadd.f32 %v2221, %v2222
      %v2224 = vrot.slane %v2223, 4
      %v2225 = vadd.f32 %v2223, %v2224
      %v2226 = vrot.slane %v2225, 2
      %v2227 = vadd.f32 %v2225, %v2226
      %v2228 = vrot.slane %v2227, 1
      %v2229 = vadd.f32 %v2227, %v2228
      %vm2230 = vcmask 253952
      %2231 = vst.msk [vmem:[%s226] sm:$0x1] %vm2230, %v2095
      %2232 = vst.msk [vmem:[%s226 + $0x1] sm:$0x1] %vm2230, %v2229
      %p2233 = scmp.lt.s32.totalorder %s20, 1
      %s2234 = scalar_select %p2233, %s20, 1
      %p2235 = scmp.lt.s32.totalorder %s19, 0
      %s2236 = scalar_select %p2235, %s19, 0
      %s2237 = smul.addr %s2234, 32
      %s2238 = sadd.s32 %s2236, %s2237
      %s2239 = smul.addr %s2238, 4
      %s2240 = scalar_lea.vmem %s2, %s2239
      %p2241 = scmp.lt.s32.totalorder %s20, 1
      %s2242 = scalar_select %p2241, %s20, 1
      %p2243 = scmp.lt.s32.totalorder %s19, 0
      %s2244 = scalar_select %p2243, %s19, 0
      %s2245 = sadd.s32 %s2244, %s2242
      %s2246 = smul.addr %s2245, 2
      %s2247 = scalar_lea.vmem %s3, %s2246
      // Predicated region
      $region29: #{convolution_block_forward.4} parent=27 // pred_check
        %p2248 = pneg %p99
      $region30: #{convolution_block_forward.4} parent=27 // pred_check_branch
        %2250 = sbr.rel (%p2248) target = $region32
      $region31: #{convolution_block_forward.4} parent=27 // pred_region
        _
      $region32: #{convolution_block_forward.4} parent=27 // pred_fallthru
        _
      // Predicated region
      $region33: #{convolution_block_forward.4} parent=27 // pred_check
        %p2251 = pneg %p127
      $region34: #{convolution_block_forward.4} parent=27 // pred_check_branch
        %2253 = sbr.rel (%p2251) target = $region36
      $region35: #{convolution_block_forward.4} parent=27 // pred_region
        _
      $region36: #{convolution_block_forward.4} parent=27 // pred_fallthru
        _
    $region28: #{convolution_block_forward.4} parent=5 // pred_fallthru
      _
    %p2254 = scmp.le.s32.totalorder 2, %s10
    // Predicated region
    $region37: #{convolution_block_forward.4} parent=5 // pred_check
      %p2255 = pneg %p2254
    $region38: #{convolution_block_forward.4} parent=5 // pred_check_branch
      %2257 = sbr.rel (%p2255) target = $region40
    $region39: #{convolution_block_forward.4} parent=5 // pred_region
      %s2258 = ssub.s32 %s10, 2
      // Predicated region
      $region41: #{convolution_block_forward.4} parent=39 // pred_check
        %p2259 = pneg %p105
      $region42: #{convolution_block_forward.4} parent=39 // pred_check_branch
        %2261 = sbr.rel (%p2259) target = $region44
      $region43: #{convolution_block_forward.4} parent=39 // pred_region
        %p2262 = scmp.lt.s32.totalorder %s22, 1
        %s2263 = scalar_select %p2262, %s22, 1
        %p2264 = scmp.lt.s32.totalorder %s21, 0
        %s2265 = scalar_select %p2264, %s21, 0
        %s2266 = smul.addr %s2263, 32
        %s2267 = sadd.s32 %s2265, %s2266
        %s2268 = smul.addr %s2267, 4
        %s2269 = scalar_lea.vmem %s2, %s2268
      $region44: #{convolution_block_forward.4} parent=39 // pred_fallthru
        _
      // Predicated region
      $region45: #{convolution_block_forward.4} parent=39 // pred_check
        %p2270 = pneg %p133
      $region46: #{convolution_block_forward.4} parent=39 // pred_check_branch
        %2272 = sbr.rel (%p2270) target = $region48
      $region47: #{convolution_block_forward.4} parent=39 // pred_region
        %p2273 = scmp.lt.s32.totalorder %s22, 1
        %s2274 = scalar_select %p2273, %s22, 1
        %p2275 = scmp.lt.s32.totalorder %s21, 0
        %s2276 = scalar_select %p2275, %s21, 0
        %s2277 = sadd.s32 %s2276, %s2274
        %s2278 = smul.addr %s2277, 2
        %s2279 = scalar_lea.vmem %s3, %s2278
      $region48: #{convolution_block_forward.4} parent=39 // pred_fallthru
        _
    $region40: #{convolution_block_forward.4} parent=5 // pred_fallthru
      _
  $region6: #{convolution_block_forward.4} parent=0 // loop_footer
    %s14 = sadd.s32 1, %s10
  $region7: #{convolution_block_forward.4} parent=0 // loop_footer_branch
    %9 = sbr.rel target = $region3
  $region8: #{convolution_block_forward.4} parent=0 // loop_exit
    _

// kernel: convolution_block_forward.6
$region0: #{convolution_block_forward.6}
  #allocation0 [shape = 'u32[]', space=smem, size = 0x4, offset = 0x4, fixed_abs, tag = 'smem constant byte address 0x4 - core index']
  #allocation1 [shape = 'u32[144,128]{1,0:T(1,128)}', space=vmem, size = 0x12000, scoped, tag = 'internal scratch']
  #allocation2 [shape = 'bf16[256,288]{1,0:T(16,128)(2,1)}', space=vmem, size = 0x30000, scoped, tag = 'scratch operand']
  %s0 = inlined_call_operand.vmem [shape: bf16[2,18,18,32], index: 0, kind: input, shape index: {}]
  %s1 = inlined_call_operand.vmem [shape: bf16[288,32], index: 1, kind: input, shape index: {}]
  %s2 = inlined_call_operand.vmem [shape: bf16[2,256,32], index: 2, kind: output, shape index: {0}]
  %s3 = inlined_call_operand.vmem [shape: f32[2,2,32], index: 3, kind: output, shape index: {1}]
  %4 = xla_tuple %s2, %s3
  %s5 = sld [smem:[#allocation0]]
  $region49: #{convolution_block_forward.6} parent=0
    _
  %s7 = ssub.s32 1, %s5
  %s8 = scalar_select 0, %s7, %s5
  loop: start=0, step=1, limit=4
  $region2: #{convolution_block_forward.6} parent=0 // loop_pre_header
    _
  $region3: #{convolution_block_forward.6} parent=0 // loop_header
    %s10 = sphi 0, %s14
    %p11 = scmp.ge.s32.totalorder %s10, 4
    %s17 = sphi 0, %s29
    %s18 = sphi 0, %s25
    %s19 = sphi 0, %s17
    %s20 = sphi 0, %s18
    %s21 = sphi 0, %s19
    %s22 = sphi 0, %s20
    %s32 = sphi 0, %s34
    %s35 = sphi 0, %s32
    %s36 = sphi 0, %s35
    %s52 = sphi 0, %s36
    %s58 = sphi 0, %s60
    %s61 = sphi 0, %s58
    %s62 = sphi 0, %s61
    %s78 = sphi 0, %s62
    %s86 = sphi 0, %s88
    %s89 = sphi 0, %s86
    %s90 = sphi 0, %s89
    %s106 = sphi 0, %s90
    %s114 = sphi 0, %s116
    %s117 = sphi 0, %s114
    %s118 = sphi 0, %s117
    %s134 = sphi 0, %s118
  $region4: #{convolution_block_forward.6} parent=0 // loop_header_branch
    %13 = sbr.rel (%p11) target = $region8
  $region5: #{convolution_block_forward.6} parent=0 // loop_body
    %s15 = ssub.s32 %s10, 1
    %s16 = ssub.s32 %s10, 2
    %s23 = sadd.s32 1, %s18
    %p24 = scmp.ge.s32.totalorder %s23, 2
    %s25 = scalar_select %p24, 0, %s23
    %s26 = sadd.s32 1, %s17
    %s27 = scalar_select %p24, %s26, %s17
    %p28 = scmp.ge.s32.totalorder %s27, 1
    %s29 = scalar_select %p28, 0, %s27
    %s30 = ssub.s32 %s18, %s25
    %p31 = scmp.eq.s32.totalorder %s30, 0
    %s33 = sadd.s32 %s32, 1
    %s34 = scalar_select %p31, %s32, %s33
    %p37 = pneg %p31
    %p38 = scmp.eq.s32.totalorder %s10, 1
    %p39 = por %p37, %p38
    %p40 = scmp.ne.s32.totalorder %s32, %s35
    %p41 = scmp.eq.s32.totalorder %s10, 0
    %p42 = por %p40, %p41
    %p43 = scmp.ne.s32.totalorder %s32, %s35
    %p44 = scmp.eq.s32.totalorder %s15, 1
    %p45 = por %p43, %p44
    %p46 = scmp.ne.s32.totalorder %s35, %s36
    %p47 = scmp.eq.s32.totalorder %s15, 0
    %p48 = por %p46, %p47
    %p49 = scmp.ne.s32.totalorder %s35, %s36
    %p50 = scmp.eq.s32.totalorder %s16, 1
    %p51 = por %p49, %p50
    %p53 = scmp.ne.s32.totalorder %s36, %s52
    %p54 = scmp.eq.s32.totalorder %s16, 0
    %p55 = por %p53, %p54
    %s56 = ssub.s32 %s17, %s29
    %p57 = scmp.eq.s32.totalorder %s56, 0
    %s59 = sadd.s32 %s58, 1
    %s60 = scalar_select %p57, %s58, %s59
    %p63 = pneg %p57
    %p64 = scmp.eq.s32.totalorder %s10, 1
    %p65 = por %p63, %p64
    %p66 = scmp.ne.s32.totalorder %s58, %s61
    %p67 = scmp.eq.s32.totalorder %s10, 0
    %p68 = por %p66, %p67
    %p69 = scmp.ne.s32.totalorder %s58, %s61
    %p70 = scmp.eq.s32.totalorder %s15, 1
    %p71 = por %p69, %p70
    %p72 = scmp.ne.s32.totalorder %s61, %s62
    %p73 = scmp.eq.s32.totalorder %s15, 0
    %p74 = por %p72, %p73
    %p75 = scmp.ne.s32.totalorder %s61, %s62
    %p76 = scmp.eq.s32.totalorder %s16, 1
    %p77 = por %p75, %p76
    %p79 = scmp.ne.s32.totalorder %s62, %s78
    %p80 = scmp.eq.s32.totalorder %s16, 0
    %p81 = por %p79, %p80
    %s82 = ssub.s32 %s18, %s25
    %s83 = ssub.s32 %s17, %s29
    %s84 = sor.u32 %s82, %s83
    %p85 = scmp.eq.s32.totalorder %s84, 0
    %s87 = sadd.s32 %s86, 1
    %s88 = scalar_select %p85, %s86, %s87
    %p91 = pneg %p85
    %p92 = scmp.eq.s32.totalorder %s10, 1
    %p93 = por %p91, %p92
    %p94 = scmp.ne.s32.totalorder %s86, %s89
    %p95 = scmp.eq.s32.totalorder %s10, 0
    %p96 = por %p94, %p95
    %p97 = scmp.ne.s32.totalorder %s86, %s89
    %p98 = scmp.eq.s32.totalorder %s15, 1
    %p99 = por %p97, %p98
    %p100 = scmp.ne.s32.totalorder %s89, %s90
    %p101 = scmp.eq.s32.totalorder %s15, 0
    %p102 = por %p100, %p101
    %p103 = scmp.ne.s32.totalorder %s89, %s90
    %p104 = scmp.eq.s32.totalorder %s16, 1
    %p105 = por %p103, %p104
    %p107 = scmp.ne.s32.totalorder %s90, %s106
    %p108 = scmp.eq.s32.totalorder %s16, 0
    %p109 = por %p107, %p108
    %s110 = ssub.s32 %s18, %s25
    %s111 = ssub.s32 %s17, %s29
    %s112 = sor.u32 %s110, %s111
    %p113 = scmp.eq.s32.totalorder %s112, 0
    %s115 = sadd.s32 %s114, 1
    %s116 = scalar_select %p113, %s114, %s115
    %p119 = pneg %p113
    %p120 = scmp.eq.s32.totalorder %s10, 1
    %p121 = por %p119, %p120
    %p122 = scmp.ne.s32.totalorder %s114, %s117
    %p123 = scmp.eq.s32.totalorder %s10, 0
    %p124 = por %p122, %p123
    %p125 = scmp.ne.s32.totalorder %s114, %s117
    %p126 = scmp.eq.s32.totalorder %s15, 1
    %p127 = por %p125, %p126
    %p128 = scmp.ne.s32.totalorder %s117, %s118
    %p129 = scmp.eq.s32.totalorder %s15, 0
    %p130 = por %p128, %p129
    %p131 = scmp.ne.s32.totalorder %s117, %s118
    %p132 = scmp.eq.s32.totalorder %s16, 1
    %p133 = por %p131, %p132
    %p135 = scmp.ne.s32.totalorder %s118, %s134
    %p136 = scmp.eq.s32.totalorder %s16, 0
    %p137 = por %p135, %p136
    %p138 = scmp.le.s32.totalorder 1, %s10
    %p139 = scmp.lt.s32.totalorder %s10, 3
    %p140 = pnand %p138, %p139
    %p141 = pneg %p140
    // Predicated region
    $region9: #{convolution_block_forward.6} parent=5 // pred_check
      _
    $region10: #{convolution_block_forward.6} parent=5 // pred_check_branch
      %143 = sbr.rel (%p140) target = $region12
    $region11: #{convolution_block_forward.6} parent=5 // pred_region
      %s144 = ssub.s32 %s10, 1
      // Predicated region
      $region13: #{convolution_block_forward.6} parent=11 // pred_check
        %p145 = pneg %p74
      $region14: #{convolution_block_forward.6} parent=11 // pred_check_branch
        %147 = sbr.rel (%p145) target = $region16
      $region15: #{convolution_block_forward.6} parent=11 // pred_region
        %p148 = scmp.lt.s32.totalorder %s19, 0
        %s149 = scalar_select %p148, %s19, 0
        %s150 = smul.addr %s149, 4
        %s151 = scalar_lea.vmem %s1, %s150
      $region16: #{convolution_block_forward.6} parent=11 // pred_fallthru
        _
    $region12: #{convolution_block_forward.6} parent=5 // pred_fallthru
      _
    %p152 = scmp.lt.s32.totalorder %s10, 2
    // Predicated region
    $region17: #{convolution_block_forward.6} parent=5 // pred_check
      %p153 = pneg %p152
    $region18: #{convolution_block_forward.6} parent=5 // pred_check_branch
      %155 = sbr.rel (%p153) target = $region20
    $region19: #{convolution_block_forward.6} parent=5 // pred_region
      // Predicated region
      $region21: #{convolution_block_forward.6} parent=19 // pred_check
        %p156 = pneg %p42
      $region22: #{convolution_block_forward.6} parent=19 // pred_check_branch
        %158 = sbr.rel (%p156) target = $region24
      $region23: #{convolution_block_forward.6} parent=19 // pred_region
        %p159 = scmp.lt.s32.totalorder %s18, 1
        %s160 = scalar_select %p159, %s18, 1
        %s161 = smul.addr %s160, 54
        %s162 = smul.addr %s161, 4
        %s163 = scalar_lea.vmem %s0, %s162
      $region24: #{convolution_block_forward.6} parent=19 // pred_fallthru
        _
    $region20: #{convolution_block_forward.6} parent=5 // pred_fallthru
      _
    %p164 = scmp.le.s32.totalorder 1, %s10
    %p165 = scmp.lt.s32.totalorder %s10, 3
    %p166 = pnand %p164, %p165
    %p167 = pneg %p166
    // Predicated region
    $region25: #{convolution_block_forward.6} parent=5 // pred_check
      _
    $region26: #{convolution_block_forward.6} parent=5 // pred_check_branch
      %169 = sbr.rel (%p166) target = $region28
    $region27: #{convolution_block_forward.6} parent=5 // pred_region
      %s170 = ssub.s32 %s10, 1
      %p171 = scmp.lt.s32.totalorder %s20, 1
      %s172 = scalar_select %p171, %s20, 1
      %s173 = smul.addr %s172, 54
      %s174 = smul.addr %s173, 4
      %s175 = scalar_lea.vmem %s0, %s174
      %p176 = pneg %p48
      %p177 = pneg %p45
      %p178 = scmp.lt.s32.totalorder %s19, 0
      %s179 = scalar_select %p178, %s19, 0
      %s180 = smul.addr %s179, 4
      %s181 = scalar_lea.vmem %s1, %s180
      %p182 = pneg %p74
      %p183 = pneg %p71
      %p184 = pneg %p102
      %p185 = pneg %p99
      %p186 = scmp.lt.s32.totalorder %s20, 1
      %s187 = scalar_select %p186, %s20, 1
      %p188 = scmp.lt.s32.totalorder %s19, 0
      %s189 = scalar_select %p188, %s19, 0
      %s190 = smul.addr %s187, 32
      %s191 = sadd.s32 %s189, %s190
      %s192 = smul.addr %s191, 4
      %s193 = scalar_lea.vmem %s2, %s192
      %p194 = pneg %p130
      %p195 = pneg %p127
      %p196 = scmp.lt.s32.totalorder %s20, 1
      %s197 = scalar_select %p196, %s20, 1
      %p198 = scmp.lt.s32.totalorder %s19, 0
      %s199 = scalar_select %p198, %s19, 0
      %s200 = sadd.s32 %s199, %s197
      %s201 = smul.addr %s200, 2
      %s202 = scalar_lea.vmem %s3, %s201
      %p203 = scmp.lt.s32.totalorder %s20, 1
      %s204 = scalar_select %p203, %s20, 1
      %s205 = smul.addr %s204, 54
      %s206 = smul.addr %s205, 4
      %s207 = scalar_lea.vmem %s0, %s206
      %p208 = scmp.lt.s32.totalorder %s19, 0
      %s209 = scalar_select %p208, %s19, 0
      %s210 = smul.addr %s209, 4
      %s211 = scalar_lea.vmem %s1, %s210
      %p212 = scmp.lt.s32.totalorder %s20, 1
      %s213 = scalar_select %p212, %s20, 1
      %p214 = scmp.lt.s32.totalorder %s19, 0
      %s215 = scalar_select %p214, %s19, 0
      %s216 = smul.addr %s213, 32
      %s217 = sadd.s32 %s215, %s216
      %s218 = smul.addr %s217, 4
      %s219 = scalar_lea.vmem %s2, %s218
      %p220 = scmp.lt.s32.totalorder %s20, 1
      %s221 = scalar_select %p220, %s20, 1
      %p222 = scmp.lt.s32.totalorder %s19, 0
      %s223 = scalar_select %p222, %s19, 0
      %s224 = sadd.s32 %s223, %s221
      %s225 = smul.addr %s224, 2
      %s226 = scalar_lea.vmem %s3, %s225
      %v228 = vld [vmem:[%s207] sm:$0xf]
      %v229 = vld [vmem:[%s207 + $0x4] sm:$0xf]
      %v230 = vld [vmem:[%s207 + $0x8] sm:$0x1]
      %v231 = vld [vmem:[%s207 + $0xc] sm:$0xf]
      %v232 = vld [vmem:[%s207 + $0x10] sm:$0xf]
      %v233 = vld [vmem:[%s207 + $0x14] sm:$0x1]
      %v234 = vld [vmem:[%s207 + $0x18] sm:$0xf]
      %v235 = vld [vmem:[%s207 + $0x1c] sm:$0xf]
      %v236 = vld [vmem:[%s207 + $0x20] sm:$0x1]
      %v237 = vld [vmem:[%s207 + $0x24] sm:$0xf]
      %v238 = vld [vmem:[%s207 + $0x28] sm:$0xf]
      %v239 = vld [vmem:[%s207 + $0x2c] sm:$0x1]
      %v240 = vld [vmem:[%s207 + $0x30] sm:$0xf]
      %v241 = vld [vmem:[%s207 + $0x34] sm:$0xf]
      %v242 = vld [vmem:[%s207 + $0x38] sm:$0x1]
      %v243 = vld [vmem:[%s207 + $0x3c] sm:$0xf]
      %v244 = vld [vmem:[%s207 + $0x40] sm:$0xf]
      %v245 = vld [vmem:[%s207 + $0x44] sm:$0x1]
      %v246 = vld [vmem:[%s207 + $0x48] sm:$0xf]
      %v247 = vld [vmem:[%s207 + $0x4c] sm:$0xf]
      %v248 = vld [vmem:[%s207 + $0x50] sm:$0x1]
      %v249 = vld [vmem:[%s207 + $0x54] sm:$0xf]
      %v250 = vld [vmem:[%s207 + $0x58] sm:$0xf]
      %v251 = vld [vmem:[%s207 + $0x5c] sm:$0x1]
      %v252 = vld [vmem:[%s207 + $0x60] sm:$0xf]
      %v253 = vld [vmem:[%s207 + $0x64] sm:$0xf]
      %v254 = vld [vmem:[%s207 + $0x68] sm:$0x1]
      %v255 = vld [vmem:[%s207 + $0x6c] sm:$0xf]
      %v256 = vld [vmem:[%s207 + $0x70] sm:$0xf]
      %v257 = vld [vmem:[%s207 + $0x74] sm:$0x1]
      %v258 = vld [vmem:[%s207 + $0x78] sm:$0xf]
      %v259 = vld [vmem:[%s207 + $0x7c] sm:$0xf]
      %v260 = vld [vmem:[%s207 + $0x80] sm:$0x1]
      %v261 = vld [vmem:[%s207 + $0x84] sm:$0xf]
      %v262 = vld [vmem:[%s207 + $0x88] sm:$0xf]
      %v263 = vld [vmem:[%s207 + $0x8c] sm:$0x1]
      %v264 = vld [vmem:[%s207 + $0x90] sm:$0xf]
      %v265 = vld [vmem:[%s207 + $0x94] sm:$0xf]
      %v266 = vld [vmem:[%s207 + $0x98] sm:$0x1]
      %v267 = vld [vmem:[%s207 + $0x9c] sm:$0xf]
      %v268 = vld [vmem:[%s207 + $0xa0] sm:$0xf]
      %v269 = vld [vmem:[%s207 + $0xa4] sm:$0x1]
      %v270 = vld [vmem:[%s207 + $0xa8] sm:$0xf]
      %v271 = vld [vmem:[%s207 + $0xac] sm:$0xf]
      %v272 = vld [vmem:[%s207 + $0xb0] sm:$0x1]
      %v273 = vld [vmem:[%s207 + $0xb4] sm:$0xf]
      %v274 = vld [vmem:[%s207 + $0xb8] sm:$0xf]
      %v275 = vld [vmem:[%s207 + $0xbc] sm:$0x1]
      %v276 = vld [vmem:[%s207 + $0xc0] sm:$0xf]
      %v277 = vld [vmem:[%s207 + $0xc4] sm:$0xf]
      %v278 = vld [vmem:[%s207 + $0xc8] sm:$0x1]
      %v279 = vld [vmem:[%s207 + $0xcc] sm:$0xf]
      %v280 = vld [vmem:[%s207 + $0xd0] sm:$0xf]
      %v281 = vld [vmem:[%s207 + $0xd4] sm:$0x1]
      %v314 = vunpack.c.l.b16 %v228
      %v315 = vunpack.c.l.b16 %v229
      %v316 = vunpack.c.l.b16 %v231
      %v317 = vunpack.c.l.b16 %v232
      %v318 = vunpack.c.l.b16 %v234
      %v319 = vunpack.c.l.b16 %v235
      %v320 = vunpack.c.l.b16 %v237
      %v321 = vunpack.c.l.b16 %v238
      %v322 = vunpack.c.l.b16 %v240
      %v323 = vunpack.c.l.b16 %v241
      %v324 = vunpack.c.l.b16 %v243
      %v325 = vunpack.c.l.b16 %v244
      %v326 = vunpack.c.l.b16 %v246
      %v327 = vunpack.c.l.b16 %v247
      %v328 = vunpack.c.l.b16 %v249
      %v329 = vunpack.c.l.b16 %v250
      %v330 = vunpack.c.l.b16 %v252
      %v331 = vunpack.c.l.b16 %v253
      %v332 = vunpack.c.l.b16 %v255
      %v333 = vunpack.c.l.b16 %v256
      %v334 = vunpack.c.l.b16 %v258
      %v335 = vunpack.c.l.b16 %v259
      %v336 = vunpack.c.l.b16 %v261
      %v337 = vunpack.c.l.b16 %v262
      %v338 = vunpack.c.l.b16 %v264
      %v339 = vunpack.c.l.b16 %v265
      %v340 = vunpack.c.l.b16 %v267
      %v341 = vunpack.c.l.b16 %v268
      %v342 = vunpack.c.l.b16 %v270
      %v343 = vunpack.c.l.b16 %v271
      %v344 = vunpack.c.l.b16 %v273
      %v345 = vunpack.c.l.b16 %v274
      %v346 = vpack.c.b16 %v315, %v314
      %v347 = vpack.c.b16 %v317, %v316
      %v348 = vpack.c.b16 %v319, %v318
      %v349 = vpack.c.b16 %v321, %v320
      %v350 = vpack.c.b16 %v323, %v322
      %v351 = vpack.c.b16 %v325, %v324
      %v352 = vpack.c.b16 %v327, %v326
      %v353 = vpack.c.b16 %v329, %v328
      %v354 = vpack.c.b16 %v331, %v330
      %v355 = vpack.c.b16 %v333, %v332
      %v356 = vpack.c.b16 %v335, %v334
      %v357 = vpack.c.b16 %v337, %v336
      %v358 = vpack.c.b16 %v339, %v338
      %v359 = vpack.c.b16 %v341, %v340
      %v360 = vpack.c.b16 %v343, %v342
      %v361 = vpack.c.b16 %v345, %v344
      %vm378 = vcmask 261120
      %379 = vst.msk [vmem:[#allocation2] sm:$0xff] %vm378, %v346
      %380 = vst.msk [vmem:[#allocation2 + $0x18] sm:$0xff] %vm378, %v347
      %381 = vst.msk [vmem:[#allocation2 + $0x30] sm:$0xff] %vm378, %v348
      %382 = vst.msk [vmem:[#allocation2 + $0x48] sm:$0xff] %vm378, %v349
      %383 = vst.msk [vmem:[#allocation2 + $0x60] sm:$0xff] %vm378, %v350
      %384 = vst.msk [vmem:[#allocation2 + $0x78] sm:$0xff] %vm378, %v351
      %385 = vst.msk [vmem:[#allocation2 + $0x90] sm:$0xff] %vm378, %v352
      %386 = vst.msk [vmem:[#allocation2 + $0xa8] sm:$0xff] %vm378, %v353
      %387 = vst.msk [vmem:[#allocation2 + $0xc0] sm:$0xff] %vm378, %v354
      %388 = vst.msk [vmem:[#allocation2 + $0xd8] sm:$0xff] %vm378, %v355
      %389 = vst.msk [vmem:[#allocation2 + $0xf0] sm:$0xff] %vm378, %v356
      %390 = vst.msk [vmem:[#allocation2 + $0x108] sm:$0xff] %vm378, %v357
      %391 = vst.msk [vmem:[#allocation2 + $0x120] sm:$0xff] %vm378, %v358
      %392 = vst.msk [vmem:[#allocation2 + $0x138] sm:$0xff] %vm378, %v359
      %393 = vst.msk [vmem:[#allocation2 + $0x150] sm:$0xff] %vm378, %v360
      %394 = vst.msk [vmem:[#allocation2 + $0x168] sm:$0xff] %vm378, %v361
      %vm395 = vsmask.f32 3328
      %vm396 = vsmask.f32 7440
      %vm397 = vmor %vm395, %vm396
      %v399 = vshrl.u32 %v228, 16
      %v401 = vrot.slane %v399, 4
      %v402 = vshll.u32 %v228, 16
      %v404 = vrot.slane %v402, 5
      %v405 = vor.u32 %v401, %v404
      %v406 = vrot.slane %v405, 4
      %v408 = vshll.u32 %v229, 16
      %v410 = vrot.slane %v408, 5
      %v411 = vsel %vm397, %v406, %v410
      %v412 = vshrl.u32 %v229, 16
      %v414 = vrot.slane %v412, 4
      %v415 = vor.u32 %v414, %v410
      %v416 = vrot.slane %v415, 4
      %v418 = vshll.u32 %v230, 16
      %v420 = vrot.slane %v418, 5
      %v421 = vsel %vm397, %v416, %v420
      %v423 = vshrl.u32 %v231, 16
      %v425 = vrot.slane %v423, 4
      %v426 = vshll.u32 %v231, 16
      %v428 = vrot.slane %v426, 5
      %v429 = vor.u32 %v425, %v428
      %v430 = vrot.slane %v429, 4
      %v432 = vshll.u32 %v232, 16
      %v434 = vrot.slane %v432, 5
      %v435 = vsel %vm397, %v430, %v434
      %v436 = vshrl.u32 %v232, 16
      %v438 = vrot.slane %v436, 4
      %v439 = vor.u32 %v438, %v434
      %v440 = vrot.slane %v439, 4
      %v442 = vshll.u32 %v233, 16
      %v444 = vrot.slane %v442, 5
      %v445 = vsel %vm397, %v440, %v444
      %v447 = vshrl.u32 %v234, 16
      %v449 = vrot.slane %v447, 4
      %v450 = vshll.u32 %v234, 16
      %v452 = vrot.slane %v450, 5
      %v453 = vor.u32 %v449, %v452
      %v454 = vrot.slane %v453, 4
      %v456 = vshll.u32 %v235, 16
      %v458 = vrot.slane %v456, 5
      %v459 = vsel %vm397, %v454, %v458
      %v460 = vshrl.u32 %v235, 16
      %v462 = vrot.slane %v460, 4
      %v463 = vor.u32 %v462, %v458
      %v464 = vrot.slane %v463, 4
      %v466 = vshll.u32 %v236, 16
      %v468 = vrot.slane %v466, 5
      %v469 = vsel %vm397, %v464, %v468
      %v471 = vshrl.u32 %v237, 16
      %v473 = vrot.slane %v471, 4
      %v474 = vshll.u32 %v237, 16
      %v476 = vrot.slane %v474, 5
      %v477 = vor.u32 %v473, %v476
      %v478 = vrot.slane %v477, 4
      %v480 = vshll.u32 %v238, 16
      %v482 = vrot.slane %v480, 5
      %v483 = vsel %vm397, %v478, %v482
      %v484 = vshrl.u32 %v238, 16
      %v486 = vrot.slane %v484, 4
      %v487 = vor.u32 %v486, %v482
      %v488 = vrot.slane %v487, 4
      %v490 = vshll.u32 %v239, 16
      %v492 = vrot.slane %v490, 5
      %v493 = vsel %vm397, %v488, %v492
      %v495 = vshrl.u32 %v240, 16
      %v497 = vrot.slane %v495, 4
      %v498 = vshll.u32 %v240, 16
      %v500 = vrot.slane %v498, 5
      %v501 = vor.u32 %v497, %v500
      %v502 = vrot.slane %v501, 4
      %v504 = vshll.u32 %v241, 16
      %v506 = vrot.slane %v504, 5
      %v507 = vsel %vm397, %v502, %v506
      %v508 = vshrl.u32 %v241, 16
      %v510 = vrot.slane %v508, 4
      %v511 = vor.u32 %v510, %v506
      %v512 = vrot.slane %v511, 4
      %v514 = vshll.u32 %v242, 16
      %v516 = vrot.slane %v514, 5
      %v517 = vsel %vm397, %v512, %v516
      %v519 = vshrl.u32 %v243, 16
      %v521 = vrot.slane %v519, 4
      %v522 = vshll.u32 %v243, 16
      %v524 = vrot.slane %v522, 5
      %v525 = vor.u32 %v521, %v524
      %v526 = vrot.slane %v525, 4
      %v528 = vshll.u32 %v244, 16
      %v530 = vrot.slane %v528, 5
      %v531 = vsel %vm397, %v526, %v530
      %v532 = vshrl.u32 %v244, 16
      %v534 = vrot.slane %v532, 4
      %v535 = vor.u32 %v534, %v530
      %v536 = vrot.slane %v535, 4
      %v538 = vshll.u32 %v245, 16
      %v540 = vrot.slane %v538, 5
      %v541 = vsel %vm397, %v536, %v540
      %v543 = vshrl.u32 %v246, 16
      %v545 = vrot.slane %v543, 4
      %v546 = vshll.u32 %v246, 16
      %v548 = vrot.slane %v546, 5
      %v549 = vor.u32 %v545, %v548
      %v550 = vrot.slane %v549, 4
      %v552 = vshll.u32 %v247, 16
      %v554 = vrot.slane %v552, 5
      %v555 = vsel %vm397, %v550, %v554
      %v556 = vshrl.u32 %v247, 16
      %v558 = vrot.slane %v556, 4
      %v559 = vor.u32 %v558, %v554
      %v560 = vrot.slane %v559, 4
      %v562 = vshll.u32 %v248, 16
      %v564 = vrot.slane %v562, 5
      %v565 = vsel %vm397, %v560, %v564
      %v567 = vshrl.u32 %v249, 16
      %v569 = vrot.slane %v567, 4
      %v570 = vshll.u32 %v249, 16
      %v572 = vrot.slane %v570, 5
      %v573 = vor.u32 %v569, %v572
      %v574 = vrot.slane %v573, 4
      %v576 = vshll.u32 %v250, 16
      %v578 = vrot.slane %v576, 5
      %v579 = vsel %vm397, %v574, %v578
      %v580 = vshrl.u32 %v250, 16
      %v582 = vrot.slane %v580, 4
      %v583 = vor.u32 %v582, %v578
      %v584 = vrot.slane %v583, 4
      %v586 = vshll.u32 %v251, 16
      %v588 = vrot.slane %v586, 5
      %v589 = vsel %vm397, %v584, %v588
      %v591 = vshrl.u32 %v252, 16
      %v593 = vrot.slane %v591, 4
      %v594 = vshll.u32 %v252, 16
      %v596 = vrot.slane %v594, 5
      %v597 = vor.u32 %v593, %v596
      %v598 = vrot.slane %v597, 4
      %v600 = vshll.u32 %v253, 16
      %v602 = vrot.slane %v600, 5
      %v603 = vsel %vm397, %v598, %v602
      %v604 = vshrl.u32 %v253, 16
      %v606 = vrot.slane %v604, 4
      %v607 = vor.u32 %v606, %v602
      %v608 = vrot.slane %v607, 4
      %v610 = vshll.u32 %v254, 16
      %v612 = vrot.slane %v610, 5
      %v613 = vsel %vm397, %v608, %v612
      %v615 = vshrl.u32 %v255, 16
      %v617 = vrot.slane %v615, 4
      %v618 = vshll.u32 %v255, 16
      %v620 = vrot.slane %v618, 5
      %v621 = vor.u32 %v617, %v620
      %v622 = vrot.slane %v621, 4
      %v624 = vshll.u32 %v256, 16
      %v626 = vrot.slane %v624, 5
      %v627 = vsel %vm397, %v622, %v626
      %v628 = vshrl.u32 %v256, 16
      %v630 = vrot.slane %v628, 4
      %v631 = vor.u32 %v630, %v626
      %v632 = vrot.slane %v631, 4
      %v634 = vshll.u32 %v257, 16
      %v636 = vrot.slane %v634, 5
      %v637 = vsel %vm397, %v632, %v636
      %v639 = vshrl.u32 %v258, 16
      %v641 = vrot.slane %v639, 4
      %v642 = vshll.u32 %v258, 16
      %v644 = vrot.slane %v642, 5
      %v645 = vor.u32 %v641, %v644
      %v646 = vrot.slane %v645, 4
      %v648 = vshll.u32 %v259, 16
      %v650 = vrot.slane %v648, 5
      %v651 = vsel %vm397, %v646, %v650
      %v652 = vshrl.u32 %v259, 16
      %v654 = vrot.slane %v652, 4
      %v655 = vor.u32 %v654, %v650
      %v656 = vrot.slane %v655, 4
      %v658 = vshll.u32 %v260, 16
      %v660 = vrot.slane %v658, 5
      %v661 = vsel %vm397, %v656, %v660
      %v663 = vshrl.u32 %v261, 16
      %v665 = vrot.slane %v663, 4
      %v666 = vshll.u32 %v261, 16
      %v668 = vrot.slane %v666, 5
      %v669 = vor.u32 %v665, %v668
      %v670 = vrot.slane %v669, 4
      %v672 = vshll.u32 %v262, 16
      %v674 = vrot.slane %v672, 5
      %v675 = vsel %vm397, %v670, %v674
      %v676 = vshrl.u32 %v262, 16
      %v678 = vrot.slane %v676, 4
      %v679 = vor.u32 %v678, %v674
      %v680 = vrot.slane %v679, 4
      %v682 = vshll.u32 %v263, 16
      %v684 = vrot.slane %v682, 5
      %v685 = vsel %vm397, %v680, %v684
      %v687 = vshrl.u32 %v264, 16
      %v689 = vrot.slane %v687, 4
      %v690 = vshll.u32 %v264, 16
      %v692 = vrot.slane %v690, 5
      %v693 = vor.u32 %v689, %v692
      %v694 = vrot.slane %v693, 4
      %v696 = vshll.u32 %v265, 16
      %v698 = vrot.slane %v696, 5
      %v699 = vsel %vm397, %v694, %v698
      %v700 = vshrl.u32 %v265, 16
      %v702 = vrot.slane %v700, 4
      %v703 = vor.u32 %v702, %v698
      %v704 = vrot.slane %v703, 4
      %v706 = vshll.u32 %v266, 16
      %v708 = vrot.slane %v706, 5
      %v709 = vsel %vm397, %v704, %v708
      %v711 = vshrl.u32 %v267, 16
      %v713 = vrot.slane %v711, 4
      %v714 = vshll.u32 %v267, 16
      %v716 = vrot.slane %v714, 5
      %v717 = vor.u32 %v713, %v716
      %v718 = vrot.slane %v717, 4
      %v720 = vshll.u32 %v268, 16
      %v722 = vrot.slane %v720, 5
      %v723 = vsel %vm397, %v718, %v722
      %v724 = vshrl.u32 %v268, 16
      %v726 = vrot.slane %v724, 4
      %v727 = vor.u32 %v726, %v722
      %v728 = vrot.slane %v727, 4
      %v730 = vshll.u32 %v269, 16
      %v732 = vrot.slane %v730, 5
      %v733 = vsel %vm397, %v728, %v732
      %v735 = vshrl.u32 %v270, 16
      %v737 = vrot.slane %v735, 4
      %v738 = vshll.u32 %v270, 16
      %v740 = vrot.slane %v738, 5
      %v741 = vor.u32 %v737, %v740
      %v742 = vrot.slane %v741, 4
      %v744 = vshll.u32 %v271, 16
      %v746 = vrot.slane %v744, 5
      %v747 = vsel %vm397, %v742, %v746
      %v748 = vshrl.u32 %v271, 16
      %v750 = vrot.slane %v748, 4
      %v751 = vor.u32 %v750, %v746
      %v752 = vrot.slane %v751, 4
      %v754 = vshll.u32 %v272, 16
      %v756 = vrot.slane %v754, 5
      %v757 = vsel %vm397, %v752, %v756
      %v759 = vshrl.u32 %v273, 16
      %v761 = vrot.slane %v759, 4
      %v762 = vshll.u32 %v273, 16
      %v764 = vrot.slane %v762, 5
      %v765 = vor.u32 %v761, %v764
      %v766 = vrot.slane %v765, 4
      %v768 = vshll.u32 %v274, 16
      %v770 = vrot.slane %v768, 5
      %v771 = vsel %vm397, %v766, %v770
      %v772 = vshrl.u32 %v274, 16
      %v774 = vrot.slane %v772, 4
      %v775 = vor.u32 %v774, %v770
      %v776 = vrot.slane %v775, 4
      %v778 = vshll.u32 %v275, 16
      %v780 = vrot.slane %v778, 5
      %v781 = vsel %vm397, %v776, %v780
      %v782 = vunpack.c.l.b16 %v411
      %v783 = vunpack.c.l.b16 %v421
      %v784 = vunpack.c.l.b16 %v435
      %v785 = vunpack.c.l.b16 %v445
      %v786 = vunpack.c.l.b16 %v459
      %v787 = vunpack.c.l.b16 %v469
      %v788 = vunpack.c.l.b16 %v483
      %v789 = vunpack.c.l.b16 %v493
      %v790 = vunpack.c.l.b16 %v507
      %v791 = vunpack.c.l.b16 %v517
      %v792 = vunpack.c.l.b16 %v531
      %v793 = vunpack.c.l.b16 %v541
      %v794 = vunpack.c.l.b16 %v555
      %v795 = vunpack.c.l.b16 %v565
      %v796 = vunpack.c.l.b16 %v579
      %v797 = vunpack.c.l.b16 %v589
      %v798 = vunpack.c.l.b16 %v603
      %v799 = vunpack.c.l.b16 %v613
      %v800 = vunpack.c.l.b16 %v627
      %v801 = vunpack.c.l.b16 %v637
      %v802 = vunpack.c.l.b16 %v651
      %v803 = vunpack.c.l.b16 %v661
      %v804 = vunpack.c.l.b16 %v675
      %v805 = vunpack.c.l.b16 %v685
      %v806 = vunpack.c.l.b16 %v699
      %v807 = vunpack.c.l.b16 %v709
      %v808 = vunpack.c.l.b16 %v723
      %v809 = vunpack.c.l.b16 %v733
      %v810 = vunpack.c.l.b16 %v747
      %v811 = vunpack.c.l.b16 %v757
      %v812 = vunpack.c.l.b16 %v771
      %v813 = vunpack.c.l.b16 %v781
      %v814 = vpack.c.b16 %v783, %v782
      %v815 = vpack.c.b16 %v785, %v784
      %v816 = vpack.c.b16 %v787, %v786
      %v817 = vpack.c.b16 %v789, %v788
      %v818 = vpack.c.b16 %v791, %v790
      %v819 = vpack.c.b16 %v793, %v792
      %v820 = vpack.c.b16 %v795, %v794
      %v821 = vpack.c.b16 %v797, %v796
      %v822 = vpack.c.b16 %v799, %v798
      %v823 = vpack.c.b16 %v801, %v800
      %v824 = vpack.c.b16 %v803, %v802
      %v825 = vpack.c.b16 %v805, %v804
      %v826 = vpack.c.b16 %v807, %v806
      %v827 = vpack.c.b16 %v809, %v808
      %v828 = vpack.c.b16 %v811, %v810
      %v829 = vpack.c.b16 %v813, %v812
      %830 = vrot.lane.b32.xlu0 %v814, 32
      %v831 = vpop.permute.xlu0 %830
      %832 = vrot.lane.b32.xlu0 %v815, 32
      %v833 = vpop.permute.xlu0 %832
      %834 = vrot.lane.b32.xlu0 %v816, 32
      %v835 = vpop.permute.xlu0 %834
      %836 = vrot.lane.b32.xlu0 %v817, 32
      %v837 = vpop.permute.xlu0 %836
      %838 = vrot.lane.b32.xlu0 %v818, 32
      %v839 = vpop.permute.xlu0 %838
      %840 = vrot.lane.b32.xlu0 %v819, 32
      %v841 = vpop.permute.xlu0 %840
      %842 = vrot.lane.b32.xlu0 %v820, 32
      %v843 = vpop.permute.xlu0 %842
      %844 = vrot.lane.b32.xlu0 %v821, 32
      %v845 = vpop.permute.xlu0 %844
      %846 = vrot.lane.b32.xlu0 %v822, 32
      %v847 = vpop.permute.xlu0 %846
      %848 = vrot.lane.b32.xlu0 %v823, 32
      %v849 = vpop.permute.xlu0 %848
      %850 = vrot.lane.b32.xlu0 %v824, 32
      %v851 = vpop.permute.xlu0 %850
      %852 = vrot.lane.b32.xlu0 %v825, 32
      %v853 = vpop.permute.xlu0 %852
      %854 = vrot.lane.b32.xlu0 %v826, 32
      %v855 = vpop.permute.xlu0 %854
      %856 = vrot.lane.b32.xlu0 %v827, 32
      %v857 = vpop.permute.xlu0 %856
      %858 = vrot.lane.b32.xlu0 %v828, 32
      %v859 = vpop.permute.xlu0 %858
      %860 = vrot.lane.b32.xlu0 %v829, 32
      %v861 = vpop.permute.xlu0 %860
      %vm878 = vcmask 523520
      %879 = vst.msk [vmem:[#allocation2] sm:$0xff] %vm878, %v831
      %880 = vst.msk [vmem:[#allocation2 + $0x18] sm:$0xff] %vm878, %v833
      %881 = vst.msk [vmem:[#allocation2 + $0x30] sm:$0xff] %vm878, %v835
      %882 = vst.msk [vmem:[#allocation2 + $0x48] sm:$0xff] %vm878, %v837
      %883 = vst.msk [vmem:[#allocation2 + $0x60] sm:$0xff] %vm878, %v839
      %884 = vst.msk [vmem:[#allocation2 + $0x78] sm:$0xff] %vm878, %v841
      %885 = vst.msk [vmem:[#allocation2 + $0x90] sm:$0xff] %vm878, %v843
      %886 = vst.msk [vmem:[#allocation2 + $0xa8] sm:$0xff] %vm878, %v845
      %887 = vst.msk [vmem:[#allocation2 + $0xc0] sm:$0xff] %vm878, %v847
      %888 = vst.msk [vmem:[#allocation2 + $0xd8] sm:$0xff] %vm878, %v849
      %889 = vst.msk [vmem:[#allocation2 + $0xf0] sm:$0xff] %vm878, %v851
      %890 = vst.msk [vmem:[#allocation2 + $0x108] sm:$0xff] %vm878, %v853
      %891 = vst.msk [vmem:[#allocation2 + $0x120] sm:$0xff] %vm878, %v855
      %892 = vst.msk [vmem:[#allocation2 + $0x138] sm:$0xff] %vm878, %v857
      %893 = vst.msk [vmem:[#allocation2 + $0x150] sm:$0xff] %vm878, %v859
      %894 = vst.msk [vmem:[#allocation2 + $0x168] sm:$0xff] %vm878, %v861
      %vm911 = vcmask 1042432
      %vm912 = vcmask 1046532
      %vm913 = vmor %vm911, %vm912
      %v914 = vrot.slane %v228, 5
      %v915 = vrot.slane %v914, 4
      %v916 = vrot.slane %v229, 5
      %v917 = vsel %vm913, %v915, %v916
      %v918 = vrot.slane %v916, 4
      %v919 = vrot.slane %v230, 5
      %v920 = vsel %vm913, %v918, %v919
      %v921 = vrot.slane %v231, 5
      %v922 = vrot.slane %v921, 4
      %v923 = vrot.slane %v232, 5
      %v924 = vsel %vm913, %v922, %v923
      %v925 = vrot.slane %v923, 4
      %v926 = vrot.slane %v233, 5
      %v927 = vsel %vm913, %v925, %v926
      %v928 = vrot.slane %v234, 5
      %v929 = vrot.slane %v928, 4
      %v930 = vrot.slane %v235, 5
      %v931 = vsel %vm913, %v929, %v930
      %v932 = vrot.slane %v930, 4
      %v933 = vrot.slane %v236, 5
      %v934 = vsel %vm913, %v932, %v933
      %v935 = vrot.slane %v237, 5
      %v936 = vrot.slane %v935, 4
      %v937 = vrot.slane %v238, 5
      %v938 = vsel %vm913, %v936, %v937
      %v939 = vrot.slane %v937, 4
      %v940 = vrot.slane %v239, 5
      %v941 = vsel %vm913, %v939, %v940
      %v942 = vrot.slane %v240, 5
      %v943 = vrot.slane %v942, 4
      %v944 = vrot.slane %v241, 5
      %v945 = vsel %vm913, %v943, %v944
      %v946 = vrot.slane %v944, 4
      %v947 = vrot.slane %v242, 5
      %v948 = vsel %vm913, %v946, %v947
      %v949 = vrot.slane %v243, 5
      %v950 = vrot.slane %v949, 4
      %v951 = vrot.slane %v244, 5
      %v952 = vsel %vm913, %v950, %v951
      %v953 = vrot.slane %v951, 4
      %v954 = vrot.slane %v245, 5
      %v955 = vsel %vm913, %v953, %v954
      %v956 = vrot.slane %v246, 5
      %v957 = vrot.slane %v956, 4
      %v958 = vrot.slane %v247, 5
      %v959 = vsel %vm913, %v957, %v958
      %v960 = vrot.slane %v958, 4
      %v961 = vrot.slane %v248, 5
      %v962 = vsel %vm913, %v960, %v961
      %v963 = vrot.slane %v249, 5
      %v964 = vrot.slane %v963, 4
      %v965 = vrot.slane %v250, 5
      %v966 = vsel %vm913, %v964, %v965
      %v967 = vrot.slane %v965, 4
      %v968 = vrot.slane %v251, 5
      %v969 = vsel %vm913, %v967, %v968
      %v970 = vrot.slane %v252, 5
      %v971 = vrot.slane %v970, 4
      %v972 = vrot.slane %v253, 5
      %v973 = vsel %vm913, %v971, %v972
      %v974 = vrot.slane %v972, 4
      %v975 = vrot.slane %v254, 5
      %v976 = vsel %vm913, %v974, %v975
      %v977 = vrot.slane %v255, 5
      %v978 = vrot.slane %v977, 4
      %v979 = vrot.slane %v256, 5
      %v980 = vsel %vm913, %v978, %v979
      %v981 = vrot.slane %v979, 4
      %v982 = vrot.slane %v257, 5
      %v983 = vsel %vm913, %v981, %v982
      %v984 = vrot.slane %v258, 5
      %v985 = vrot.slane %v984, 4
      %v986 = vrot.slane %v259, 5
      %v987 = vsel %vm913, %v985, %v986
      %v988 = vrot.slane %v986, 4
      %v989 = vrot.slane %v260, 5
      %v990 = vsel %vm913, %v988, %v989
      %v991 = vrot.slane %v261, 5
      %v992 = vrot.slane %v991, 4
      %v993 = vrot.slane %v262, 5
      %v994 = vsel %vm913, %v992, %v993
      %v995 = vrot.slane %v993, 4
      %v996 = vrot.slane %v263, 5
      %v997 = vsel %vm913, %v995, %v996
      %v998 = vrot.slane %v264, 5
      %v999 = vrot.slane %v998, 4
      %v1000 = vrot.slane %v265, 5
      %v1001 = vsel %vm913, %v999, %v1000
      %v1002 = vrot.slane %v1000, 4
      %v1003 = vrot.slane %v266, 5
      %v1004 = vsel %vm913, %v1002, %v1003
      %v1005 = vrot.slane %v267, 5
      %v1006 = vrot.slane %v1005, 4
      %v1007 = vrot.slane %v268, 5
      %v1008 = vsel %vm913, %v1006, %v1007
      %v1009 = vrot.slane %v1007, 4
      %v1010 = vrot.slane %v269, 5
      %v1011 = vsel %vm913, %v1009, %v1010
      %v1012 = vrot.slane %v270, 5
      %v1013 = vrot.slane %v1012, 4
      %v1014 = vrot.slane %v271, 5
      %v1015 = vsel %vm913, %v1013, %v1014
      %v1016 = vrot.slane %v1014, 4
      %v1017 = vrot.slane %v272, 5
      %v1018 = vsel %vm913, %v1016, %v1017
      %v1019 = vrot.slane %v273, 5
      %v1020 = vrot.slane %v1019, 4
      %v1021 = vrot.slane %v274, 5
      %v1022 = vsel %vm913, %v1020, %v1021
      %v1023 = vrot.slane %v1021, 4
      %v1024 = vrot.slane %v275, 5
      %v1025 = vsel %vm913, %v1023, %v1024
      %v1026 = vunpack.c.l.b16 %v917
      %v1027 = vunpack.c.l.b16 %v920
      %v1028 = vunpack.c.l.b16 %v924
      %v1029 = vunpack.c.l.b16 %v927
      %v1030 = vunpack.c.l.b16 %v931
      %v1031 = vunpack.c.l.b16 %v934
      %v1032 = vunpack.c.l.b16 %v938
      %v1033 = vunpack.c.l.b16 %v941
      %v1034 = vunpack.c.l.b16 %v945
      %v1035 = vunpack.c.l.b16 %v948
      %v1036 = vunpack.c.l.b16 %v952
      %v1037 = vunpack.c.l.b16 %v955
      %v1038 = vunpack.c.l.b16 %v959
      %v1039 = vunpack.c.l.b16 %v962
      %v1040 = vunpack.c.l.b16 %v966
      %v1041 = vunpack.c.l.b16 %v969
      %v1042 = vunpack.c.l.b16 %v973
      %v1043 = vunpack.c.l.b16 %v976
      %v1044 = vunpack.c.l.b16 %v980
      %v1045 = vunpack.c.l.b16 %v983
      %v1046 = vunpack.c.l.b16 %v987
      %v1047 = vunpack.c.l.b16 %v990
      %v1048 = vunpack.c.l.b16 %v994
      %v1049 = vunpack.c.l.b16 %v997
      %v1050 = vunpack.c.l.b16 %v1001
      %v1051 = vunpack.c.l.b16 %v1004
      %v1052 = vunpack.c.l.b16 %v1008
      %v1053 = vunpack.c.l.b16 %v1011
      %v1054 = vunpack.c.l.b16 %v1015
      %v1055 = vunpack.c.l.b16 %v1018
      %v1056 = vunpack.c.l.b16 %v1022
      %v1057 = vunpack.c.l.b16 %v1025
      %v1058 = vpack.c.b16 %v1027, %v1026
      %v1059 = vpack.c.b16 %v1029, %v1028
      %v1060 = vpack.c.b16 %v1031, %v1030
      %v1061 = vpack.c.b16 %v1033, %v1032
      %v1062 = vpack.c.b16 %v1035, %v1034
      %v1063 = vpack.c.b16 %v1037, %v1036
      %v1064 = vpack.c.b16 %v1039, %v1038
      %v1065 = vpack.c.b16 %v1041, %v1040
      %v1066 = vpack.c.b16 %v1043, %v1042
      %v1067 = vpack.c.b16 %v1045, %v1044
      %v1068 = vpack.c.b16 %v1047, %v1046
      %v1069 = vpack.c.b16 %v1049, %v1048
      %v1070 = vpack.c.b16 %v1051, %v1050
      %v1071 = vpack.c.b16 %v1053, %v1052
      %v1072 = vpack.c.b16 %v1055, %v1054
      %v1073 = vpack.c.b16 %v1057, %v1056
      %1074 = vrot.lane.b32.xlu0 %v1058, 64
      %v1075 = vpop.permute.xlu0 %1074
      %1076 = vrot.lane.b32.xlu0 %v1059, 64
      %v1077 = vpop.permute.xlu0 %1076
      %1078 = vrot.lane.b32.xlu0 %v1060, 64
      %v1079 = vpop.permute.xlu0 %1078
      %1080 = vrot.lane.b32.xlu0 %v1061, 64
      %v1081 = vpop.permute.xlu0 %1080
      %1082 = vrot.lane.b32.xlu0 %v1062, 64
      %v1083 = vpop.permute.xlu0 %1082
      %1084 = vrot.lane.b32.xlu0 %v1063, 64
      %v1085 = vpop.permute.xlu0 %1084
      %1086 = vrot.lane.b32.xlu0 %v1064, 64
      %v1087 = vpop.permute.xlu0 %1086
      %1088 = vrot.lane.b32.xlu0 %v1065, 64
      %v1089 = vpop.permute.xlu0 %1088
      %1090 = vrot.lane.b32.xlu0 %v1066, 64
      %v1091 = vpop.permute.xlu0 %1090
      %1092 = vrot.lane.b32.xlu0 %v1067, 64
      %v1093 = vpop.permute.xlu0 %1092
      %1094 = vrot.lane.b32.xlu0 %v1068, 64
      %v1095 = vpop.permute.xlu0 %1094
      %1096 = vrot.lane.b32.xlu0 %v1069, 64
      %v1097 = vpop.permute.xlu0 %1096
      %1098 = vrot.lane.b32.xlu0 %v1070, 64
      %v1099 = vpop.permute.xlu0 %1098
      %1100 = vrot.lane.b32.xlu0 %v1071, 64
      %v1101 = vpop.permute.xlu0 %1100
      %1102 = vrot.lane.b32.xlu0 %v1072, 64
      %v1103 = vpop.permute.xlu0 %1102
      %1104 = vrot.lane.b32.xlu0 %v1073, 64
      %v1105 = vpop.permute.xlu0 %1104
      %vm1122 = vcmask 785920
      %1123 = vst.msk [vmem:[#allocation2] sm:$0xff] %vm1122, %v1075
      %1124 = vst.msk [vmem:[#allocation2 + $0x18] sm:$0xff] %vm1122, %v1077
      %1125 = vst.msk [vmem:[#allocation2 + $0x30] sm:$0xff] %vm1122, %v1079
      %1126 = vst.msk [vmem:[#allocation2 + $0x48] sm:$0xff] %vm1122, %v1081
      %1127 = vst.msk [vmem:[#allocation2 + $0x60] sm:$0xff] %vm1122, %v1083
      %1128 = vst.msk [vmem:[#allocation2 + $0x78] sm:$0xff] %vm1122, %v1085
      %1129 = vst.msk [vmem:[#allocation2 + $0x90] sm:$0xff] %vm1122, %v1087
      %1130 = vst.msk [vmem:[#allocation2 + $0xa8] sm:$0xff] %vm1122, %v1089
      %1131 = vst.msk [vmem:[#allocation2 + $0xc0] sm:$0xff] %vm1122, %v1091
      %1132 = vst.msk [vmem:[#allocation2 + $0xd8] sm:$0xff] %vm1122, %v1093
      %1133 = vst.msk [vmem:[#allocation2 + $0xf0] sm:$0xff] %vm1122, %v1095
      %1134 = vst.msk [vmem:[#allocation2 + $0x108] sm:$0xff] %vm1122, %v1097
      %1135 = vst.msk [vmem:[#allocation2 + $0x120] sm:$0xff] %vm1122, %v1099
      %1136 = vst.msk [vmem:[#allocation2 + $0x138] sm:$0xff] %vm1122, %v1101
      %1137 = vst.msk [vmem:[#allocation2 + $0x150] sm:$0xff] %vm1122, %v1103
      %1138 = vst.msk [vmem:[#allocation2 + $0x168] sm:$0xff] %vm1122, %v1105
      %v1141 = vunpack.c.l.b16 %v276
      %v1142 = vunpack.c.l.b16 %v277
      %v1143 = vpack.c.b16 %v1142, %v1141
      %1144 = vrot.lane.b32.xlu0 %v347, 96
      %v1145 = vpop.permute.xlu0 %1144
      %1146 = vrot.lane.b32.xlu0 %v348, 96
      %v1147 = vpop.permute.xlu0 %1146
      %1148 = vrot.lane.b32.xlu0 %v349, 96
      %v1149 = vpop.permute.xlu0 %1148
      %1150 = vrot.lane.b32.xlu0 %v350, 96
      %v1151 = vpop.permute.xlu0 %1150
      %1152 = vrot.lane.b32.xlu0 %v351, 96
      %v1153 = vpop.permute.xlu0 %1152
      %1154 = vrot.lane.b32.xlu0 %v352, 96
      %v1155 = vpop.permute.xlu0 %1154
      %1156 = vrot.lane.b32.xlu0 %v353, 96
      %v1157 = vpop.permute.xlu0 %1156
      %1158 = vrot.lane.b32.xlu0 %v354, 96
      %v1159 = vpop.permute.xlu0 %1158
      %1160 = vrot.lane.b32.xlu0 %v355, 96
      %v1161 = vpop.permute.xlu0 %1160
      %1162 = vrot.lane.b32.xlu0 %v356, 96
      %v1163 = vpop.permute.xlu0 %1162
      %1164 = vrot.lane.b32.xlu0 %v357, 96
      %v1165 = vpop.permute.xlu0 %1164
      %1166 = vrot.lane.b32.xlu0 %v358, 96
      %v1167 = vpop.permute.xlu0 %1166
      %1168 = vrot.lane.b32.xlu0 %v359, 96
      %v1169 = vpop.permute.xlu0 %1168
      %1170 = vrot.lane.b32.xlu0 %v360, 96
      %v1171 = vpop.permute.xlu0 %1170
      %1172 = vrot.lane.b32.xlu0 %v361, 96
      %v1173 = vpop.permute.xlu0 %1172
      %1174 = vrot.lane.b32.xlu0 %v1143, 96
      %v1175 = vpop.permute.xlu0 %1174
      %vm1192 = vcmask 1048320
      %1193 = vst.msk [vmem:[#allocation2] sm:$0xff] %vm1192, %v1145
      %1194 = vst.msk [vmem:[#allocation2 + $0x18] sm:$0xff] %vm1192, %v1147
      %1195 = vst.msk [vmem:[#allocation2 + $0x30] sm:$0xff] %vm1192, %v1149
      %1196 = vst.msk [vmem:[#allocation2 + $0x48] sm:$0xff] %vm1192, %v1151
      %1197 = vst.msk [vmem:[#allocation2 + $0x60] sm:$0xff] %vm1192, %v1153
      %1198 = vst.msk [vmem:[#allocation2 + $0x78] sm:$0xff] %vm1192, %v1155
      %1199 = vst.msk [vmem:[#allocation2 + $0x90] sm:$0xff] %vm1192, %v1157
      %1200 = vst.msk [vmem:[#allocation2 + $0xa8] sm:$0xff] %vm1192, %v1159
      %1201 = vst.msk [vmem:[#allocation2 + $0xc0] sm:$0xff] %vm1192, %v1161
      %1202 = vst.msk [vmem:[#allocation2 + $0xd8] sm:$0xff] %vm1192, %v1163
      %1203 = vst.msk [vmem:[#allocation2 + $0xf0] sm:$0xff] %vm1192, %v1165
      %1204 = vst.msk [vmem:[#allocation2 + $0x108] sm:$0xff] %vm1192, %v1167
      %1205 = vst.msk [vmem:[#allocation2 + $0x120] sm:$0xff] %vm1192, %v1169
      %1206 = vst.msk [vmem:[#allocation2 + $0x138] sm:$0xff] %vm1192, %v1171
      %1207 = vst.msk [vmem:[#allocation2 + $0x150] sm:$0xff] %vm1192, %v1173
      %1208 = vst.msk [vmem:[#allocation2 + $0x168] sm:$0xff] %vm1192, %v1175
      %v1210 = vshrl.u32 %v276, 16
      %v1212 = vrot.slane %v1210, 4
      %v1213 = vshll.u32 %v276, 16
      %v1215 = vrot.slane %v1213, 5
      %v1216 = vor.u32 %v1212, %v1215
      %v1217 = vrot.slane %v1216, 4
      %v1219 = vshll.u32 %v277, 16
      %v1221 = vrot.slane %v1219, 5
      %v1222 = vsel %vm397, %v1217, %v1221
      %v1223 = vshrl.u32 %v277, 16
      %v1225 = vrot.slane %v1223, 4
      %v1226 = vor.u32 %v1225, %v1221
      %v1227 = vrot.slane %v1226, 4
      %v1229 = vshll.u32 %v278, 16
      %v1231 = vrot.slane %v1229, 5
      %v1232 = vsel %vm397, %v1227, %v1231
      %v1233 = vunpack.c.l.b16 %v1222
      %v1234 = vunpack.c.l.b16 %v1232
      %v1235 = vpack.c.b16 %v1234, %v1233
      %1252 = vst.msk [vmem:[#allocation2 + $0x8] sm:$0xff] %vm378, %v815
      %1253 = vst.msk [vmem:[#allocation2 + $0x20] sm:$0xff] %vm378, %v816
      %1254 = vst.msk [vmem:[#allocation2 + $0x38] sm:$0xff] %vm378, %v817
      %1255 = vst.msk [vmem:[#allocation2 + $0x50] sm:$0xff] %vm378, %v818
      %1256 = vst.msk [vmem:[#allocation2 + $0x68] sm:$0xff] %vm378, %v819
      %1257 = vst.msk [vmem:[#allocation2 + $0x80] sm:$0xff] %vm378, %v820
      %1258 = vst.msk [vmem:[#allocation2 + $0x98] sm:$0xff] %vm378, %v821
      %1259 = vst.msk [vmem:[#allocation2 + $0xb0] sm:$0xff] %vm378, %v822
      %1260 = vst.msk [vmem:[#allocation2 + $0xc8] sm:$0xff] %vm378, %v823
      %1261 = vst.msk [vmem:[#allocation2 + $0xe0] sm:$0xff] %vm378, %v824
      %1262 = vst.msk [vmem:[#allocation2 + $0xf8] sm:$0xff] %vm378, %v825
      %1263 = vst.msk [vmem:[#allocation2 + $0x110] sm:$0xff] %vm378, %v826
      %1264 = vst.msk [vmem:[#allocation2 + $0x128] sm:$0xff] %vm378, %v827
      %1265 = vst.msk [vmem:[#allocation2 + $0x140] sm:$0xff] %vm378, %v828
      %1266 = vst.msk [vmem:[#allocation2 + $0x158] sm:$0xff] %vm378, %v829
      %1267 = vst.msk [vmem:[#allocation2 + $0x170] sm:$0xff] %vm378, %v1235
      %v1269 = vrot.slane %v276, 5
      %v1270 = vrot.slane %v1269, 4
      %v1271 = vrot.slane %v277, 5
      %v1272 = vsel %vm913, %v1270, %v1271
      %v1273 = vrot.slane %v1271, 4
      %v1274 = vrot.slane %v278, 5
      %v1275 = vsel %vm913, %v1273, %v1274
      %v1276 = vunpack.c.l.b16 %v1272
      %v1277 = vunpack.c.l.b16 %v1275
      %v1278 = vpack.c.b16 %v1277, %v1276
      %1279 = vrot.lane.b32.xlu0 %v1059, 32
      %v1280 = vpop.permute.xlu0 %1279
      %1281 = vrot.lane.b32.xlu0 %v1060, 32
      %v1282 = vpop.permute.xlu0 %1281
      %1283 = vrot.lane.b32.xlu0 %v1061, 32
      %v1284 = vpop.permute.xlu0 %1283
      %1285 = vrot.lane.b32.xlu0 %v1062, 32
      %v1286 = vpop.permute.xlu0 %1285
      %1287 = vrot.lane.b32.xlu0 %v1063, 32
      %v1288 = vpop.permute.xlu0 %1287
      %1289 = vrot.lane.b32.xlu0 %v1064, 32
      %v1290 = vpop.permute.xlu0 %1289
      %1291 = vrot.lane.b32.xlu0 %v1065, 32
      %v1292 = vpop.permute.xlu0 %1291
      %1293 = vrot.lane.b32.xlu0 %v1066, 32
      %v1294 = vpop.permute.xlu0 %1293
      %1295 = vrot.lane.b32.xlu0 %v1067, 32
      %v1296 = vpop.permute.xlu0 %1295
      %1297 = vrot.lane.b32.xlu0 %v1068, 32
      %v1298 = vpop.permute.xlu0 %1297
      %1299 = vrot.lane.b32.xlu0 %v1069, 32
      %v1300 = vpop.permute.xlu0 %1299
      %1301 = vrot.lane.b32.xlu0 %v1070, 32
      %v1302 = vpop.permute.xlu0 %1301
      %1303 = vrot.lane.b32.xlu0 %v1071, 32
      %v1304 = vpop.permute.xlu0 %1303
      %1305 = vrot.lane.b32.xlu0 %v1072, 32
      %v1306 = vpop.permute.xlu0 %1305
      %1307 = vrot.lane.b32.xlu0 %v1073, 32
      %v1308 = vpop.permute.xlu0 %1307
      %1309 = vrot.lane.b32.xlu0 %v1278, 32
      %v1310 = vpop.permute.xlu0 %1309
      %1327 = vst.msk [vmem:[#allocation2 + $0x8] sm:$0xff] %vm878, %v1280
      %1328 = vst.msk [vmem:[#allocation2 + $0x20] sm:$0xff] %vm878, %v1282
      %1329 = vst.msk [vmem:[#allocation2 + $0x38] sm:$0xff] %vm878, %v1284
      %1330 = vst.msk [vmem:[#allocation2 + $0x50] sm:$0xff] %vm878, %v1286
      %1331 = vst.msk [vmem:[#allocation2 + $0x68] sm:$0xff] %vm878, %v1288
      %1332 = vst.msk [vmem:[#allocation2 + $0x80] sm:$0xff] %vm878, %v1290
      %1333 = vst.msk [vmem:[#allocation2 + $0x98] sm:$0xff] %vm878, %v1292
      %1334 = vst.msk [vmem:[#allocation2 + $0xb0] sm:$0xff] %vm878, %v1294
      %1335 = vst.msk [vmem:[#allocation2 + $0xc8] sm:$0xff] %vm878, %v1296
      %1336 = vst.msk [vmem:[#allocation2 + $0xe0] sm:$0xff] %vm878, %v1298
      %1337 = vst.msk [vmem:[#allocation2 + $0xf8] sm:$0xff] %vm878, %v1300
      %1338 = vst.msk [vmem:[#allocation2 + $0x110] sm:$0xff] %vm878, %v1302
      %1339 = vst.msk [vmem:[#allocation2 + $0x128] sm:$0xff] %vm878, %v1304
      %1340 = vst.msk [vmem:[#allocation2 + $0x140] sm:$0xff] %vm878, %v1306
      %1341 = vst.msk [vmem:[#allocation2 + $0x158] sm:$0xff] %vm878, %v1308
      %1342 = vst.msk [vmem:[#allocation2 + $0x170] sm:$0xff] %vm878, %v1310
      %v1345 = vunpack.c.l.b16 %v279
      %v1346 = vunpack.c.l.b16 %v280
      %v1347 = vpack.c.b16 %v1346, %v1345
      %1348 = vrot.lane.b32.xlu0 %v348, 64
      %v1349 = vpop.permute.xlu0 %1348
      %1350 = vrot.lane.b32.xlu0 %v349, 64
      %v1351 = vpop.permute.xlu0 %1350
      %1352 = vrot.lane.b32.xlu0 %v350, 64
      %v1353 = vpop.permute.xlu0 %1352
      %1354 = vrot.lane.b32.xlu0 %v351, 64
      %v1355 = vpop.permute.xlu0 %1354
      %1356 = vrot.lane.b32.xlu0 %v352, 64
      %v1357 = vpop.permute.xlu0 %1356
      %1358 = vrot.lane.b32.xlu0 %v353, 64
      %v1359 = vpop.permute.xlu0 %1358
      %1360 = vrot.lane.b32.xlu0 %v354, 64
      %v1361 = vpop.permute.xlu0 %1360
      %1362 = vrot.lane.b32.xlu0 %v355, 64
      %v1363 = vpop.permute.xlu0 %1362
      %1364 = vrot.lane.b32.xlu0 %v356, 64
      %v1365 = vpop.permute.xlu0 %1364
      %1366 = vrot.lane.b32.xlu0 %v357, 64
      %v1367 = vpop.permute.xlu0 %1366
      %1368 = vrot.lane.b32.xlu0 %v358, 64
      %v1369 = vpop.permute.xlu0 %1368
      %1370 = vrot.lane.b32.xlu0 %v359, 64
      %v1371 = vpop.permute.xlu0 %1370
      %1372 = vrot.lane.b32.xlu0 %v360, 64
      %v1373 = vpop.permute.xlu0 %1372
      %1374 = vrot.lane.b32.xlu0 %v361, 64
      %v1375 = vpop.permute.xlu0 %1374
      %1376 = vrot.lane.b32.xlu0 %v1143, 64
      %v1377 = vpop.permute.xlu0 %1376
      %1378 = vrot.lane.b32.xlu0 %v1347, 64
      %v1379 = vpop.permute.xlu0 %1378
      %1396 = vst.msk [vmem:[#allocation2 + $0x8] sm:$0xff] %vm1122, %v1349
      %1397 = vst.msk [vmem:[#allocation2 + $0x20] sm:$0xff] %vm1122, %v1351
      %1398 = vst.msk [vmem:[#allocation2 + $0x38] sm:$0xff] %vm1122, %v1353
      %1399 = vst.msk [vmem:[#allocation2 + $0x50] sm:$0xff] %vm1122, %v1355
      %1400 = vst.msk [vmem:[#allocation2 + $0x68] sm:$0xff] %vm1122, %v1357
      %1401 = vst.msk [vmem:[#allocation2 + $0x80] sm:$0xff] %vm1122, %v1359
      %1402 = vst.msk [vmem:[#allocation2 + $0x98] sm:$0xff] %vm1122, %v1361
      %1403 = vst.msk [vmem:[#allocation2 + $0xb0] sm:$0xff] %vm1122, %v1363
      %1404 = vst.msk [vmem:[#allocation2 + $0xc8] sm:$0xff] %vm1122, %v1365
      %1405 = vst.msk [vmem:[#allocation2 + $0xe0] sm:$0xff] %vm1122, %v1367
      %1406 = vst.msk [vmem:[#allocation2 + $0xf8] sm:$0xff] %vm1122, %v1369
      %1407 = vst.msk [vmem:[#allocation2 + $0x110] sm:$0xff] %vm1122, %v1371
      %1408 = vst.msk [vmem:[#allocation2 + $0x128] sm:$0xff] %vm1122, %v1373
      %1409 = vst.msk [vmem:[#allocation2 + $0x140] sm:$0xff] %vm1122, %v1375
      %1410 = vst.msk [vmem:[#allocation2 + $0x158] sm:$0xff] %vm1122, %v1377
      %1411 = vst.msk [vmem:[#allocation2 + $0x170] sm:$0xff] %vm1122, %v1379
      %v1413 = vshrl.u32 %v279, 16
      %v1415 = vrot.slane %v1413, 4
      %v1416 = vshll.u32 %v279, 16
      %v1418 = vrot.slane %v1416, 5
      %v1419 = vor.u32 %v1415, %v1418
      %v1420 = vrot.slane %v1419, 4
      %v1422 = vshll.u32 %v280, 16
      %v1424 = vrot.slane %v1422, 5
      %v1425 = vsel %vm397, %v1420, %v1424
      %v1426 = vshrl.u32 %v280, 16
      %v1428 = vrot.slane %v1426, 4
      %v1429 = vor.u32 %v1428, %v1424
      %v1430 = vrot.slane %v1429, 4
      %v1432 = vshll.u32 %v281, 16
      %v1434 = vrot.slane %v1432, 5
      %v1435 = vsel %vm397, %v1430, %v1434
      %v1436 = vunpack.c.l.b16 %v1425
      %v1437 = vunpack.c.l.b16 %v1435
      %v1438 = vpack.c.b16 %v1437, %v1436
      %1439 = vrot.lane.b32.xlu0 %v816, 96
      %v1440 = vpop.permute.xlu0 %1439
      %1441 = vrot.lane.b32.xlu0 %v817, 96
      %v1442 = vpop.permute.xlu0 %1441
      %1443 = vrot.lane.b32.xlu0 %v818, 96
      %v1444 = vpop.permute.xlu0 %1443
      %1445 = vrot.lane.b32.xlu0 %v819, 96
      %v1446 = vpop.permute.xlu0 %1445
      %1447 = vrot.lane.b32.xlu0 %v820, 96
      %v1448 = vpop.permute.xlu0 %1447
      %1449 = vrot.lane.b32.xlu0 %v821, 96
      %v1450 = vpop.permute.xlu0 %1449
      %1451 = vrot.lane.b32.xlu0 %v822, 96
      %v1452 = vpop.permute.xlu0 %1451
      %1453 = vrot.lane.b32.xlu0 %v823, 96
      %v1454 = vpop.permute.xlu0 %1453
      %1455 = vrot.lane.b32.xlu0 %v824, 96
      %v1456 = vpop.permute.xlu0 %1455
      %1457 = vrot.lane.b32.xlu0 %v825, 96
      %v1458 = vpop.permute.xlu0 %1457
      %1459 = vrot.lane.b32.xlu0 %v826, 96
      %v1460 = vpop.permute.xlu0 %1459
      %1461 = vrot.lane.b32.xlu0 %v827, 96
      %v1462 = vpop.permute.xlu0 %1461
      %1463 = vrot.lane.b32.xlu0 %v828, 96
      %v1464 = vpop.permute.xlu0 %1463
      %1465 = vrot.lane.b32.xlu0 %v829, 96
      %v1466 = vpop.permute.xlu0 %1465
      %1467 = vrot.lane.b32.xlu0 %v1235, 96
      %v1468 = vpop.permute.xlu0 %1467
      %1469 = vrot.lane.b32.xlu0 %v1438, 96
      %v1470 = vpop.permute.xlu0 %1469
      %1487 = vst.msk [vmem:[#allocation2 + $0x8] sm:$0xff] %vm1192, %v1440
      %1488 = vst.msk [vmem:[#allocation2 + $0x20] sm:$0xff] %vm1192, %v1442
      %1489 = vst.msk [vmem:[#allocation2 + $0x38] sm:$0xff] %vm1192, %v1444
      %1490 = vst.msk [vmem:[#allocation2 + $0x50] sm:$0xff] %vm1192, %v1446
      %1491 = vst.msk [vmem:[#allocation2 + $0x68] sm:$0xff] %vm1192, %v1448
      %1492 = vst.msk [vmem:[#allocation2 + $0x80] sm:$0xff] %vm1192, %v1450
      %1493 = vst.msk [vmem:[#allocation2 + $0x98] sm:$0xff] %vm1192, %v1452
      %1494 = vst.msk [vmem:[#allocation2 + $0xb0] sm:$0xff] %vm1192, %v1454
      %1495 = vst.msk [vmem:[#allocation2 + $0xc8] sm:$0xff] %vm1192, %v1456
      %1496 = vst.msk [vmem:[#allocation2 + $0xe0] sm:$0xff] %vm1192, %v1458
      %1497 = vst.msk [vmem:[#allocation2 + $0xf8] sm:$0xff] %vm1192, %v1460
      %1498 = vst.msk [vmem:[#allocation2 + $0x110] sm:$0xff] %vm1192, %v1462
      %1499 = vst.msk [vmem:[#allocation2 + $0x128] sm:$0xff] %vm1192, %v1464
      %1500 = vst.msk [vmem:[#allocation2 + $0x140] sm:$0xff] %vm1192, %v1466
      %1501 = vst.msk [vmem:[#allocation2 + $0x158] sm:$0xff] %vm1192, %v1468
      %1502 = vst.msk [vmem:[#allocation2 + $0x170] sm:$0xff] %vm1192, %v1470
      %v1504 = vrot.slane %v279, 5
      %v1505 = vrot.slane %v1504, 4
      %v1506 = vrot.slane %v280, 5
      %v1507 = vsel %vm913, %v1505, %v1506
      %v1508 = vrot.slane %v1506, 4
      %v1509 = vrot.slane %v281, 5
      %v1510 = vsel %vm913, %v1508, %v1509
      %v1511 = vunpack.c.l.b16 %v1507
      %v1512 = vunpack.c.l.b16 %v1510
      %v1513 = vpack.c.b16 %v1512, %v1511
      %1530 = vst.msk [vmem:[#allocation2 + $0x10] sm:$0xff] %vm378, %v1060
      %1531 = vst.msk [vmem:[#allocation2 + $0x28] sm:$0xff] %vm378, %v1061
      %1532 = vst.msk [vmem:[#allocation2 + $0x40] sm:$0xff] %vm378, %v1062
      %1533 = vst.msk [vmem:[#allocation2 + $0x58] sm:$0xff] %vm378, %v1063
      %1534 = vst.msk [vmem:[#allocation2 + $0x70] sm:$0xff] %vm378, %v1064
      %1535 = vst.msk [vmem:[#allocation2 + $0x88] sm:$0xff] %vm378, %v1065
      %1536 = vst.msk [vmem:[#allocation2 + $0xa0] sm:$0xff] %vm378, %v1066
      %1537 = vst.msk [vmem:[#allocation2 + $0xb8] sm:$0xff] %vm378, %v1067
      %1538 = vst.msk [vmem:[#allocation2 + $0xd0] sm:$0xff] %vm378, %v1068
      %1539 = vst.msk [vmem:[#allocation2 + $0xe8] sm:$0xff] %vm378, %v1069
      %1540 = vst.msk [vmem:[#allocation2 + $0x100] sm:$0xff] %vm378, %v1070
      %1541 = vst.msk [vmem:[#allocation2 + $0x118] sm:$0xff] %vm378, %v1071
      %1542 = vst.msk [vmem:[#allocation2 + $0x130] sm:$0xff] %vm378, %v1072
      %1543 = vst.msk [vmem:[#allocation2 + $0x148] sm:$0xff] %vm378, %v1073
      %1544 = vst.msk [vmem:[#allocation2 + $0x160] sm:$0xff] %vm378, %v1278
      %1545 = vst.msk [vmem:[#allocation2 + $0x178] sm:$0xff] %vm378, %v1513
      %v1546 = vld [vmem:[#allocation2] sm:$0xff]
      %v1547 = vld [vmem:[#allocation2 + $0x8] sm:$0xff]
      %v1548 = vld [vmem:[#allocation2 + $0x10] sm:$0xff]
      %v1549 = vld [vmem:[#allocation2 + $0x18] sm:$0xff]
      %v1550 = vld [vmem:[#allocation2 + $0x20] sm:$0xff]
      %v1551 = vld [vmem:[#allocation2 + $0x28] sm:$0xff]
      %v1552 = vld [vmem:[#allocation2 + $0x30] sm:$0xff]
      %v1553 = vld [vmem:[#allocation2 + $0x38] sm:$0xff]
      %v1554 = vld [vmem:[#allocation2 + $0x40] sm:$0xff]
      %v1555 = vld [vmem:[#allocation2 + $0x48] sm:$0xff]
      %v1556 = vld [vmem:[#allocation2 + $0x50] sm:$0xff]
      %v1557 = vld [vmem:[#allocation2 + $0x58] sm:$0xff]
      %v1558 = vld [vmem:[#allocation2 + $0x60] sm:$0xff]
      %v1559 = vld [vmem:[#allocation2 + $0x68] sm:$0xff]
      %v1560 = vld [vmem:[#allocation2 + $0x70] sm:$0xff]
      %v1561 = vld [vmem:[#allocation2 + $0x78] sm:$0xff]
      %v1562 = vld [vmem:[#allocation2 + $0x80] sm:$0xff]
      %v1563 = vld [vmem:[#allocation2 + $0x88] sm:$0xff]
      %v1564 = vld [vmem:[#allocation2 + $0x90] sm:$0xff]
      %v1565 = vld [vmem:[#allocation2 + $0x98] sm:$0xff]
      %v1566 = vld [vmem:[#allocation2 + $0xa0] sm:$0xff]
      %v1567 = vld [vmem:[#allocation2 + $0xa8] sm:$0xff]
      %v1568 = vld [vmem:[#allocation2 + $0xb0] sm:$0xff]
      %v1569 = vld [vmem:[#allocation2 + $0xb8] sm:$0xff]
      %v1570 = vld [vmem:[#allocation2 + $0xc0] sm:$0xff]
      %v1571 = vld [vmem:[#allocation2 + $0xc8] sm:$0xff]
      %v1572 = vld [vmem:[#allocation2 + $0xd0] sm:$0xff]
      %v1573 = vld [vmem:[#allocation2 + $0xd8] sm:$0xff]
      %v1574 = vld [vmem:[#allocation2 + $0xe0] sm:$0xff]
      %v1575 = vld [vmem:[#allocation2 + $0xe8] sm:$0xff]
      %v1576 = vld [vmem:[#allocation2 + $0xf0] sm:$0xff]
      %v1577 = vld [vmem:[#allocation2 + $0xf8] sm:$0xff]
      %v1578 = vld [vmem:[#allocation2 + $0x100] sm:$0xff]
      %v1579 = vld [vmem:[#allocation2 + $0x108] sm:$0xff]
      %v1580 = vld [vmem:[#allocation2 + $0x110] sm:$0xff]
      %v1581 = vld [vmem:[#allocation2 + $0x118] sm:$0xff]
      %v1582 = vld [vmem:[#allocation2 + $0x120] sm:$0xff]
      %v1583 = vld [vmem:[#allocation2 + $0x128] sm:$0xff]
      %v1584 = vld [vmem:[#allocation2 + $0x130] sm:$0xff]
      %v1585 = vld [vmem:[#allocation2 + $0x138] sm:$0xff]
      %v1586 = vld [vmem:[#allocation2 + $0x140] sm:$0xff]
      %v1587 = vld [vmem:[#allocation2 + $0x148] sm:$0xff]
      %v1588 = vld [vmem:[#allocation2 + $0x150] sm:$0xff]
      %v1589 = vld [vmem:[#allocation2 + $0x158] sm:$0xff]
      %v1590 = vld [vmem:[#allocation2 + $0x160] sm:$0xff]
      %v1591 = vld [vmem:[#allocation2 + $0x168] sm:$0xff]
      %v1592 = vld [vmem:[#allocation2 + $0x170] sm:$0xff]
      %v1593 = vld [vmem:[#allocation2 + $0x178] sm:$0xff]
      %v1594 = vld [vmem:[%s211] sm:$0xf]
      %v1595 = vld [vmem:[%s211 + $0x4] sm:$0xf]
      %v1596 = vld [vmem:[%s211 + $0x8] sm:$0xf]
      %v1597 = vld [vmem:[%s211 + $0xc] sm:$0xf]
      %v1598 = vld [vmem:[%s211 + $0x10] sm:$0xf]
      %v1599 = vld [vmem:[%s211 + $0x14] sm:$0xf]
      %v1600 = vld [vmem:[%s211 + $0x18] sm:$0xf]
      %v1601 = vld [vmem:[%s211 + $0x1c] sm:$0xf]
      %v1602 = vld [vmem:[%s211 + $0x20] sm:$0xf]
      %v1603 = vld [vmem:[%s211 + $0x24] sm:$0xf]
      %v1604 = vld [vmem:[%s211 + $0x28] sm:$0xf]
      %v1605 = vld [vmem:[%s211 + $0x2c] sm:$0xf]
      %v1606 = vld [vmem:[%s211 + $0x30] sm:$0xf]
      %v1607 = vld [vmem:[%s211 + $0x34] sm:$0xf]
      %v1608 = vld [vmem:[%s211 + $0x38] sm:$0xf]
      %v1609 = vld [vmem:[%s211 + $0x3c] sm:$0xf]
      %v1610 = vld [vmem:[%s211 + $0x40] sm:$0xf]
      %v1611 = vld [vmem:[%s211 + $0x44] sm:$0xf]
      %v1612 = vld [vmem:[%s211 + $0x48] sm:$0xf]
      %v1613 = vld [vmem:[%s211 + $0x4c] sm:$0xf]
      %v1614 = vld [vmem:[%s211 + $0x50] sm:$0xf]
      %v1615 = vld [vmem:[%s211 + $0x54] sm:$0xf]
      %v1616 = vld [vmem:[%s211 + $0x58] sm:$0xf]
      %v1617 = vld [vmem:[%s211 + $0x5c] sm:$0xf]
      %v1618 = vld [vmem:[%s211 + $0x60] sm:$0xf]
      %v1619 = vld [vmem:[%s211 + $0x64] sm:$0xf]
      %v1620 = vld [vmem:[%s211 + $0x68] sm:$0xf]
      %v1621 = vld [vmem:[%s211 + $0x6c] sm:$0xf]
      %v1622 = vld [vmem:[%s211 + $0x70] sm:$0xf]
      %v1623 = vld [vmem:[%s211 + $0x74] sm:$0xf]
      %v1624 = vld [vmem:[%s211 + $0x78] sm:$0xf]
      %v1625 = vld [vmem:[%s211 + $0x7c] sm:$0xf]
      %v1626 = vld [vmem:[%s211 + $0x80] sm:$0xf]
      %v1627 = vld [vmem:[%s211 + $0x84] sm:$0xf]
      %v1628 = vld [vmem:[%s211 + $0x88] sm:$0xf]
      %v1629 = vld [vmem:[%s211 + $0x8c] sm:$0xf]
      %v1666 = vunpack.c.l.b16 %v1594
      %v1667 = vunpack.c.l.b16 %v1595
      %v1668 = vunpack.c.l.b16 %v1596
      %v1669 = vunpack.c.l.b16 %v1597
      %v1670 = vunpack.c.l.b16 %v1598
      %v1671 = vunpack.c.l.b16 %v1599
      %v1672 = vunpack.c.l.b16 %v1600
      %v1673 = vunpack.c.l.b16 %v1601
      %v1674 = vunpack.c.l.b16 %v1602
      %v1675 = vunpack.c.l.b16 %v1603
      %v1676 = vunpack.c.l.b16 %v1604
      %v1677 = vunpack.c.l.b16 %v1605
      %v1678 = vunpack.c.l.b16 %v1606
      %v1679 = vunpack.c.l.b16 %v1607
      %v1680 = vunpack.c.l.b16 %v1608
      %v1681 = vunpack.c.l.b16 %v1609
      %v1682 = vunpack.c.l.b16 %v1610
      %v1683 = vunpack.c.l.b16 %v1611
      %v1684 = vunpack.c.l.b16 %v1612
      %v1685 = vunpack.c.l.b16 %v1613
      %v1686 = vunpack.c.l.b16 %v1614
      %v1687 = vunpack.c.l.b16 %v1615
      %v1688 = vunpack.c.l.b16 %v1616
      %v1689 = vunpack.c.l.b16 %v1617
      %v1690 = vunpack.c.l.b16 %v1618
      %v1691 = vunpack.c.l.b16 %v1619
      %v1692 = vunpack.c.l.b16 %v1620
      %v1693 = vunpack.c.l.b16 %v1621
      %v1694 = vunpack.c.l.b16 %v1622
      %v1695 = vunpack.c.l.b16 %v1623
      %v1696 = vunpack.c.l.b16 %v1624
      %v1697 = vunpack.c.l.b16 %v1625
      %v1698 = vunpack.c.l.b16 %v1626
      %v1699 = vunpack.c.l.b16 %v1627
      %v1700 = vunpack.c.l.b16 %v1628
      %v1701 = vunpack.c.l.b16 %v1629
      %v1702 = vpack.c.b16 %v1667, %v1666
      %v1703 = vpack.c.b16 %v1669, %v1668
      %v1704 = vpack.c.b16 %v1671, %v1670
      %v1705 = vpack.c.b16 %v1673, %v1672
      %v1706 = vpack.c.b16 %v1675, %v1674
      %v1707 = vpack.c.b16 %v1677, %v1676
      %v1708 = vpack.c.b16 %v1679, %v1678
      %v1709 = vpack.c.b16 %v1681, %v1680
      %v1710 = vpack.c.b16 %v1683, %v1682
      %v1711 = vpack.c.b16 %v1685, %v1684
      %v1712 = vpack.c.b16 %v1687, %v1686
      %v1713 = vpack.c.b16 %v1689, %v1688
      %v1714 = vpack.c.b16 %v1691, %v1690
      %v1715 = vpack.c.b16 %v1693, %v1692
      %v1716 = vpack.c.b16 %v1695, %v1694
      %v1717 = vpack.c.b16 %v1697, %v1696
      %v1718 = vpack.c.b16 %v1699, %v1698
      %v1719 = vpack.c.b16 %v1701, %v1700
      %v1739 = vsel %vm378, %v1548, 0
      %v1742 = vsel %vm378, %v1551, 0
      %v1745 = vsel %vm378, %v1554, 0
      %v1748 = vsel %vm378, %v1557, 0
      %v1751 = vsel %vm378, %v1560, 0
      %v1754 = vsel %vm378, %v1563, 0
      %v1757 = vsel %vm378, %v1566, 0
      %v1760 = vsel %vm378, %v1569, 0
      %v1763 = vsel %vm378, %v1572, 0
      %v1766 = vsel %vm378, %v1575, 0
      %v1769 = vsel %vm378, %v1578, 0
      %v1772 = vsel %vm378, %v1581, 0
      %v1775 = vsel %vm378, %v1584, 0
      %v1778 = vsel %vm378, %v1587, 0
      %v1781 = vsel %vm378, %v1590, 0
      %v1784 = vsel %vm378, %v1593, 0
      %1786 = vmatprep.subr.bf16.mxu0 0
      %1787 = vmatpush1.bf16.msra.mxu0 %v1702
      %1788 = vmatprep.subr.bf16.mxu0 0
      %1789 = vmatpush1.bf16.msra.mxu0 %v1703
      %1790 = vmatprep.subr.bf16.mxu0 0
      %1791 = vmatpush1.bf16.msra.mxu0 %v1704
      %1792 = vmatprep.subr.bf16.mxu0 0
      %1793 = vmatpush1.bf16.msra.mxu0 %v1705
      %1794 = vmatprep.subr.bf16.mxu0 0
      %1795 = vmatpush1.bf16.msra.mxu0 %v1706
      %1796 = vmatprep.subr.bf16.mxu0 0
      %1797 = vmatpush1.bf16.msra.mxu0 %v1707
      %1798 = vmatprep.subr.bf16.mxu0 0
      %1799 = vmatpush1.bf16.msra.mxu0 %v1708
      %1800 = vmatprep.subr.bf16.mxu0 0
      %1801 = vmatpush1.bf16.msra.mxu0 %v1709
      %1802 = vmatprep.subr.bf16.mxu0 0
      %1803 = vmatpush1.bf16.msra.mxu0 %v1710
      %1804 = vmatprep.subr.bf16.mxu0 0
      %1805 = vmatpush1.bf16.msra.mxu0 %v1711
      %1806 = vmatprep.subr.bf16.mxu0 0
      %1807 = vmatpush1.bf16.msra.mxu0 %v1712
      %1808 = vmatprep.subr.bf16.mxu0 0
      %1809 = vmatpush1.bf16.msra.mxu0 %v1713
      %1810 = vmatprep.subr.bf16.mxu0 0
      %1811 = vmatpush1.bf16.msra.mxu0 %v1714
      %1812 = vmatprep.subr.bf16.mxu0 0
      %1813 = vmatpush1.bf16.msra.mxu0 %v1715
      %1814 = vmatprep.subr.bf16.mxu0 0
      %1815 = vmatpush1.bf16.msra.mxu0 %v1716
      %1816 = vmatprep.subr.bf16.mxu0 0
      %1817 = vmatpush1.bf16.msra.mxu0 %v1717
      %1818 = vmatprep.mubr.bf16.mxu0 %v1547
      %1819 = vmatmul.mubr.bf16.gmra.mrb[0].mxu0 %v1546
      %v1820 = vpop.f32.mrb[0].mxu0
      %v1821 = vadd.f32 0.0, %v1820
      %v1822 = vpop.f32.mrb[0].mxu0
      %v1823 = vpop.f32.mrb[0].mxu0
      %v1824 = vadd.f32 0.0, %v1823
      %v1825 = vpop.f32.mrb[0].mxu0
      %1826 = vmatprep.mubr.bf16.mxu0 %v1550
      %1827 = vmatmul.mubr.bf16.gmra.mrb[0].mxu0 %v1549
      %v1828 = vpop.f32.mrb[0].mxu0
      %v1829 = vadd.f32 0.0, %v1828
      %v1830 = vpop.f32.mrb[0].mxu0
      %v1831 = vpop.f32.mrb[0].mxu0
      %v1832 = vadd.f32 0.0, %v1831
      %v1833 = vpop.f32.mrb[0].mxu0
      %1834 = vmatprep.mubr.bf16.mxu0 %v1553
      %1835 = vmatmul.mubr.bf16.gmra.mrb[0].mxu0 %v1552
      %v1836 = vpop.f32.mrb[0].mxu0
      %v1837 = vadd.f32 0.0, %v1836
      %v1838 = vpop.f32.mrb[0].mxu0
      %v1839 = vpop.f32.mrb[0].mxu0
      %v1840 = vadd.f32 0.0, %v1839
      %v1841 = vpop.f32.mrb[0].mxu0
      %1842 = vmatprep.mubr.bf16.mxu0 %v1556
      %1843 = vmatmul.mubr.bf16.gmra.mrb[0].mxu0 %v1555
      %v1844 = vpop.f32.mrb[0].mxu0
      %v1845 = vadd.f32 0.0, %v1844
      %v1846 = vpop.f32.mrb[0].mxu0
      %v1847 = vpop.f32.mrb[0].mxu0
      %v1848 = vadd.f32 0.0, %v1847
      %v1849 = vpop.f32.mrb[0].mxu0
      %1850 = vmatprep.mubr.bf16.mxu0 %v1559
      %1851 = vmatmul.mubr.bf16.gmra.mrb[0].mxu0 %v1558
      %v1852 = vpop.f32.mrb[0].mxu0
      %v1853 = vadd.f32 0.0, %v1852
      %v1854 = vpop.f32.mrb[0].mxu0
      %v1855 = vpop.f32.mrb[0].mxu0
      %v1856 = vadd.f32 0.0, %v1855
      %v1857 = vpop.f32.mrb[0].mxu0
      %1858 = vmatprep.mubr.bf16.mxu0 %v1562
      %1859 = vmatmul.mubr.bf16.gmra.mrb[0].mxu0 %v1561
      %v1860 = vpop.f32.mrb[0].mxu0
      %v1861 = vadd.f32 0.0, %v1860
      %v1862 = vpop.f32.mrb[0].mxu0
      %v1863 = vpop.f32.mrb[0].mxu0
      %v1864 = vadd.f32 0.0, %v1863
      %v1865 = vpop.f32.mrb[0].mxu0
      %1866 = vmatprep.mubr.bf16.mxu0 %v1565
      %1867 = vmatmul.mubr.bf16.gmra.mrb[0].mxu0 %v1564
      %v1868 = vpop.f32.mrb[0].mxu0
      %v1869 = vadd.f32 0.0, %v1868
      %v1870 = vpop.f32.mrb[0].mxu0
      %v1871 = vpop.f32.mrb[0].mxu0
      %v1872 = vadd.f32 0.0, %v1871
      %v1873 = vpop.f32.mrb[0].mxu0
      %1874 = vmatprep.mubr.bf16.mxu0 %v1568
      %1875 = vmatmul.mubr.bf16.gmra.mrb[0].mxu0 %v1567
      %v1876 = vpop.f32.mrb[0].mxu0
      %v1877 = vadd.f32 0.0, %v1876
      %v1878 = vpop.f32.mrb[0].mxu0
      %v1879 = vpop.f32.mrb[0].mxu0
      %v1880 = vadd.f32 0.0, %v1879
      %v1881 = vpop.f32.mrb[0].mxu0
      %1882 = vmatprep.mubr.bf16.mxu0 %v1571
      %1883 = vmatmul.mubr.bf16.gmra.mrb[0].mxu0 %v1570
      %v1884 = vpop.f32.mrb[0].mxu0
      %v1885 = vadd.f32 0.0, %v1884
      %v1886 = vpop.f32.mrb[0].mxu0
      %v1887 = vpop.f32.mrb[0].mxu0
      %v1888 = vadd.f32 0.0, %v1887
      %v1889 = vpop.f32.mrb[0].mxu0
      %1890 = vmatprep.mubr.bf16.mxu0 %v1574
      %1891 = vmatmul.mubr.bf16.gmra.mrb[0].mxu0 %v1573
      %v1892 = vpop.f32.mrb[0].mxu0
      %v1893 = vadd.f32 0.0, %v1892
      %v1894 = vpop.f32.mrb[0].mxu0
      %v1895 = vpop.f32.mrb[0].mxu0
      %v1896 = vadd.f32 0.0, %v1895
      %v1897 = vpop.f32.mrb[0].mxu0
      %1898 = vmatprep.mubr.bf16.mxu0 %v1577
      %1899 = vmatmul.mubr.bf16.gmra.mrb[0].mxu0 %v1576
      %v1900 = vpop.f32.mrb[0].mxu0
      %v1901 = vadd.f32 0.0, %v1900
      %v1902 = vpop.f32.mrb[0].mxu0
      %v1903 = vpop.f32.mrb[0].mxu0
      %v1904 = vadd.f32 0.0, %v1903
      %v1905 = vpop.f32.mrb[0].mxu0
      %1906 = vmatprep.mubr.bf16.mxu0 %v1580
      %1907 = vmatmul.mubr.bf16.gmra.mrb[0].mxu0 %v1579
      %v1908 = vpop.f32.mrb[0].mxu0
      %v1909 = vadd.f32 0.0, %v1908
      %v1910 = vpop.f32.mrb[0].mxu0
      %v1911 = vpop.f32.mrb[0].mxu0
      %v1912 = vadd.f32 0.0, %v1911
      %v1913 = vpop.f32.mrb[0].mxu0
      %1914 = vmatprep.mubr.bf16.mxu0 %v1583
      %1915 = vmatmul.mubr.bf16.gmra.mrb[0].mxu0 %v1582
      %v1916 = vpop.f32.mrb[0].mxu0
      %v1917 = vadd.f32 0.0, %v1916
      %v1918 = vpop.f32.mrb[0].mxu0
      %v1919 = vpop.f32.mrb[0].mxu0
      %v1920 = vadd.f32 0.0, %v1919
      %v1921 = vpop.f32.mrb[0].mxu0
      %1922 = vmatprep.mubr.bf16.mxu0 %v1586
      %1923 = vmatmul.mubr.bf16.gmra.mrb[0].mxu0 %v1585
      %v1924 = vpop.f32.mrb[0].mxu0
      %v1925 = vadd.f32 0.0, %v1924
      %v1926 = vpop.f32.mrb[0].mxu0
      %v1927 = vpop.f32.mrb[0].mxu0
      %v1928 = vadd.f32 0.0, %v1927
      %v1929 = vpop.f32.mrb[0].mxu0
      %1930 = vmatprep.mubr.bf16.mxu0 %v1589
      %1931 = vmatmul.mubr.bf16.gmra.mrb[0].mxu0 %v1588
      %v1932 = vpop.f32.mrb[0].mxu0
      %v1933 = vadd.f32 0.0, %v1932
      %v1934 = vpop.f32.mrb[0].mxu0
      %v1935 = vpop.f32.mrb[0].mxu0
      %v1936 = vadd.f32 0.0, %v1935
      %v1937 = vpop.f32.mrb[0].mxu0
      %1938 = vmatprep.mubr.bf16.mxu0 %v1592
      %1939 = vmatmul.mubr.bf16.gmra.mrb[0].mxu0 %v1591
      %v1940 = vpop.f32.mrb[0].mxu0
      %v1941 = vadd.f32 0.0, %v1940
      %v1942 = vpop.f32.mrb[0].mxu0
      %v1943 = vpop.f32.mrb[0].mxu0
      %v1944 = vadd.f32 0.0, %v1943
      %v1945 = vpop.f32.mrb[0].mxu0
      %1946 = vdwg.mxu0
      %1947 = vmatprep.subr.bf16.mxu0 0
      %1948 = vmatpush1.bf16.msra.mxu0 %v1718
      %1949 = vmatprep.subr.bf16.mxu0 0
      %1950 = vmatpush1.bf16.msra.mxu0 %v1719
      %1951 = vmatprep.subr.bf16.mxu0 0
      %1952 = vmatpush1.bf16.msra.mxu0 0
      %1953 = vmatprep.subr.bf16.mxu0 0
      %1954 = vmatpush1.bf16.msra.mxu0 0
      %1955 = vmatprep.subr.bf16.mxu0 0
      %1956 = vmatpush1.bf16.msra.mxu0 0
      %1957 = vmatprep.subr.bf16.mxu0 0
      %1958 = vmatpush1.bf16.msra.mxu0 0
      %1959 = vmatprep.subr.bf16.mxu0 0
      %1960 = vmatpush1.bf16.msra.mxu0 0
      %1961 = vmatprep.subr.bf16.mxu0 0
      %1962 = vmatpush1.bf16.msra.mxu0 0
      %1963 = vmatprep.subr.bf16.mxu0 0
      %1964 = vmatpush1.bf16.msra.mxu0 0
      %1965 = vmatprep.subr.bf16.mxu0 0
      %1966 = vmatpush1.bf16.msra.mxu0 0
      %1967 = vmatprep.subr.bf16.mxu0 0
      %1968 = vmatpush1.bf16.msra.mxu0 0
      %1969 = vmatprep.subr.bf16.mxu0 0
      %1970 = vmatpush1.bf16.msra.mxu0 0
      %1971 = vmatprep.subr.bf16.mxu0 0
      %1972 = vmatpush1.bf16.msra.mxu0 0
      %1973 = vmatprep.subr.bf16.mxu0 0
      %1974 = vmatpush1.bf16.msra.mxu0 0
      %1975 = vmatprep.subr.bf16.mxu0 0
      %1976 = vmatpush1.bf16.msra.mxu0 0
      %1977 = vmatprep.subr.bf16.mxu0 0
      %1978 = vmatpush1.bf16.msra.mxu0 0
      %1979 = vmatprep.mubr.bf16.mxu0 0
      %1980 = vmatmul.mubr.bf16.gmra.mrb[0].mxu0 %v1739
      %v1981 = vpop.f32.mrb[0].mxu0
      %v1982 = vadd.f32 %v1821, %v1981
      %v1983 = vpop.f32.mrb[0].mxu0
      %v1984 = vpop.f32.mrb[0].mxu0
      %v1985 = vadd.f32 %v1824, %v1984
      %v1986 = vpop.f32.mrb[0].mxu0
      %1987 = vmatprep.mubr.bf16.mxu0 0
      %1988 = vmatmul.mubr.bf16.gmra.mrb[0].mxu0 %v1742
      %v1989 = vpop.f32.mrb[0].mxu0
      %v1990 = vadd.f32 %v1829, %v1989
      %v1991 = vpop.f32.mrb[0].mxu0
      %v1992 = vpop.f32.mrb[0].mxu0
      %v1993 = vadd.f32 %v1832, %v1992
      %v1994 = vpop.f32.mrb[0].mxu0
      %1995 = vmatprep.mubr.bf16.mxu0 0
      %1996 = vmatmul.mubr.bf16.gmra.mrb[0].mxu0 %v1745
      %v1997 = vpop.f32.mrb[0].mxu0
      %v1998 = vadd.f32 %v1837, %v1997
      %v1999 = vpop.f32.mrb[0].mxu0
      %v2000 = vpop.f32.mrb[0].mxu0
      %v2001 = vadd.f32 %v1840, %v2000
      %v2002 = vpop.f32.mrb[0].mxu0
      %2003 = vmatprep.mubr.bf16.mxu0 0
      %2004 = vmatmul.mubr.bf16.gmra.mrb[0].mxu0 %v1748
      %v2005 = vpop.f32.mrb[0].mxu0
      %v2006 = vadd.f32 %v1845, %v2005
      %v2007 = vpop.f32.mrb[0].mxu0
      %v2008 = vpop.f32.mrb[0].mxu0
      %v2009 = vadd.f32 %v1848, %v2008
      %v2010 = vpop.f32.mrb[0].mxu0
      %2011 = vmatprep.mubr.bf16.mxu0 0
      %2012 = vmatmul.mubr.bf16.gmra.mrb[0].mxu0 %v1751
      %v2013 = vpop.f32.mrb[0].mxu0
      %v2014 = vadd.f32 %v1853, %v2013
      %v2015 = vpop.f32.mrb[0].mxu0
      %v2016 = vpop.f32.mrb[0].mxu0
      %v2017 = vadd.f32 %v1856, %v2016
      %v2018 = vpop.f32.mrb[0].mxu0
      %2019 = vmatprep.mubr.bf16.mxu0 0
      %2020 = vmatmul.mubr.bf16.gmra.mrb[0].mxu0 %v1754
      %v2021 = vpop.f32.mrb[0].mxu0
      %v2022 = vadd.f32 %v1861, %v2021
      %v2023 = vpop.f32.mrb[0].mxu0
      %v2024 = vpop.f32.mrb[0].mxu0
      %v2025 = vadd.f32 %v1864, %v2024
      %v2026 = vpop.f32.mrb[0].mxu0
      %2027 = vmatprep.mubr.bf16.mxu0 0
      %2028 = vmatmul.mubr.bf16.gmra.mrb[0].mxu0 %v1757
      %v2029 = vpop.f32.mrb[0].mxu0
      %v2030 = vadd.f32 %v1869, %v2029
      %v2031 = vpop.f32.mrb[0].mxu0
      %v2032 = vpop.f32.mrb[0].mxu0
      %v2033 = vadd.f32 %v1872, %v2032
      %v2034 = vpop.f32.mrb[0].mxu0
      %2035 = vmatprep.mubr.bf16.mxu0 0
      %2036 = vmatmul.mubr.bf16.gmra.mrb[0].mxu0 %v1760
      %v2037 = vpop.f32.mrb[0].mxu0
      %v2038 = vadd.f32 %v1877, %v2037
      %v2039 = vpop.f32.mrb[0].mxu0
      %v2040 = vpop.f32.mrb[0].mxu0
      %v2041 = vadd.f32 %v1880, %v2040
      %v2042 = vpop.f32.mrb[0].mxu0
      %2043 = vmatprep.mubr.bf16.mxu0 0
      %2044 = vmatmul.mubr.bf16.gmra.mrb[0].mxu0 %v1763
      %v2045 = vpop.f32.mrb[0].mxu0
      %v2046 = vadd.f32 %v1885, %v2045
      %v2047 = vpop.f32.mrb[0].mxu0
      %v2048 = vpop.f32.mrb[0].mxu0
      %v2049 = vadd.f32 %v1888, %v2048
      %v2050 = vpop.f32.mrb[0].mxu0
      %2051 = vmatprep.mubr.bf16.mxu0 0
      %2052 = vmatmul.mubr.bf16.gmra.mrb[0].mxu0 %v1766
      %v2053 = vpop.f32.mrb[0].mxu0
      %v2054 = vadd.f32 %v1893, %v2053
      %v2055 = vpop.f32.mrb[0].mxu0
      %v2056 = vpop.f32.mrb[0].mxu0
      %v2057 = vadd.f32 %v1896, %v2056
      %v2058 = vpop.f32.mrb[0].mxu0
      %2059 = vmatprep.mubr.bf16.mxu0 0
      %2060 = vmatmul.mubr.bf16.gmra.mrb[0].mxu0 %v1769
      %v2061 = vpop.f32.mrb[0].mxu0
      %v2062 = vadd.f32 %v1901, %v2061
      %v2063 = vpop.f32.mrb[0].mxu0
      %v2064 = vpop.f32.mrb[0].mxu0
      %v2065 = vadd.f32 %v1904, %v2064
      %v2066 = vpop.f32.mrb[0].mxu0
      %2067 = vmatprep.mubr.bf16.mxu0 0
      %2068 = vmatmul.mubr.bf16.gmra.mrb[0].mxu0 %v1772
      %v2069 = vpop.f32.mrb[0].mxu0
      %v2070 = vadd.f32 %v1909, %v2069
      %v2071 = vpop.f32.mrb[0].mxu0
      %v2072 = vpop.f32.mrb[0].mxu0
      %v2073 = vadd.f32 %v1912, %v2072
      %v2074 = vpop.f32.mrb[0].mxu0
      %2075 = vmatprep.mubr.bf16.mxu0 0
      %2076 = vmatmul.mubr.bf16.gmra.mrb[0].mxu0 %v1775
      %v2077 = vpop.f32.mrb[0].mxu0
      %v2078 = vadd.f32 %v1917, %v2077
      %v2079 = vpop.f32.mrb[0].mxu0
      %v2080 = vpop.f32.mrb[0].mxu0
      %v2081 = vadd.f32 %v1920, %v2080
      %v2082 = vpop.f32.mrb[0].mxu0
      %2083 = vmatprep.mubr.bf16.mxu0 0
      %2084 = vmatmul.mubr.bf16.gmra.mrb[0].mxu0 %v1778
      %v2085 = vpop.f32.mrb[0].mxu0
      %v2086 = vadd.f32 %v1925, %v2085
      %v2087 = vpop.f32.mrb[0].mxu0
      %v2088 = vpop.f32.mrb[0].mxu0
      %v2089 = vadd.f32 %v1928, %v2088
      %v2090 = vpop.f32.mrb[0].mxu0
      %2091 = vmatprep.mubr.bf16.mxu0 0
      %2092 = vmatmul.mubr.bf16.gmra.mrb[0].mxu0 %v1781
      %v2093 = vpop.f32.mrb[0].mxu0
      %v2094 = vadd.f32 %v1933, %v2093
      %v2095 = vpop.f32.mrb[0].mxu0
      %v2096 = vpop.f32.mrb[0].mxu0
      %v2097 = vadd.f32 %v1936, %v2096
      %v2098 = vpop.f32.mrb[0].mxu0
      %2099 = vmatprep.mubr.bf16.mxu0 0
      %2100 = vmatmul.mubr.bf16.gmra.mrb[0].mxu0 %v1784
      %v2101 = vpop.f32.mrb[0].mxu0
      %v2102 = vadd.f32 %v1941, %v2101
      %v2103 = vpop.f32.mrb[0].mxu0
      %v2104 = vpop.f32.mrb[0].mxu0
      %v2105 = vadd.f32 %v1944, %v2104
      %v2106 = vpop.f32.mrb[0].mxu0
      %2107 = vdwg.mxu0
      %v2108 = vpack.c.bf16 %v1985, %v1982
      %v2109 = vpack.c.bf16 %v1993, %v1990
      %v2110 = vpack.c.bf16 %v2001, %v1998
      %v2111 = vpack.c.bf16 %v2009, %v2006
      %v2112 = vpack.c.bf16 %v2017, %v2014
      %v2113 = vpack.c.bf16 %v2025, %v2022
      %v2114 = vpack.c.bf16 %v2033, %v2030
      %v2115 = vpack.c.bf16 %v2041, %v2038
      %v2116 = vpack.c.bf16 %v2049, %v2046
      %v2117 = vpack.c.bf16 %v2057, %v2054
      %v2118 = vpack.c.bf16 %v2065, %v2062
      %v2119 = vpack.c.bf16 %v2073, %v2070
      %v2120 = vpack.c.bf16 %v2081, %v2078
      %v2121 = vpack.c.bf16 %v2089, %v2086
      %v2122 = vpack.c.bf16 %v2097, %v2094
      %v2123 = vpack.c.bf16 %v2105, %v2102
      %v2140 = vunpack.c.l.b16 %v2108
      %v2141 = vunpack.c.h.b16 %v2108
      %v2142 = vunpack.c.l.b16 %v2109
      %v2143 = vunpack.c.h.b16 %v2109
      %v2144 = vunpack.c.l.b16 %v2110
      %v2145 = vunpack.c.h.b16 %v2110
      %v2146 = vunpack.c.l.b16 %v2111
      %v2147 = vunpack.c.h.b16 %v2111
      %v2148 = vunpack.c.l.b16 %v2112
      %v2149 = vunpack.c.h.b16 %v2112
      %v2150 = vunpack.c.l.b16 %v2113
      %v2151 = vunpack.c.h.b16 %v2113
      %v2152 = vunpack.c.l.b16 %v2114
      %v2153 = vunpack.c.h.b16 %v2114
      %v2154 = vunpack.c.l.b16 %v2115
      %v2155 = vunpack.c.h.b16 %v2115
      %v2156 = vunpack.c.l.b16 %v2116
      %v2157 = vunpack.c.h.b16 %v2116
      %v2158 = vunpack.c.l.b16 %v2117
      %v2159 = vunpack.c.h.b16 %v2117
      %v2160 = vunpack.c.l.b16 %v2118
      %v2161 = vunpack.c.h.b16 %v2118
      %v2162 = vunpack.c.l.b16 %v2119
      %v2163 = vunpack.c.h.b16 %v2119
      %v2164 = vunpack.c.l.b16 %v2120
      %v2165 = vunpack.c.h.b16 %v2120
      %v2166 = vunpack.c.l.b16 %v2121
      %v2167 = vunpack.c.h.b16 %v2121
      %v2168 = vunpack.c.l.b16 %v2122
      %v2169 = vunpack.c.h.b16 %v2122
      %v2170 = vunpack.c.l.b16 %v2123
      %v2171 = vunpack.c.h.b16 %v2123
      %v2172 = vpack.c.b16 %v2140, %v2140
      %v2173 = vpack.c.b16 %v2141, %v2141
      %v2174 = vpack.c.b16 %v2142, %v2142
      %v2175 = vpack.c.b16 %v2143, %v2143
      %v2176 = vpack.c.b16 %v2144, %v2144
      %v2177 = vpack.c.b16 %v2145, %v2145
      %v2178 = vpack.c.b16 %v2146, %v2146
      %v2179 = vpack.c.b16 %v2147, %v2147
      %v2180 = vpack.c.b16 %v2148, %v2148
      %v2181 = vpack.c.b16 %v2149, %v2149
      %v2182 = vpack.c.b16 %v2150, %v2150
      %v2183 = vpack.c.b16 %v2151, %v2151
      %v2184 = vpack.c.b16 %v2152, %v2152
      %v2185 = vpack.c.b16 %v2153, %v2153
      %v2186 = vpack.c.b16 %v2154, %v2154
      %v2187 = vpack.c.b16 %v2155, %v2155
      %v2188 = vpack.c.b16 %v2156, %v2156
      %v2189 = vpack.c.b16 %v2157, %v2157
      %v2190 = vpack.c.b16 %v2158, %v2158
      %v2191 = vpack.c.b16 %v2159, %v2159
      %v2192 = vpack.c.b16 %v2160, %v2160
      %v2193 = vpack.c.b16 %v2161, %v2161
      %v2194 = vpack.c.b16 %v2162, %v2162
      %v2195 = vpack.c.b16 %v2163, %v2163
      %v2196 = vpack.c.b16 %v2164, %v2164
      %v2197 = vpack.c.b16 %v2165, %v2165
      %v2198 = vpack.c.b16 %v2166, %v2166
      %v2199 = vpack.c.b16 %v2167, %v2167
      %v2200 = vpack.c.b16 %v2168, %v2168
      %v2201 = vpack.c.b16 %v2169, %v2169
      %v2202 = vpack.c.b16 %v2170, %v2170
      %v2203 = vpack.c.b16 %v2171, %v2171
      %vm2236 = vcmask 257024
      %2237 = vst.msk [vmem:[%s219] sm:$0xf] %vm2236, %v2172
      %2238 = vst.msk [vmem:[%s219 + $0x4] sm:$0xf] %vm2236, %v2173
      %2239 = vst.msk [vmem:[%s219 + $0x8] sm:$0xf] %vm2236, %v2174
      %2240 = vst.msk [vmem:[%s219 + $0xc] sm:$0xf] %vm2236, %v2175
      %2241 = vst.msk [vmem:[%s219 + $0x10] sm:$0xf] %vm2236, %v2176
      %2242 = vst.msk [vmem:[%s219 + $0x14] sm:$0xf] %vm2236, %v2177
      %2243 = vst.msk [vmem:[%s219 + $0x18] sm:$0xf] %vm2236, %v2178
      %2244 = vst.msk [vmem:[%s219 + $0x1c] sm:$0xf] %vm2236, %v2179
      %2245 = vst.msk [vmem:[%s219 + $0x20] sm:$0xf] %vm2236, %v2180
      %2246 = vst.msk [vmem:[%s219 + $0x24] sm:$0xf] %vm2236, %v2181
      %2247 = vst.msk [vmem:[%s219 + $0x28] sm:$0xf] %vm2236, %v2182
      %2248 = vst.msk [vmem:[%s219 + $0x2c] sm:$0xf] %vm2236, %v2183
      %2249 = vst.msk [vmem:[%s219 + $0x30] sm:$0xf] %vm2236, %v2184
      %2250 = vst.msk [vmem:[%s219 + $0x34] sm:$0xf] %vm2236, %v2185
      %2251 = vst.msk [vmem:[%s219 + $0x38] sm:$0xf] %vm2236, %v2186
      %2252 = vst.msk [vmem:[%s219 + $0x3c] sm:$0xf] %vm2236, %v2187
      %2253 = vst.msk [vmem:[%s219 + $0x40] sm:$0xf] %vm2236, %v2188
      %2254 = vst.msk [vmem:[%s219 + $0x44] sm:$0xf] %vm2236, %v2189
      %2255 = vst.msk [vmem:[%s219 + $0x48] sm:$0xf] %vm2236, %v2190
      %2256 = vst.msk [vmem:[%s219 + $0x4c] sm:$0xf] %vm2236, %v2191
      %2257 = vst.msk [vmem:[%s219 + $0x50] sm:$0xf] %vm2236, %v2192
      %2258 = vst.msk [vmem:[%s219 + $0x54] sm:$0xf] %vm2236, %v2193
      %2259 = vst.msk [vmem:[%s219 + $0x58] sm:$0xf] %vm2236, %v2194
      %2260 = vst.msk [vmem:[%s219 + $0x5c] sm:$0xf] %vm2236, %v2195
      %2261 = vst.msk [vmem:[%s219 + $0x60] sm:$0xf] %vm2236, %v2196
      %2262 = vst.msk [vmem:[%s219 + $0x64] sm:$0xf] %vm2236, %v2197
      %2263 = vst.msk [vmem:[%s219 + $0x68] sm:$0xf] %vm2236, %v2198
      %2264 = vst.msk [vmem:[%s219 + $0x6c] sm:$0xf] %vm2236, %v2199
      %2265 = vst.msk [vmem:[%s219 + $0x70] sm:$0xf] %vm2236, %v2200
      %2266 = vst.msk [vmem:[%s219 + $0x74] sm:$0xf] %vm2236, %v2201
      %2267 = vst.msk [vmem:[%s219 + $0x78] sm:$0xf] %vm2236, %v2202
      %2268 = vst.msk [vmem:[%s219 + $0x7c] sm:$0xf] %vm2236, %v2203
      %v2269 = vsel %vm378, %v1982, 0.0
      %v2270 = vsel %vm378, %v1985, 0.0
      %v2271 = vadd.f32 %v2269, %v2270
      %v2272 = vsel %vm378, %v1990, 0.0
      %v2273 = vadd.f32 %v2271, %v2272
      %v2274 = vsel %vm378, %v1993, 0.0
      %v2275 = vadd.f32 %v2273, %v2274
      %v2276 = vsel %vm378, %v1998, 0.0
      %v2277 = vadd.f32 %v2275, %v2276
      %v2278 = vsel %vm378, %v2001, 0.0
      %v2279 = vadd.f32 %v2277, %v2278
      %v2280 = vsel %vm378, %v2006, 0.0
      %v2281 = vadd.f32 %v2279, %v2280
      %v2282 = vsel %vm378, %v2009, 0.0
      %v2283 = vadd.f32 %v2281, %v2282
      %v2284 = vsel %vm378, %v2014, 0.0
      %v2285 = vadd.f32 %v2283, %v2284
      %v2286 = vsel %vm378, %v2017, 0.0
      %v2287 = vadd.f32 %v2285, %v2286
      %v2288 = vsel %vm378, %v2022, 0.0
      %v2289 = vadd.f32 %v2287, %v2288
      %v2290 = vsel %vm378, %v2025, 0.0
      %v2291 = vadd.f32 %v2289, %v2290
      %v2292 = vsel %vm378, %v2030, 0.0
      %v2293 = vadd.f32 %v2291, %v2292
      %v2294 = vsel %vm378, %v2033, 0.0
      %v2295 = vadd.f32 %v2293, %v2294
      %v2296 = vsel %vm378, %v2038, 0.0
      %v2297 = vadd.f32 %v2295, %v2296
      %v2298 = vsel %vm378, %v2041, 0.0
      %v2299 = vadd.f32 %v2297, %v2298
      %v2300 = vsel %vm378, %v2046, 0.0
      %v2301 = vadd.f32 %v2299, %v2300
      %v2302 = vsel %vm378, %v2049, 0.0
      %v2303 = vadd.f32 %v2301, %v2302
      %v2304 = vsel %vm378, %v2054, 0.0
      %v2305 = vadd.f32 %v2303, %v2304
      %v2306 = vsel %vm378, %v2057, 0.0
      %v2307 = vadd.f32 %v2305, %v2306
      %v2308 = vsel %vm378, %v2062, 0.0
      %v2309 = vadd.f32 %v2307, %v2308
      %v2310 = vsel %vm378, %v2065, 0.0
      %v2311 = vadd.f32 %v2309, %v2310
      %v2312 = vsel %vm378, %v2070, 0.0
      %v2313 = vadd.f32 %v2311, %v2312
      %v2314 = vsel %vm378, %v2073, 0.0
      %v2315 = vadd.f32 %v2313, %v2314
      %v2316 = vsel %vm378, %v2078, 0.0
      %v2317 = vadd.f32 %v2315, %v2316
      %v2318 = vsel %vm378, %v2081, 0.0
      %v2319 = vadd.f32 %v2317, %v2318
      %v2320 = vsel %vm378, %v2086, 0.0
      %v2321 = vadd.f32 %v2319, %v2320
      %v2322 = vsel %vm378, %v2089, 0.0
      %v2323 = vadd.f32 %v2321, %v2322
      %v2324 = vsel %vm378, %v2094, 0.0
      %v2325 = vadd.f32 %v2323, %v2324
      %v2326 = vsel %vm378, %v2097, 0.0
      %v2327 = vadd.f32 %v2325, %v2326
      %v2328 = vsel %vm378, %v2102, 0.0
      %v2329 = vadd.f32 %v2327, %v2328
      %v2330 = vsel %vm378, %v2105, 0.0
      %v2331 = vadd.f32 %v2329, %v2330
      %v2332 = vrot.slane %v2331, 4
      %v2333 = vadd.f32 %v2331, %v2332
      %v2334 = vrot.slane %v2333, 2
      %v2335 = vadd.f32 %v2333, %v2334
      %v2336 = vrot.slane %v2335, 1
      %v2337 = vadd.f32 %v2335, %v2336
      %v2338 = vmul.f32 %v2337, 0.00390625
      %v2339 = vsub.f32 %v1982, %v2338
      %v2340 = vsub.f32 %v1985, %v2338
      %v2341 = vsub.f32 %v1990, %v2338
      %v2342 = vsub.f32 %v1993, %v2338
      %v2343 = vsub.f32 %v1998, %v2338
      %v2344 = vsub.f32 %v2001, %v2338
      %v2345 = vsub.f32 %v2006, %v2338
      %v2346 = vsub.f32 %v2009, %v2338
      %v2347 = vsub.f32 %v2014, %v2338
      %v2348 = vsub.f32 %v2017, %v2338
      %v2349 = vsub.f32 %v2022, %v2338
      %v2350 = vsub.f32 %v2025, %v2338
      %v2351 = vsub.f32 %v2030, %v2338
      %v2352 = vsub.f32 %v2033, %v2338
      %v2353 = vsub.f32 %v2038, %v2338
      %v2354 = vsub.f32 %v2041, %v2338
      %v2355 = vsub.f32 %v2046, %v2338
      %v2356 = vsub.f32 %v2049, %v2338
      %v2357 = vsub.f32 %v2054, %v2338
      %v2358 = vsub.f32 %v2057, %v2338
      %v2359 = vsub.f32 %v2062, %v2338
      %v2360 = vsub.f32 %v2065, %v2338
      %v2361 = vsub.f32 %v2070, %v2338
      %v2362 = vsub.f32 %v2073, %v2338
      %v2363 = vsub.f32 %v2078, %v2338
      %v2364 = vsub.f32 %v2081, %v2338
      %v2365 = vsub.f32 %v2086, %v2338
      %v2366 = vsub.f32 %v2089, %v2338
      %v2367 = vsub.f32 %v2094, %v2338
      %v2368 = vsub.f32 %v2097, %v2338
      %v2369 = vsub.f32 %v2102, %v2338
      %v2370 = vsub.f32 %v2105, %v2338
      %v2371 = vmul.f32 %v2339, %v2339
      %v2372 = vmul.f32 %v2340, %v2340
      %v2373 = vmul.f32 %v2341, %v2341
      %v2374 = vmul.f32 %v2342, %v2342
      %v2375 = vmul.f32 %v2343, %v2343
      %v2376 = vmul.f32 %v2344, %v2344
      %v2377 = vmul.f32 %v2345, %v2345
      %v2378 = vmul.f32 %v2346, %v2346
      %v2379 = vmul.f32 %v2347, %v2347
      %v2380 = vmul.f32 %v2348, %v2348
      %v2381 = vmul.f32 %v2349, %v2349
      %v2382 = vmul.f32 %v2350, %v2350
      %v2383 = vmul.f32 %v2351, %v2351
      %v2384 = vmul.f32 %v2352, %v2352
      %v2385 = vmul.f32 %v2353, %v2353
      %v2386 = vmul.f32 %v2354, %v2354
      %v2387 = vmul.f32 %v2355, %v2355
      %v2388 = vmul.f32 %v2356, %v2356
      %v2389 = vmul.f32 %v2357, %v2357
      %v2390 = vmul.f32 %v2358, %v2358
      %v2391 = vmul.f32 %v2359, %v2359
      %v2392 = vmul.f32 %v2360, %v2360
      %v2393 = vmul.f32 %v2361, %v2361
      %v2394 = vmul.f32 %v2362, %v2362
      %v2395 = vmul.f32 %v2363, %v2363
      %v2396 = vmul.f32 %v2364, %v2364
      %v2397 = vmul.f32 %v2365, %v2365
      %v2398 = vmul.f32 %v2366, %v2366
      %v2399 = vmul.f32 %v2367, %v2367
      %v2400 = vmul.f32 %v2368, %v2368
      %v2401 = vmul.f32 %v2369, %v2369
      %v2402 = vmul.f32 %v2370, %v2370
      %v2403 = vsel %vm378, %v2371, 0.0
      %v2404 = vsel %vm378, %v2372, 0.0
      %v2405 = vadd.f32 %v2403, %v2404
      %v2406 = vsel %vm378, %v2373, 0.0
      %v2407 = vadd.f32 %v2405, %v2406
      %v2408 = vsel %vm378, %v2374, 0.0
      %v2409 = vadd.f32 %v2407, %v2408
      %v2410 = vsel %vm378, %v2375, 0.0
      %v2411 = vadd.f32 %v2409, %v2410
      %v2412 = vsel %vm378, %v2376, 0.0
      %v2413 = vadd.f32 %v2411, %v2412
      %v2414 = vsel %vm378, %v2377, 0.0
      %v2415 = vadd.f32 %v2413, %v2414
      %v2416 = vsel %vm378, %v2378, 0.0
      %v2417 = vadd.f32 %v2415, %v2416
      %v2418 = vsel %vm378, %v2379, 0.0
      %v2419 = vadd.f32 %v2417, %v2418
      %v2420 = vsel %vm378, %v2380, 0.0
      %v2421 = vadd.f32 %v2419, %v2420
      %v2422 = vsel %vm378, %v2381, 0.0
      %v2423 = vadd.f32 %v2421, %v2422
      %v2424 = vsel %vm378, %v2382, 0.0
      %v2425 = vadd.f32 %v2423, %v2424
      %v2426 = vsel %vm378, %v2383, 0.0
      %v2427 = vadd.f32 %v2425, %v2426
      %v2428 = vsel %vm378, %v2384, 0.0
      %v2429 = vadd.f32 %v2427, %v2428
      %v2430 = vsel %vm378, %v2385, 0.0
      %v2431 = vadd.f32 %v2429, %v2430
      %v2432 = vsel %vm378, %v2386, 0.0
      %v2433 = vadd.f32 %v2431, %v2432
      %v2434 = vsel %vm378, %v2387, 0.0
      %v2435 = vadd.f32 %v2433, %v2434
      %v2436 = vsel %vm378, %v2388, 0.0
      %v2437 = vadd.f32 %v2435, %v2436
      %v2438 = vsel %vm378, %v2389, 0.0
      %v2439 = vadd.f32 %v2437, %v2438
      %v2440 = vsel %vm378, %v2390, 0.0
      %v2441 = vadd.f32 %v2439, %v2440
      %v2442 = vsel %vm378, %v2391, 0.0
      %v2443 = vadd.f32 %v2441, %v2442
      %v2444 = vsel %vm378, %v2392, 0.0
      %v2445 = vadd.f32 %v2443, %v2444
      %v2446 = vsel %vm378, %v2393, 0.0
      %v2447 = vadd.f32 %v2445, %v2446
      %v2448 = vsel %vm378, %v2394, 0.0
      %v2449 = vadd.f32 %v2447, %v2448
      %v2450 = vsel %vm378, %v2395, 0.0
      %v2451 = vadd.f32 %v2449, %v2450
      %v2452 = vsel %vm378, %v2396, 0.0
      %v2453 = vadd.f32 %v2451, %v2452
      %v2454 = vsel %vm378, %v2397, 0.0
      %v2455 = vadd.f32 %v2453, %v2454
      %v2456 = vsel %vm378, %v2398, 0.0
      %v2457 = vadd.f32 %v2455, %v2456
      %v2458 = vsel %vm378, %v2399, 0.0
      %v2459 = vadd.f32 %v2457, %v2458
      %v2460 = vsel %vm378, %v2400, 0.0
      %v2461 = vadd.f32 %v2459, %v2460
      %v2462 = vsel %vm378, %v2401, 0.0
      %v2463 = vadd.f32 %v2461, %v2462
      %v2464 = vsel %vm378, %v2402, 0.0
      %v2465 = vadd.f32 %v2463, %v2464
      %v2466 = vrot.slane %v2465, 4
      %v2467 = vadd.f32 %v2465, %v2466
      %v2468 = vrot.slane %v2467, 2
      %v2469 = vadd.f32 %v2467, %v2468
      %v2470 = vrot.slane %v2469, 1
      %v2471 = vadd.f32 %v2469, %v2470
      %vm2472 = vcmask 253952
      %2473 = vst.msk [vmem:[%s226] sm:$0x1] %vm2472, %v2337
      %2474 = vst.msk [vmem:[%s226 + $0x1] sm:$0x1] %vm2472, %v2471
      %p2475 = scmp.lt.s32.totalorder %s20, 1
      %s2476 = scalar_select %p2475, %s20, 1
      %p2477 = scmp.lt.s32.totalorder %s19, 0
      %s2478 = scalar_select %p2477, %s19, 0
      %s2479 = smul.addr %s2476, 32
      %s2480 = sadd.s32 %s2478, %s2479
      %s2481 = smul.addr %s2480, 4
      %s2482 = scalar_lea.vmem %s2, %s2481
      %p2483 = scmp.lt.s32.totalorder %s20, 1
      %s2484 = scalar_select %p2483, %s20, 1
      %p2485 = scmp.lt.s32.totalorder %s19, 0
      %s2486 = scalar_select %p2485, %s19, 0
      %s2487 = sadd.s32 %s2486, %s2484
      %s2488 = smul.addr %s2487, 2
      %s2489 = scalar_lea.vmem %s3, %s2488
      // Predicated region
      $region29: #{convolution_block_forward.6} parent=27 // pred_check
        %p2490 = pneg %p99
      $region30: #{convolution_block_forward.6} parent=27 // pred_check_branch
        %2492 = sbr.rel (%p2490) target = $region32
      $region31: #{convolution_block_forward.6} parent=27 // pred_region
        _
      $region32: #{convolution_block_forward.6} parent=27 // pred_fallthru
        _
      // Predicated region
      $region33: #{convolution_block_forward.6} parent=27 // pred_check
        %p2493 = pneg %p127
      $region34: #{convolution_block_forward.6} parent=27 // pred_check_branch
        %2495 = sbr.rel (%p2493) target = $region36
      $region35: #{convolution_block_forward.6} parent=27 // pred_region
        _
      $region36: #{convolution_block_forward.6} parent=27 // pred_fallthru
        _
    $region28: #{convolution_block_forward.6} parent=5 // pred_fallthru
      _
    %p2496 = scmp.le.s32.totalorder 2, %s10
    // Predicated region
    $region37: #{convolution_block_forward.6} parent=5 // pred_check
      %p2497 = pneg %p2496
    $region38: #{convolution_block_forward.6} parent=5 // pred_check_branch
      %2499 = sbr.rel (%p2497) target = $region40
    $region39: #{convolution_block_forward.6} parent=5 // pred_region
      %s2500 = ssub.s32 %s10, 2
      // Predicated region
      $region41: #{convolution_block_forward.6} parent=39 // pred_check
        %p2501 = pneg %p105
      $region42: #{convolution_block_forward.6} parent=39 // pred_check_branch
        %2503 = sbr.rel (%p2501) target = $region44
      $region43: #{convolution_block_forward.6} parent=39 // pred_region
        %p2504 = scmp.lt.s32.totalorder %s22, 1
        %s2505 = scalar_select %p2504, %s22, 1
        %p2506 = scmp.lt.s32.totalorder %s21, 0
        %s2507 = scalar_select %p2506, %s21, 0
        %s2508 = smul.addr %s2505, 32
        %s2509 = sadd.s32 %s2507, %s2508
        %s2510 = smul.addr %s2509, 4
        %s2511 = scalar_lea.vmem %s2, %s2510
      $region44: #{convolution_block_forward.6} parent=39 // pred_fallthru
        _
      // Predicated region
      $region45: #{convolution_block_forward.6} parent=39 // pred_check
        %p2512 = pneg %p133
      $region46: #{convolution_block_forward.6} parent=39 // pred_check_branch
        %2514 = sbr.rel (%p2512) target = $region48
      $region47: #{convolution_block_forward.6} parent=39 // pred_region
        %p2515 = scmp.lt.s32.totalorder %s22, 1
        %s2516 = scalar_select %p2515, %s22, 1
        %p2517 = scmp.lt.s32.totalorder %s21, 0
        %s2518 = scalar_select %p2517, %s21, 0
        %s2519 = sadd.s32 %s2518, %s2516
        %s2520 = smul.addr %s2519, 2
        %s2521 = scalar_lea.vmem %s3, %s2520
      $region48: #{convolution_block_forward.6} parent=39 // pred_fallthru
        _
    $region40: #{convolution_block_forward.6} parent=5 // pred_fallthru
      _
  $region6: #{convolution_block_forward.6} parent=0 // loop_footer
    %s14 = sadd.s32 1, %s10
  $region7: #{convolution_block_forward.6} parent=0 // loop_footer_branch
    %9 = sbr.rel target = $region3
  $region8: #{convolution_block_forward.6} parent=0 // loop_exit
    _

</llo_original>
